<compile_context>
chip_gen: v7x
topology: tpu7x:2x2x1
jax: 0.10.0
libtpu: 0.0.40
codegen_flags: <defaults>
</compile_context>

<pallas_src>
import functools

import jax
import jax.numpy as jnp
from jax.experimental import pallas as pl
from jax.experimental.pallas import tpu as pltpu

LANES = 128
_VMEM_LIMIT = 32 * 1024 * 1024


def _round_up(x, m):
    return (x + m - 1) // m * m


# ----------------------------- Pallas kernels ------------------------------


def _conv_pool_kernel(a_ref, w_ref, b_ref, o_ref, acc_ref, row_ref, *, width):
    """Fused conv-as-matmul (+bias) with a 2x2 / stride-2 max-pool epilogue.

    a_ref:   (tm, K)          bf16 im2col patches, rows in (image, h, w) order
    w_ref:   (K, 128)         bf16 weights, Cout zero-padded to 128 lanes
    b_ref:   (1, 128)         f32 bias, zero-padded
    acc_ref: (gH, W, 128)     f32 VMEM scratch: pre-pool conv tile
    row_ref: (gH, W/2, 128)   f32 VMEM scratch: after pooling along w
    o_ref:   (gH/2, W/2, 128) bf16 pooled output tile (lane-dense)
    """
    gh = acc_ref.shape[0]
    wo = width // 2

    acc = jnp.dot(a_ref[...], w_ref[...], preferred_element_type=jnp.float32)
    acc = acc + b_ref[...]
    # Tile-aligned reinterpretation: rows (img,h,w) -> (img*H + h, w); W is a
    # multiple of 8 so this keeps the (8,128) layout (no data movement).
    acc_ref[...] = acc.reshape(gh, width, LANES)

    # max over the two w-taps of each 2x2 window (sublane-strided reads).
    row_ref[...] = jnp.maximum(acc_ref[:, pl.ds(0, wo, 2), :],
                               acc_ref[:, pl.ds(1, wo, 2), :])
    # max over the two h-taps (stride-2 on the leading, untiled dim).
    o_ref[...] = jnp.maximum(row_ref[pl.ds(0, gh // 2, 2)],
                             row_ref[pl.ds(1, gh // 2, 2)]).astype(o_ref.dtype)


def _mlp_head_kernel(x_ref, w1_ref, b1_ref, w2_ref, b2_ref, o_ref):
    # Linear(1024, 64) -> Linear(64, 10), fused; everything padded to 128 lanes.
    h = jnp.dot(x_ref[...], w1_ref[...], preferred_element_type=jnp.float32)
    h = h + b1_ref[...]
    o_ref[...] = jnp.dot(h.astype(jnp.bfloat16), w2_ref[...],
                         preferred_element_type=jnp.float32) + b2_ref[...]


# ------------------------------ op wrappers --------------------------------


def im2col_5x5_same(x_nhwc):
    """5x5 'same' (pad=2, stride=1) patches. Row order: (n, h, w); col = (kh*5+kw)*Cin+ci."""
    n, h, w, c = x_nhwc.shape
    xp = jnp.pad(x_nhwc, ((0, 0), (2, 2), (2, 2), (0, 0)))
    taps = [xp[:, kh:kh + h, kw:kw + w, :] for kh in range(5) for kw in range(5)]
    return jnp.stack(taps, axis=3).reshape(n * h * w, 25 * c)


def _pick_group(n, hw, row_cap=1024):
    """Images per grid step: largest divisor of n with <= row_cap rows per tile,
    preferring >= 2 grid steps so both v7x TensorCores get work."""
    cands = [g for g in range(1, n + 1) if n % g == 0 and g * hw <= row_cap]
    if not cands:
        return 1
    multi = [g for g in cands if n // g >= 2]
    return max(multi) if multi else max(cands)


def conv5x5_pool(x_nhwc, w2d, bias, cout):
    """Conv2d(k=5, pad=2, stride=1) + MaxPool2d(2), fused in one Pallas kernel."""
    n, h, w, cin = x_nhwc.shape
    k = 25 * cin
    assert w2d.shape == (k, LANES), (w2d.shape, k)
    ho, wo = h // 2, w // 2

    g = _pick_group(n, h * w)          # images per grid step (always divides n)
    tm = g * h * w                     # rows per matmul tile
    grid = n // g

    patches = im2col_5x5_same(x_nhwc)  # (N*H*W, 25*Cin) bf16

    out = pl.pallas_call(
        functools.partial(_conv_pool_kernel, width=w),
        out_shape=jax.ShapeDtypeStruct((n * ho, wo, LANES), jnp.bfloat16),
        grid=(grid,),
        in_specs=[
            pl.BlockSpec((tm, k), lambda i: (i, 0)),
            pl.BlockSpec((k, LANES), lambda i: (0, 0)),
            pl.BlockSpec((1, LANES), lambda i: (0, 0)),
        ],
        out_specs=pl.BlockSpec((g * ho, wo, LANES), lambda i: (i, 0, 0)),
        scratch_shapes=[
            pltpu.VMEM((g * h, w, LANES), jnp.float32),
            pltpu.VMEM((g * h, wo, LANES), jnp.float32),
        ],
        compiler_params=pltpu.CompilerParams(
            dimension_semantics=("parallel",),
            vmem_limit_bytes=_VMEM_LIMIT,
        ),
    )(patches, w2d, bias)

    # Kernel writes lane-dense 128-wide blocks; slice the real channels outside.
    return out.reshape(n, ho, wo, LANES)[..., :cout]


def mlp_head(x_flat, w1, b1, w2, b2):
    """Fused Linear(1024,64) -> Linear(64,10); output padded to 128 lanes."""
    n = x_flat.shape[0]
    tb = 128 if n >= 128 else _round_up(n, 16)
    n_pad = _round_up(n, tb)
    if n_pad != n:
        x_flat = jnp.pad(x_flat, ((0, n_pad - n), (0, 0)))

    out = pl.pallas_call(
        _mlp_head_kernel,
        out_shape=jax.ShapeDtypeStruct((n_pad, LANES), jnp.float32),
        grid=(n_pad // tb,),
        in_specs=[
            pl.BlockSpec((tb, 1024), lambda i: (i, 0)),
            pl.BlockSpec((1024, LANES), lambda i: (0, 0)),
            pl.BlockSpec((1, LANES), lambda i: (0, 0)),
            pl.BlockSpec((LANES, LANES), lambda i: (0, 0)),
            pl.BlockSpec((1, LANES), lambda i: (0, 0)),
        ],
        out_specs=pl.BlockSpec((tb, LANES), lambda i: (i, 0)),
        compiler_params=pltpu.CompilerParams(
            dimension_semantics=("parallel",),
            vmem_limit_bytes=_VMEM_LIMIT,
        ),
    )(x_flat, w1, b1, w2, b2)
    return out[:n, :10]


# ------------------------------ parameters ---------------------------------


def init_params(key):
    """PyTorch-default-style init: U(-1/sqrt(fan_in), +1/sqrt(fan_in)), f32."""
    ks = jax.random.split(key, 10)

    def u(k, shape, fan_in):
        bound = 1.0 / (fan_in ** 0.5)
        return jax.random.uniform(k, shape, jnp.float32, -bound, bound)

    return {
        "conv1_w": u(ks[0], (32, 3, 5, 5), 3 * 25),
        "conv1_b": u(ks[1], (32,), 3 * 25),
        "conv2_w": u(ks[2], (32, 32, 5, 5), 32 * 25),
        "conv2_b": u(ks[3], (32,), 32 * 25),
        "conv3_w": u(ks[4], (64, 32, 5, 5), 32 * 25),
        "conv3_b": u(ks[5], (64,), 32 * 25),
        "fc1_w": u(ks[6], (64, 1024), 1024),   # PyTorch Linear: (out, in)
        "fc1_b": u(ks[7], (64,), 1024),
        "fc2_w": u(ks[8], (10, 64), 64),
        "fc2_b": u(ks[9], (10,), 64),
    }


def prepare_params(params):
    """One-time weight packing, run eagerly outside the jitted forward:
    transpose to matmul layout, zero-pad Cout to 128 lanes, cast to bf16."""

    def conv_w(w_oihw):
        o = w_oihw.shape[0]
        w2 = jnp.transpose(w_oihw, (2, 3, 1, 0)).reshape(-1, o)   # (25*Cin, Cout)
        return jnp.pad(w2, ((0, 0), (0, LANES - o))).astype(jnp.bfloat16)

    def vec128(b):
        return jnp.pad(b, (0, LANES - b.shape[0])).reshape(1, LANES).astype(jnp.float32)

    w1 = jnp.pad(params["fc1_w"].T, ((0, 0), (0, LANES - 64))).astype(jnp.bfloat16)
    w2 = jnp.pad(params["fc2_w"].T, ((0, LANES - 64), (0, LANES - 10))).astype(jnp.bfloat16)

    return {
        "c1w": conv_w(params["conv1_w"]), "c1b": vec128(params["conv1_b"]),
        "c2w": conv_w(params["conv2_w"]), "c2b": vec128(params["conv2_b"]),
        "c3w": conv_w(params["conv3_w"]), "c3b": vec128(params["conv3_b"]),
        "w1": w1, "b1": vec128(params["fc1_b"]),
        "w2": w2, "b2": vec128(params["fc2_b"]),
    }


# ------------------------------ model forward ------------------------------


def howjul_forward(pp, x_nchw):
    # NCHW -> NHWC, bf16 activations throughout (f32 only for the final logits).
    x = jnp.transpose(x_nchw, (0, 2, 3, 1)).astype(jnp.bfloat16)   # (N, 32, 32, 3)

    x = conv5x5_pool(x, pp["c1w"], pp["c1b"], cout=32)             # (N, 16, 16, 32)
    x = conv5x5_pool(x, pp["c2w"], pp["c2b"], cout=32)             # (N, 8, 8, 32)
    x = conv5x5_pool(x, pp["c3w"], pp["c3b"], cout=64)             # (N, 4, 4, 64)

    # PyTorch Flatten operates on NCHW -> (C, H, W) order.
    n = x.shape[0]
    x_flat = jnp.transpose(x, (0, 3, 1, 2)).reshape(n, 64 * 4 * 4)  # (N, 1024)

    return mlp_head(x_flat, pp["w1"], pp["b1"], pp["w2"], pp["b2"])  # (N, 10) f32


# ---------------------------------- main -----------------------------------

if __name__ == "__main__":
    key = jax.random.PRNGKey(0)
    pkey, xkey = jax.random.split(key)

    params = init_params(pkey)
    prepped = prepare_params(params)          # one-time packing, outside jit

    x = jax.random.normal(xkey, (2, 3, 32, 32), jnp.float32)  # NCHW, CIFAR-sized

    fwd = jax.jit(howjul_forward)
    out = jax.block_until_ready(fwd(prepped, x))

    assert out.shape == (2, 10) and out.dtype == jnp.float32
    assert bool(jnp.all(jnp.isfinite(out)))
    print("KERNEL_OK")
</pallas_src>

<mosaic_0001>
module attributes {stable_mosaic.version = 11 : i64} {
  func.func @_conv_pool_kernel(%arg0: i32, %arg1: memref<1024x75xbf16, #tpu.memory_space<vmem>>, %arg2: memref<75x128xbf16, #tpu.memory_space<vmem>>, %arg3: memref<1x128xf32, #tpu.memory_space<vmem>>, %arg4: memref<16x16x128xbf16, #tpu.memory_space<vmem>>, %arg5: memref<32x32x128xf32, #tpu.memory_space<vmem>>, %arg6: memref<32x16x128xf32, #tpu.memory_space<vmem>>) attributes {dimension_semantics = [#tpu.dimension_semantics<parallel>], iteration_bounds = array<i64: 2>, scalar_prefetch = 0 : i64, scratch_operands = 2 : i64, tpu.core_type = #tpu.core_type<tc>, window_params = [{transform_indices = @transform_0, window_bounds = array<i64: 1024, 75>}, {pipeline_mode = #tpu.pipeline_mode<synchronous>, transform_indices = @transform_1, window_bounds = array<i64: 75, 128>}, {pipeline_mode = #tpu.pipeline_mode<synchronous>, transform_indices = @transform_2, window_bounds = array<i64: 1, 128>}, {transform_indices = @transform_3, window_bounds = array<i64: 16, 16, 128>}]} {
    %c0 = arith.constant 0 : index
    %c0_0 = arith.constant 0 : index
    %0 = vector.load %arg1[%c0, %c0_0] : memref<1024x75xbf16, #tpu.memory_space<vmem>>, vector<1024x75xbf16>
    %c0_1 = arith.constant 0 : index
    %c0_2 = arith.constant 0 : index
    %1 = vector.load %arg2[%c0_1, %c0_2] : memref<75x128xbf16, #tpu.memory_space<vmem>>, vector<75x128xbf16>
    %cst = arith.constant dense<0.000000e+00> : vector<1024x128xf32>
    %2 = tpu.matmul %0, %1, %cst {dimension_numbers = #tpu.dot_dimension_numbers<[1], [0], [0], [1], [0, 0, 1, 1], [], []>} : vector<1024x75xbf16>, vector<75x128xbf16>, vector<1024x128xf32> -> vector<1024x128xf32>
    %c0_3 = arith.constant 0 : index
    %c0_4 = arith.constant 0 : index
    %3 = vector.load %arg3[%c0_3, %c0_4] : memref<1x128xf32, #tpu.memory_space<vmem>>, vector<1x128xf32>
    %4 = vector.broadcast %3 : vector<1x128xf32> to vector<1024x128xf32>
    %5 = arith.addf %2, %4 : vector<1024x128xf32>
    %6 = vector.shape_cast %5 : vector<1024x128xf32> to vector<32x32x128xf32>
    %c0_5 = arith.constant 0 : index
    %c0_6 = arith.constant 0 : index
    %c0_7 = arith.constant 0 : index
    %7 = vector.load %arg5[%c0_5, %c0_6, %c0_7] : memref<32x32x128xf32, #tpu.memory_space<vmem>>, vector<32x32x128xf32>
    tpu.vector_store %arg5[%c0_5, %c0_6, %c0_7], %6 {strides = array<i32>} : memref<32x32x128xf32, #tpu.memory_space<vmem>>, vector<32x32x128xf32>,
    %c0_8 = arith.constant 0 : index
    %c0_9 = arith.constant 0 : index
    %c0_10 = arith.constant 0 : index
    %8 = tpu.strided_load %arg5[%c0_8, %c0_9, %c0_10] {strides = array<i32: 1, 2, 1>} : memref<32x32x128xf32, #tpu.memory_space<vmem>>, vector<32x16x128xf32>
    %c0_11 = arith.constant 0 : index
    %c1 = arith.constant 1 : index
    %c0_12 = arith.constant 0 : index
    %9 = tpu.strided_load %arg5[%c0_11, %c1, %c0_12] {strides = array<i32: 1, 2, 1>} : memref<32x32x128xf32, #tpu.memory_space<vmem>>, vector<32x16x128xf32>
    %10 = arith.maximumf %8, %9 : vector<32x16x128xf32>
    %c0_13 = arith.constant 0 : index
    %c0_14 = arith.constant 0 : index
    %c0_15 = arith.constant 0 : index
    %11 = vector.load %arg6[%c0_13, %c0_14, %c0_15] : memref<32x16x128xf32, #tpu.memory_space<vmem>>, vector<32x16x128xf32>
    tpu.vector_store %arg6[%c0_13, %c0_14, %c0_15], %10 {strides = array<i32>} : memref<32x16x128xf32, #tpu.memory_space<vmem>>, vector<32x16x128xf32>,
    %c0_16 = arith.constant 0 : index
    %c0_17 = arith.constant 0 : index
    %c0_18 = arith.constant 0 : index
    %12 = tpu.strided_load %arg6[%c0_16, %c0_17, %c0_18] {strides = array<i32: 2, 1, 1>} : memref<32x16x128xf32, #tpu.memory_space<vmem>>, vector<16x16x128xf32>
    %c1_19 = arith.constant 1 : index
    %c0_20 = arith.constant 0 : index
    %c0_21 = arith.constant 0 : index
    %13 = tpu.strided_load %arg6[%c1_19, %c0_20, %c0_21] {strides = array<i32: 2, 1, 1>} : memref<32x16x128xf32, #tpu.memory_space<vmem>>, vector<16x16x128xf32>
    %14 = arith.maximumf %12, %13 : vector<16x16x128xf32>
    %15 = arith.truncf %14 : vector<16x16x128xf32> to vector<16x16x128xbf16>
    %c0_22 = arith.constant 0 : index
    %c0_23 = arith.constant 0 : index
    %c0_24 = arith.constant 0 : index
    %16 = vector.load %arg4[%c0_22, %c0_23, %c0_24] : memref<16x16x128xbf16, #tpu.memory_space<vmem>>, vector<16x16x128xbf16>
    tpu.vector_store %arg4[%c0_22, %c0_23, %c0_24], %15 {strides = array<i32>} : memref<16x16x128xbf16, #tpu.memory_space<vmem>>, vector<16x16x128xbf16>,
    return
  }
  func.func @transform_0(%arg0: i32) -> (i32, i32) {
    %c0_i32 = arith.constant 0 : i32
    %c0_i32_0 = arith.constant 0 : i32
    return %arg0, %c0_i32 : i32, i32
  }
  func.func @transform_1(%arg0: i32) -> (i32, i32) {
    %c0_i32 = arith.constant 0 : i32
    %c0_i32_0 = arith.constant 0 : i32
    %c0_i32_1 = arith.constant 0 : i32
    return %c0_i32, %c0_i32_0 : i32, i32
  }
  func.func @transform_2(%arg0: i32) -> (i32, i32) {
    %c0_i32 = arith.constant 0 : i32
    %c0_i32_0 = arith.constant 0 : i32
    %c0_i32_1 = arith.constant 0 : i32
    return %c0_i32, %c0_i32_0 : i32, i32
  }
  func.func @transform_3(%arg0: i32) -> (i32, i32, i32) {
    %c0_i32 = arith.constant 0 : i32
    %c0_i32_0 = arith.constant 0 : i32
    %c0_i32_1 = arith.constant 0 : i32
    return %arg0, %c0_i32, %c0_i32_0 : i32, i32, i32
  }
}

module attributes {stable_mosaic.version = 11 : i64} {
  func.func @_conv_pool_kernel(%arg0: i32, %arg1: memref<256x800xbf16, #tpu.memory_space<vmem>>, %arg2: memref<800x128xbf16, #tpu.memory_space<vmem>>, %arg3: memref<1x128xf32, #tpu.memory_space<vmem>>, %arg4: memref<8x8x128xbf16, #tpu.memory_space<vmem>>, %arg5: memref<16x16x128xf32, #tpu.memory_space<vmem>>, %arg6: memref<16x8x128xf32, #tpu.memory_space<vmem>>) attributes {dimension_semantics = [#tpu.dimension_semantics<parallel>], iteration_bounds = array<i64: 2>, scalar_prefetch = 0 : i64, scratch_operands = 2 : i64, tpu.core_type = #tpu.core_type<tc>, window_params = [{transform_indices = @transform_0, window_bounds = array<i64: 256, 800>}, {pipeline_mode = #tpu.pipeline_mode<synchronous>, transform_indices = @transform_1, window_bounds = array<i64: 800, 128>}, {pipeline_mode = #tpu.pipeline_mode<synchronous>, transform_indices = @transform_2, window_bounds = array<i64: 1, 128>}, {transform_indices = @transform_3, window_bounds = array<i64: 8, 8, 128>}]} {
    %c0 = arith.constant 0 : index
    %c0_0 = arith.constant 0 : index
    %0 = vector.load %arg1[%c0, %c0_0] : memref<256x800xbf16, #tpu.memory_space<vmem>>, vector<256x800xbf16>
    %c0_1 = arith.constant 0 : index
    %c0_2 = arith.constant 0 : index
    %1 = vector.load %arg2[%c0_1, %c0_2] : memref<800x128xbf16, #tpu.memory_space<vmem>>, vector<800x128xbf16>
    %cst = arith.constant dense<0.000000e+00> : vector<256x128xf32>
    %2 = tpu.matmul %0, %1, %cst {dimension_numbers = #tpu.dot_dimension_numbers<[1], [0], [0], [1], [0, 0, 1, 1], [], []>} : vector<256x800xbf16>, vector<800x128xbf16>, vector<256x128xf32> -> vector<256x128xf32>
    %c0_3 = arith.constant 0 : index
    %c0_4 = arith.constant 0 : index
    %3 = vector.load %arg3[%c0_3, %c0_4] : memref<1x128xf32, #tpu.memory_space<vmem>>, vector<1x128xf32>
    %4 = vector.broadcast %3 : vector<1x128xf32> to vector<256x128xf32>
    %5 = arith.addf %2, %4 : vector<256x128xf32>
    %6 = vector.shape_cast %5 : vector<256x128xf32> to vector<16x16x128xf32>
    %c0_5 = arith.constant 0 : index
    %c0_6 = arith.constant 0 : index
    %c0_7 = arith.constant 0 : index
    %7 = vector.load %arg5[%c0_5, %c0_6, %c0_7] : memref<16x16x128xf32, #tpu.memory_space<vmem>>, vector<16x16x128xf32>
    tpu.vector_store %arg5[%c0_5, %c0_6, %c0_7], %6 {strides = array<i32>} : memref<16x16x128xf32, #tpu.memory_space<vmem>>, vector<16x16x128xf32>,
    %c0_8 = arith.constant 0 : index
    %c0_9 = arith.constant 0 : index
    %c0_10 = arith.constant 0 : index
    %8 = tpu.strided_load %arg5[%c0_8, %c0_9, %c0_10] {strides = array<i32: 1, 2, 1>} : memref<16x16x128xf32, #tpu.memory_space<vmem>>, vector<16x8x128xf32>
    %c0_11 = arith.constant 0 : index
    %c1 = arith.constant 1 : index
    %c0_12 = arith.constant 0 : index
    %9 = tpu.strided_load %arg5[%c0_11, %c1, %c0_12] {strides = array<i32: 1, 2, 1>} : memref<16x16x128xf32, #tpu.memory_space<vmem>>, vector<16x8x128xf32>
    %10 = arith.maximumf %8, %9 : vector<16x8x128xf32>
    %c0_13 = arith.constant 0 : index
    %c0_14 = arith.constant 0 : index
    %c0_15 = arith.constant 0 : index
    %11 = vector.load %arg6[%c0_13, %c0_14, %c0_15] : memref<16x8x128xf32, #tpu.memory_space<vmem>>, vector<16x8x128xf32>
    tpu.vector_store %arg6[%c0_13, %c0_14, %c0_15], %10 {strides = array<i32>} : memref<16x8x128xf32, #tpu.memory_space<vmem>>, vector<16x8x128xf32>,
    %c0_16 = arith.constant 0 : index
    %c0_17 = arith.constant 0 : index
    %c0_18 = arith.constant 0 : index
    %12 = tpu.strided_load %arg6[%c0_16, %c0_17, %c0_18] {strides = array<i32: 2, 1, 1>} : memref<16x8x128xf32, #tpu.memory_space<vmem>>, vector<8x8x128xf32>
    %c1_19 = arith.constant 1 : index
    %c0_20 = arith.constant 0 : index
    %c0_21 = arith.constant 0 : index
    %13 = tpu.strided_load %arg6[%c1_19, %c0_20, %c0_21] {strides = array<i32: 2, 1, 1>} : memref<16x8x128xf32, #tpu.memory_space<vmem>>, vector<8x8x128xf32>
    %14 = arith.maximumf %12, %13 : vector<8x8x128xf32>
    %15 = arith.truncf %14 : vector<8x8x128xf32> to vector<8x8x128xbf16>
    %c0_22 = arith.constant 0 : index
    %c0_23 = arith.constant 0 : index
    %c0_24 = arith.constant 0 : index
    %16 = vector.load %arg4[%c0_22, %c0_23, %c0_24] : memref<8x8x128xbf16, #tpu.memory_space<vmem>>, vector<8x8x128xbf16>
    tpu.vector_store %arg4[%c0_22, %c0_23, %c0_24], %15 {strides = array<i32>} : memref<8x8x128xbf16, #tpu.memory_space<vmem>>, vector<8x8x128xbf16>,
    return
  }
  func.func @transform_0(%arg0: i32) -> (i32, i32) {
    %c0_i32 = arith.constant 0 : i32
    %c0_i32_0 = arith.constant 0 : i32
    return %arg0, %c0_i32 : i32, i32
  }
  func.func @transform_1(%arg0: i32) -> (i32, i32) {
    %c0_i32 = arith.constant 0 : i32
    %c0_i32_0 = arith.constant 0 : i32
    %c0_i32_1 = arith.constant 0 : i32
    return %c0_i32, %c0_i32_0 : i32, i32
  }
  func.func @transform_2(%arg0: i32) -> (i32, i32) {
    %c0_i32 = arith.constant 0 : i32
    %c0_i32_0 = arith.constant 0 : i32
    %c0_i32_1 = arith.constant 0 : i32
    return %c0_i32, %c0_i32_0 : i32, i32
  }
  func.func @transform_3(%arg0: i32) -> (i32, i32, i32) {
    %c0_i32 = arith.constant 0 : i32
    %c0_i32_0 = arith.constant 0 : i32
    %c0_i32_1 = arith.constant 0 : i32
    return %arg0, %c0_i32, %c0_i32_0 : i32, i32, i32
  }
}

module attributes {stable_mosaic.version = 11 : i64} {
  func.func @_conv_pool_kernel(%arg0: i32, %arg1: memref<64x800xbf16, #tpu.memory_space<vmem>>, %arg2: memref<800x128xbf16, #tpu.memory_space<vmem>>, %arg3: memref<1x128xf32, #tpu.memory_space<vmem>>, %arg4: memref<4x4x128xbf16, #tpu.memory_space<vmem>>, %arg5: memref<8x8x128xf32, #tpu.memory_space<vmem>>, %arg6: memref<8x4x128xf32, #tpu.memory_space<vmem>>) attributes {dimension_semantics = [#tpu.dimension_semantics<parallel>], iteration_bounds = array<i64: 2>, scalar_prefetch = 0 : i64, scratch_operands = 2 : i64, tpu.core_type = #tpu.core_type<tc>, window_params = [{transform_indices = @transform_0, window_bounds = array<i64: 64, 800>}, {pipeline_mode = #tpu.pipeline_mode<synchronous>, transform_indices = @transform_1, window_bounds = array<i64: 800, 128>}, {pipeline_mode = #tpu.pipeline_mode<synchronous>, transform_indices = @transform_2, window_bounds = array<i64: 1, 128>}, {transform_indices = @transform_3, window_bounds = array<i64: 4, 4, 128>}]} {
    %c0 = arith.constant 0 : index
    %c0_0 = arith.constant 0 : index
    %0 = vector.load %arg1[%c0, %c0_0] : memref<64x800xbf16, #tpu.memory_space<vmem>>, vector<64x800xbf16>
    %c0_1 = arith.constant 0 : index
    %c0_2 = arith.constant 0 : index
    %1 = vector.load %arg2[%c0_1, %c0_2] : memref<800x128xbf16, #tpu.memory_space<vmem>>, vector<800x128xbf16>
    %cst = arith.constant dense<0.000000e+00> : vector<64x128xf32>
    %2 = tpu.matmul %0, %1, %cst {dimension_numbers = #tpu.dot_dimension_numbers<[1], [0], [0], [1], [0, 0, 1, 1], [], []>} : vector<64x800xbf16>, vector<800x128xbf16>, vector<64x128xf32> -> vector<64x128xf32>
    %c0_3 = arith.constant 0 : index
    %c0_4 = arith.constant 0 : index
    %3 = vector.load %arg3[%c0_3, %c0_4] : memref<1x128xf32, #tpu.memory_space<vmem>>, vector<1x128xf32>
    %4 = vector.broadcast %3 : vector<1x128xf32> to vector<64x128xf32>
    %5 = arith.addf %2, %4 : vector<64x128xf32>
    %6 = vector.shape_cast %5 : vector<64x128xf32> to vector<8x8x128xf32>
    %c0_5 = arith.constant 0 : index
    %c0_6 = arith.constant 0 : index
    %c0_7 = arith.constant 0 : index
    %7 = vector.load %arg5[%c0_5, %c0_6, %c0_7] : memref<8x8x128xf32, #tpu.memory_space<vmem>>, vector<8x8x128xf32>
    tpu.vector_store %arg5[%c0_5, %c0_6, %c0_7], %6 {strides = array<i32>} : memref<8x8x128xf32, #tpu.memory_space<vmem>>, vector<8x8x128xf32>,
    %c0_8 = arith.constant 0 : index
    %c0_9 = arith.constant 0 : index
    %c0_10 = arith.constant 0 : index
    %8 = tpu.strided_load %arg5[%c0_8, %c0_9, %c0_10] {strides = array<i32: 1, 2, 1>} : memref<8x8x128xf32, #tpu.memory_space<vmem>>, vector<8x4x128xf32>
    %c0_11 = arith.constant 0 : index
    %c1 = arith.constant 1 : index
    %c0_12 = arith.constant 0 : index
    %9 = tpu.strided_load %arg5[%c0_11, %c1, %c0_12] {strides = array<i32: 1, 2, 1>} : memref<8x8x128xf32, #tpu.memory_space<vmem>>, vector<8x4x128xf32>
    %10 = arith.maximumf %8, %9 : vector<8x4x128xf32>
    %c0_13 = arith.constant 0 : index
    %c0_14 = arith.constant 0 : index
    %c0_15 = arith.constant 0 : index
    %11 = vector.load %arg6[%c0_13, %c0_14, %c0_15] : memref<8x4x128xf32, #tpu.memory_space<vmem>>, vector<8x4x128xf32>
    tpu.vector_store %arg6[%c0_13, %c0_14, %c0_15], %10 {strides = array<i32>} : memref<8x4x128xf32, #tpu.memory_space<vmem>>, vector<8x4x128xf32>,
    %c0_16 = arith.constant 0 : index
    %c0_17 = arith.constant 0 : index
    %c0_18 = arith.constant 0 : index
    %12 = tpu.strided_load %arg6[%c0_16, %c0_17, %c0_18] {strides = array<i32: 2, 1, 1>} : memref<8x4x128xf32, #tpu.memory_space<vmem>>, vector<4x4x128xf32>
    %c1_19 = arith.constant 1 : index
    %c0_20 = arith.constant 0 : index
    %c0_21 = arith.constant 0 : index
    %13 = tpu.strided_load %arg6[%c1_19, %c0_20, %c0_21] {strides = array<i32: 2, 1, 1>} : memref<8x4x128xf32, #tpu.memory_space<vmem>>, vector<4x4x128xf32>
    %14 = arith.maximumf %12, %13 : vector<4x4x128xf32>
    %15 = arith.truncf %14 : vector<4x4x128xf32> to vector<4x4x128xbf16>
    %c0_22 = arith.constant 0 : index
    %c0_23 = arith.constant 0 : index
    %c0_24 = arith.constant 0 : index
    %16 = vector.load %arg4[%c0_22, %c0_23, %c0_24] : memref<4x4x128xbf16, #tpu.memory_space<vmem>>, vector<4x4x128xbf16>
    tpu.vector_store %arg4[%c0_22, %c0_23, %c0_24], %15 {strides = array<i32>} : memref<4x4x128xbf16, #tpu.memory_space<vmem>>, vector<4x4x128xbf16>,
    return
  }
  func.func @transform_0(%arg0: i32) -> (i32, i32) {
    %c0_i32 = arith.constant 0 : i32
    %c0_i32_0 = arith.constant 0 : i32
    return %arg0, %c0_i32 : i32, i32
  }
  func.func @transform_1(%arg0: i32) -> (i32, i32) {
    %c0_i32 = arith.constant 0 : i32
    %c0_i32_0 = arith.constant 0 : i32
    %c0_i32_1 = arith.constant 0 : i32
    return %c0_i32, %c0_i32_0 : i32, i32
  }
  func.func @transform_2(%arg0: i32) -> (i32, i32) {
    %c0_i32 = arith.constant 0 : i32
    %c0_i32_0 = arith.constant 0 : i32
    %c0_i32_1 = arith.constant 0 : i32
    return %c0_i32, %c0_i32_0 : i32, i32
  }
  func.func @transform_3(%arg0: i32) -> (i32, i32, i32) {
    %c0_i32 = arith.constant 0 : i32
    %c0_i32_0 = arith.constant 0 : i32
    %c0_i32_1 = arith.constant 0 : i32
    return %arg0, %c0_i32, %c0_i32_0 : i32, i32, i32
  }
}

module attributes {stable_mosaic.version = 11 : i64} {
  func.func @_mlp_head_kernel(%arg0: i32, %arg1: memref<16x1024xbf16, #tpu.memory_space<vmem>>, %arg2: memref<1024x128xbf16, #tpu.memory_space<vmem>>, %arg3: memref<1x128xf32, #tpu.memory_space<vmem>>, %arg4: memref<128x128xbf16, #tpu.memory_space<vmem>>, %arg5: memref<1x128xf32, #tpu.memory_space<vmem>>, %arg6: memref<16x128xf32, #tpu.memory_space<vmem>>) attributes {dimension_semantics = [#tpu.dimension_semantics<parallel>], iteration_bounds = array<i64: 1>, scalar_prefetch = 0 : i64, scratch_operands = 0 : i64, tpu.core_type = #tpu.core_type<tc>, window_params = [{transform_indices = @transform_0, window_bounds = array<i64: 16, 1024>}, {pipeline_mode = #tpu.pipeline_mode<synchronous>, transform_indices = @transform_1, window_bounds = array<i64: 1024, 128>}, {pipeline_mode = #tpu.pipeline_mode<synchronous>, transform_indices = @transform_2, window_bounds = array<i64: 1, 128>}, {pipeline_mode = #tpu.pipeline_mode<synchronous>, transform_indices = @transform_3, window_bounds = array<i64: 128, 128>}, {pipeline_mode = #tpu.pipeline_mode<synchronous>, transform_indices = @transform_4, window_bounds = array<i64: 1, 128>}, {transform_indices = @transform_5, window_bounds = array<i64: 16, 128>}]} {
    %c0 = arith.constant 0 : index
    %c0_0 = arith.constant 0 : index
    %0 = vector.load %arg1[%c0, %c0_0] : memref<16x1024xbf16, #tpu.memory_space<vmem>>, vector<16x1024xbf16>
    %c0_1 = arith.constant 0 : index
    %c0_2 = arith.constant 0 : index
    %1 = vector.load %arg2[%c0_1, %c0_2] : memref<1024x128xbf16, #tpu.memory_space<vmem>>, vector<1024x128xbf16>
    %cst = arith.constant dense<0.000000e+00> : vector<16x128xf32>
    %2 = tpu.matmul %0, %1, %cst {dimension_numbers = #tpu.dot_dimension_numbers<[1], [0], [0], [1], [0, 0, 1, 1], [], []>} : vector<16x1024xbf16>, vector<1024x128xbf16>, vector<16x128xf32> -> vector<16x128xf32>
    %c0_3 = arith.constant 0 : index
    %c0_4 = arith.constant 0 : index
    %3 = vector.load %arg3[%c0_3, %c0_4] : memref<1x128xf32, #tpu.memory_space<vmem>>, vector<1x128xf32>
    %4 = vector.broadcast %3 : vector<1x128xf32> to vector<16x128xf32>
    %5 = arith.addf %2, %4 : vector<16x128xf32>
    %6 = arith.truncf %5 : vector<16x128xf32> to vector<16x128xbf16>
    %c0_5 = arith.constant 0 : index
    %c0_6 = arith.constant 0 : index
    %7 = vector.load %arg4[%c0_5, %c0_6] : memref<128x128xbf16, #tpu.memory_space<vmem>>, vector<128x128xbf16>
    %cst_7 = arith.constant dense<0.000000e+00> : vector<16x128xf32>
    %8 = tpu.matmul %6, %7, %cst_7 {dimension_numbers = #tpu.dot_dimension_numbers<[1], [0], [0], [1], [0, 0, 1, 1], [], []>} : vector<16x128xbf16>, vector<128x128xbf16>, vector<16x128xf32> -> vector<16x128xf32>
    %c0_8 = arith.constant 0 : index
    %c0_9 = arith.constant 0 : index
    %9 = vector.load %arg5[%c0_8, %c0_9] : memref<1x128xf32, #tpu.memory_space<vmem>>, vector<1x128xf32>
    %10 = vector.broadcast %9 : vector<1x128xf32> to vector<16x128xf32>
    %11 = arith.addf %8, %10 : vector<16x128xf32>
    %c0_10 = arith.constant 0 : index
    %c0_11 = arith.constant 0 : index
    %12 = vector.load %arg6[%c0_10, %c0_11] : memref<16x128xf32, #tpu.memory_space<vmem>>, vector<16x128xf32>
    tpu.vector_store %arg6[%c0_10, %c0_11], %11 {strides = array<i32>} : memref<16x128xf32, #tpu.memory_space<vmem>>, vector<16x128xf32>,
    return
  }
  func.func @transform_0(%arg0: i32) -> (i32, i32) {
    %c0_i32 = arith.constant 0 : i32
    %c0_i32_0 = arith.constant 0 : i32
    return %arg0, %c0_i32 : i32, i32
  }
  func.func @transform_1(%arg0: i32) -> (i32, i32) {
    %c0_i32 = arith.constant 0 : i32
    %c0_i32_0 = arith.constant 0 : i32
    %c0_i32_1 = arith.constant 0 : i32
    return %c0_i32, %c0_i32_0 : i32, i32
  }
  func.func @transform_2(%arg0: i32) -> (i32, i32) {
    %c0_i32 = arith.constant 0 : i32
    %c0_i32_0 = arith.constant 0 : i32
    %c0_i32_1 = arith.constant 0 : i32
    return %c0_i32, %c0_i32_0 : i32, i32
  }
  func.func @transform_3(%arg0: i32) -> (i32, i32) {
    %c0_i32 = arith.constant 0 : i32
    %c0_i32_0 = arith.constant 0 : i32
    %c0_i32_1 = arith.constant 0 : i32
    return %c0_i32, %c0_i32_0 : i32, i32
  }
  func.func @transform_4(%arg0: i32) -> (i32, i32) {
    %c0_i32 = arith.constant 0 : i32
    %c0_i32_0 = arith.constant 0 : i32
    %c0_i32_1 = arith.constant 0 : i32
    return %c0_i32, %c0_i32_0 : i32, i32
  }
  func.func @transform_5(%arg0: i32) -> (i32, i32) {
    %c0_i32 = arith.constant 0 : i32
    %c0_i32_0 = arith.constant 0 : i32
    return %arg0, %c0_i32 : i32, i32
  }
}

</mosaic_0001>

<llo_original>
// kernel: howjul_forward.4
$region0: #{howjul_forward.4}
  #allocation0 [shape = 'u32[]', space=smem, size = 0x4, offset = 0x4, fixed_abs, tag = 'smem constant byte address 0x4 - core index']
  #allocation1 [shape = 'u32[144,128]{1,0:T(1,128)}', space=vmem, size = 0x12000, scoped, tag = 'internal scratch']
  #allocation2 [shape = 'f32[32,32,128]{2,1,0:T(8,128)}', space=vmem, size = 0x80000, scoped, tag = 'scratch operand']
  #allocation3 [shape = 'f32[32,16,128]{2,1,0:T(8,128)}', space=vmem, size = 0x40000, scoped, tag = 'scratch operand']
  %s0 = inlined_call_operand.vmem [shape: bf16[2048,75], index: 0, kind: input, shape index: {}]
  %s1 = inlined_call_operand.vmem [shape: bf16[75,128], index: 1, kind: input, shape index: {}]
  %s2 = inlined_call_operand.vmem [shape: f32[1,128], index: 2, kind: input, shape index: {}]
  %s3 = inlined_call_operand.vmem [shape: bf16[32,16,128], index: 3, kind: output, shape index: {}]
  %s4 = sld [smem:[#allocation0]]
  $region45: #{howjul_forward.4} parent=0
    _
  %s6 = ssub.s32 1, %s4
  %s7 = scalar_select 0, %s6, %s4
  loop: start=0, step=1, limit=4
  $region2: #{howjul_forward.4} parent=0 // loop_pre_header
    _
  $region3: #{howjul_forward.4} parent=0 // loop_header
    %s9 = sphi 0, %s13
    %p10 = scmp.ge.s32.totalorder %s9, 4
    %s19 = sphi 0, %s21
    %s22 = sphi 0, %s19
    %s23 = sphi 0, %s22
    %s39 = sphi 0, %s23
    %s43 = sphi 0, %s43
    %s45 = sphi 0, %s43
    %s46 = sphi 0, %s45
    %s60 = sphi 0, %s46
    %s64 = sphi 0, %s64
    %s66 = sphi 0, %s64
    %s67 = sphi 0, %s66
    %s81 = sphi 0, %s67
    %s87 = sphi 0, %s89
    %s90 = sphi 0, %s87
    %s91 = sphi 0, %s90
    %s107 = sphi 0, %s91
  $region4: #{howjul_forward.4} parent=0 // loop_header_branch
    %12 = sbr.rel (%p10) target = $region8
  $region5: #{howjul_forward.4} parent=0 // loop_body
    %s14 = ssub.s32 %s9, 1
    %s15 = ssub.s32 %s9, 2
    %s16 = sadd.s32 %s9, 1
    %s17 = ssub.s32 %s9, %s16
    %p18 = scmp.eq.s32.totalorder %s17, 0
    %s20 = sadd.s32 %s19, 1
    %s21 = scalar_select %p18, %s19, %s20
    %p24 = pneg %p18
    %p25 = scmp.eq.s32.totalorder %s9, 1
    %p26 = por %p24, %p25
    %p27 = scmp.ne.s32.totalorder %s19, %s22
    %p28 = scmp.eq.s32.totalorder %s9, 0
    %p29 = por %p27, %p28
    %p30 = scmp.ne.s32.totalorder %s19, %s22
    %p31 = scmp.eq.s32.totalorder %s14, 1
    %p32 = por %p30, %p31
    %p33 = scmp.ne.s32.totalorder %s22, %s23
    %p34 = scmp.eq.s32.totalorder %s14, 0
    %p35 = por %p33, %p34
    %p36 = scmp.ne.s32.totalorder %s22, %s23
    %p37 = scmp.eq.s32.totalorder %s15, 1
    %p38 = por %p36, %p37
    %p40 = scmp.ne.s32.totalorder %s23, %s39
    %p41 = scmp.eq.s32.totalorder %s15, 0
    %p42 = por %p40, %p41
    %s44 = sadd.s32 %s43, 1
    %p47 = scmp.eq.s32.totalorder %s9, 1
    %p48 = scmp.ne.s32.totalorder %s43, %s45
    %p49 = scmp.eq.s32.totalorder %s9, 0
    %p50 = por %p48, %p49
    %p51 = scmp.ne.s32.totalorder %s43, %s45
    %p52 = scmp.eq.s32.totalorder %s14, 1
    %p53 = por %p51, %p52
    %p54 = scmp.ne.s32.totalorder %s45, %s46
    %p55 = scmp.eq.s32.totalorder %s14, 0
    %p56 = por %p54, %p55
    %p57 = scmp.ne.s32.totalorder %s45, %s46
    %p58 = scmp.eq.s32.totalorder %s15, 1
    %p59 = por %p57, %p58
    %p61 = scmp.ne.s32.totalorder %s46, %s60
    %p62 = scmp.eq.s32.totalorder %s15, 0
    %p63 = por %p61, %p62
    %s65 = sadd.s32 %s64, 1
    %p68 = scmp.eq.s32.totalorder %s9, 1
    %p69 = scmp.ne.s32.totalorder %s64, %s66
    %p70 = scmp.eq.s32.totalorder %s9, 0
    %p71 = por %p69, %p70
    %p72 = scmp.ne.s32.totalorder %s64, %s66
    %p73 = scmp.eq.s32.totalorder %s14, 1
    %p74 = por %p72, %p73
    %p75 = scmp.ne.s32.totalorder %s66, %s67
    %p76 = scmp.eq.s32.totalorder %s14, 0
    %p77 = por %p75, %p76
    %p78 = scmp.ne.s32.totalorder %s66, %s67
    %p79 = scmp.eq.s32.totalorder %s15, 1
    %p80 = por %p78, %p79
    %p82 = scmp.ne.s32.totalorder %s67, %s81
    %p83 = scmp.eq.s32.totalorder %s15, 0
    %p84 = por %p82, %p83
    %s85 = ssub.s32 %s9, %s16
    %p86 = scmp.eq.s32.totalorder %s85, 0
    %s88 = sadd.s32 %s87, 1
    %s89 = scalar_select %p86, %s87, %s88
    %p92 = pneg %p86
    %p93 = scmp.eq.s32.totalorder %s9, 1
    %p94 = por %p92, %p93
    %p95 = scmp.ne.s32.totalorder %s87, %s90
    %p96 = scmp.eq.s32.totalorder %s9, 0
    %p97 = por %p95, %p96
    %p98 = scmp.ne.s32.totalorder %s87, %s90
    %p99 = scmp.eq.s32.totalorder %s14, 1
    %p100 = por %p98, %p99
    %p101 = scmp.ne.s32.totalorder %s90, %s91
    %p102 = scmp.eq.s32.totalorder %s14, 0
    %p103 = por %p101, %p102
    %p104 = scmp.ne.s32.totalorder %s90, %s91
    %p105 = scmp.eq.s32.totalorder %s15, 1
    %p106 = por %p104, %p105
    %p108 = scmp.ne.s32.totalorder %s91, %s107
    %p109 = scmp.eq.s32.totalorder %s15, 0
    %p110 = por %p108, %p109
    %p111 = scmp.le.s32.totalorder 1, %s9
    %p112 = scmp.lt.s32.totalorder %s9, 3
    %p113 = pnand %p111, %p112
    %p114 = pneg %p113
    // Predicated region
    $region9: #{howjul_forward.4} parent=5 // pred_check
      _
    $region10: #{howjul_forward.4} parent=5 // pred_check_branch
      %116 = sbr.rel (%p113) target = $region12
    $region11: #{howjul_forward.4} parent=5 // pred_region
      %s117 = ssub.s32 %s9, 1
      // Predicated region
      $region13: #{howjul_forward.4} parent=11 // pred_check
        %p118 = pneg %p56
      $region14: #{howjul_forward.4} parent=11 // pred_check_branch
        %120 = sbr.rel (%p118) target = $region16
      $region15: #{howjul_forward.4} parent=11 // pred_region
        _
      $region16: #{howjul_forward.4} parent=11 // pred_fallthru
        _
      // Predicated region
      $region17: #{howjul_forward.4} parent=11 // pred_check
        %p121 = pneg %p77
      $region18: #{howjul_forward.4} parent=11 // pred_check_branch
        %123 = sbr.rel (%p121) target = $region20
      $region19: #{howjul_forward.4} parent=11 // pred_region
        _
      $region20: #{howjul_forward.4} parent=11 // pred_fallthru
        _
    $region12: #{howjul_forward.4} parent=5 // pred_fallthru
      _
    %p124 = scmp.lt.s32.totalorder %s9, 2
    // Predicated region
    $region21: #{howjul_forward.4} parent=5 // pred_check
      %p125 = pneg %p124
    $region22: #{howjul_forward.4} parent=5 // pred_check_branch
      %127 = sbr.rel (%p125) target = $region24
    $region23: #{howjul_forward.4} parent=5 // pred_region
      // Predicated region
      $region25: #{howjul_forward.4} parent=23 // pred_check
        %p128 = pneg %p29
      $region26: #{howjul_forward.4} parent=23 // pred_check_branch
        %130 = sbr.rel (%p128) target = $region28
      $region27: #{howjul_forward.4} parent=23 // pred_region
        %s131 = smul.u32 128, %s9
        %p132 = scmp.lt.s32.totalorder %s131, 255
        %s133 = scalar_select %p132, %s131, 255
        %s134 = smul.addr %s133, 4
        %s135 = scalar_lea.vmem %s0, %s134
        %s136 = smul.u32 128, %s9
      $region28: #{howjul_forward.4} parent=23 // pred_fallthru
        _
    $region24: #{howjul_forward.4} parent=5 // pred_fallthru
      _
    %p137 = scmp.le.s32.totalorder 1, %s9
    %p138 = scmp.lt.s32.totalorder %s9, 3
    %p139 = pnand %p137, %p138
    %p140 = pneg %p139
    // Predicated region
    $region29: #{howjul_forward.4} parent=5 // pred_check
      _
    $region30: #{howjul_forward.4} parent=5 // pred_check_branch
      %142 = sbr.rel (%p139) target = $region32
    $region31: #{howjul_forward.4} parent=5 // pred_region
      %s143 = ssub.s32 %s9, 1
      %s144 = smul.u32 128, %s14
      %p145 = scmp.lt.s32.totalorder %s144, 255
      %s146 = scalar_select %p145, %s144, 255
      %s147 = smul.addr %s146, 4
      %s148 = scalar_lea.vmem %s0, %s147
      %p149 = pneg %p35
      %p150 = pneg %p32
      %p151 = pneg %p56
      %p152 = pneg %p53
      %p153 = pneg %p77
      %p154 = pneg %p74
      %p155 = pneg %p103
      %p156 = pneg %p100
      %s157 = smul.u32 16, %s14
      %p158 = scmp.lt.s32.totalorder %s157, 31
      %s159 = scalar_select %p158, %s157, 31
      %s160 = smul.addr %s159, 2
      %s161 = smul.addr %s160, 4
      %s162 = scalar_lea.vmem %s3, %s161
      %s163 = smul.u32 128, %s14
      %p164 = scmp.lt.s32.totalorder %s163, 255
      %s165 = scalar_select %p164, %s163, 255
      %s166 = smul.addr %s165, 4
      %s167 = scalar_lea.vmem %s0, %s166
      %s168 = smul.u32 128, %s14
      %s169 = smul.u32 16, %s14
      %p170 = scmp.lt.s32.totalorder %s169, 31
      %s171 = scalar_select %p170, %s169, 31
      %s172 = smul.addr %s171, 2
      %s173 = smul.addr %s172, 4
      %s174 = scalar_lea.vmem %s3, %s173
      %s175 = smul.u32 16, %s14
      %v177 = vld [vmem:[%s167] sm:$0xf]
      %v178 = vld [vmem:[%s167 + $0x4] sm:$0xf]
      %v179 = vld [vmem:[%s167 + $0x8] sm:$0xf]
      %v180 = vld [vmem:[%s167 + $0xc] sm:$0xf]
      %v181 = vld [vmem:[%s167 + $0x10] sm:$0xf]
      %v182 = vld [vmem:[%s167 + $0x14] sm:$0xf]
      %v183 = vld [vmem:[%s167 + $0x18] sm:$0xf]
      %v184 = vld [vmem:[%s167 + $0x1c] sm:$0xf]
      %v185 = vld [vmem:[%s167 + $0x20] sm:$0xf]
      %v186 = vld [vmem:[%s167 + $0x24] sm:$0xf]
      %v187 = vld [vmem:[%s167 + $0x28] sm:$0xf]
      %v188 = vld [vmem:[%s167 + $0x2c] sm:$0xf]
      %v189 = vld [vmem:[%s167 + $0x30] sm:$0xf]
      %v190 = vld [vmem:[%s167 + $0x34] sm:$0xf]
      %v191 = vld [vmem:[%s167 + $0x38] sm:$0xf]
      %v192 = vld [vmem:[%s167 + $0x3c] sm:$0xf]
      %v193 = vld [vmem:[%s167 + $0x40] sm:$0xf]
      %v194 = vld [vmem:[%s167 + $0x44] sm:$0xf]
      %v195 = vld [vmem:[%s167 + $0x48] sm:$0xf]
      %v196 = vld [vmem:[%s167 + $0x4c] sm:$0xf]
      %v197 = vld [vmem:[%s167 + $0x50] sm:$0xf]
      %v198 = vld [vmem:[%s167 + $0x54] sm:$0xf]
      %v199 = vld [vmem:[%s167 + $0x58] sm:$0xf]
      %v200 = vld [vmem:[%s167 + $0x5c] sm:$0xf]
      %v201 = vld [vmem:[%s167 + $0x60] sm:$0xf]
      %v202 = vld [vmem:[%s167 + $0x64] sm:$0xf]
      %v203 = vld [vmem:[%s167 + $0x68] sm:$0xf]
      %v204 = vld [vmem:[%s167 + $0x6c] sm:$0xf]
      %v205 = vld [vmem:[%s167 + $0x70] sm:$0xf]
      %v206 = vld [vmem:[%s167 + $0x74] sm:$0xf]
      %v207 = vld [vmem:[%s167 + $0x78] sm:$0xf]
      %v208 = vld [vmem:[%s167 + $0x7c] sm:$0xf]
      %v209 = vld [vmem:[%s167 + $0x80] sm:$0xf]
      %v210 = vld [vmem:[%s167 + $0x84] sm:$0xf]
      %v211 = vld [vmem:[%s167 + $0x88] sm:$0xf]
      %v212 = vld [vmem:[%s167 + $0x8c] sm:$0xf]
      %v213 = vld [vmem:[%s167 + $0x90] sm:$0xf]
      %v214 = vld [vmem:[%s167 + $0x94] sm:$0xf]
      %v215 = vld [vmem:[%s167 + $0x98] sm:$0xf]
      %v216 = vld [vmem:[%s167 + $0x9c] sm:$0xf]
      %v217 = vld [vmem:[%s167 + $0xa0] sm:$0xf]
      %v218 = vld [vmem:[%s167 + $0xa4] sm:$0xf]
      %v219 = vld [vmem:[%s167 + $0xa8] sm:$0xf]
      %v220 = vld [vmem:[%s167 + $0xac] sm:$0xf]
      %v221 = vld [vmem:[%s167 + $0xb0] sm:$0xf]
      %v222 = vld [vmem:[%s167 + $0xb4] sm:$0xf]
      %v223 = vld [vmem:[%s167 + $0xb8] sm:$0xf]
      %v224 = vld [vmem:[%s167 + $0xbc] sm:$0xf]
      %v225 = vld [vmem:[%s167 + $0xc0] sm:$0xf]
      %v226 = vld [vmem:[%s167 + $0xc4] sm:$0xf]
      %v227 = vld [vmem:[%s167 + $0xc8] sm:$0xf]
      %v228 = vld [vmem:[%s167 + $0xcc] sm:$0xf]
      %v229 = vld [vmem:[%s167 + $0xd0] sm:$0xf]
      %v230 = vld [vmem:[%s167 + $0xd4] sm:$0xf]
      %v231 = vld [vmem:[%s167 + $0xd8] sm:$0xf]
      %v232 = vld [vmem:[%s167 + $0xdc] sm:$0xf]
      %v233 = vld [vmem:[%s167 + $0xe0] sm:$0xf]
      %v234 = vld [vmem:[%s167 + $0xe4] sm:$0xf]
      %v235 = vld [vmem:[%s167 + $0xe8] sm:$0xf]
      %v236 = vld [vmem:[%s167 + $0xec] sm:$0xf]
      %v237 = vld [vmem:[%s167 + $0xf0] sm:$0xf]
      %v238 = vld [vmem:[%s167 + $0xf4] sm:$0xf]
      %v239 = vld [vmem:[%s167 + $0xf8] sm:$0xf]
      %v240 = vld [vmem:[%s167 + $0xfc] sm:$0xf]
      %v241 = vld [vmem:[%s167 + $0x100] sm:$0xf]
      %v242 = vld [vmem:[%s167 + $0x104] sm:$0xf]
      %v243 = vld [vmem:[%s167 + $0x108] sm:$0xf]
      %v244 = vld [vmem:[%s167 + $0x10c] sm:$0xf]
      %v245 = vld [vmem:[%s167 + $0x110] sm:$0xf]
      %v246 = vld [vmem:[%s167 + $0x114] sm:$0xf]
      %v247 = vld [vmem:[%s167 + $0x118] sm:$0xf]
      %v248 = vld [vmem:[%s167 + $0x11c] sm:$0xf]
      %v249 = vld [vmem:[%s167 + $0x120] sm:$0xf]
      %v250 = vld [vmem:[%s167 + $0x124] sm:$0xf]
      %v251 = vld [vmem:[%s167 + $0x128] sm:$0xf]
      %v252 = vld [vmem:[%s167 + $0x12c] sm:$0xf]
      %v253 = vld [vmem:[%s167 + $0x130] sm:$0xf]
      %v254 = vld [vmem:[%s167 + $0x134] sm:$0xf]
      %v255 = vld [vmem:[%s167 + $0x138] sm:$0xf]
      %v256 = vld [vmem:[%s167 + $0x13c] sm:$0xf]
      %v257 = vld [vmem:[%s167 + $0x140] sm:$0xf]
      %v258 = vld [vmem:[%s167 + $0x144] sm:$0xf]
      %v259 = vld [vmem:[%s167 + $0x148] sm:$0xf]
      %v260 = vld [vmem:[%s167 + $0x14c] sm:$0xf]
      %v261 = vld [vmem:[%s167 + $0x150] sm:$0xf]
      %v262 = vld [vmem:[%s167 + $0x154] sm:$0xf]
      %v263 = vld [vmem:[%s167 + $0x158] sm:$0xf]
      %v264 = vld [vmem:[%s167 + $0x15c] sm:$0xf]
      %v265 = vld [vmem:[%s167 + $0x160] sm:$0xf]
      %v266 = vld [vmem:[%s167 + $0x164] sm:$0xf]
      %v267 = vld [vmem:[%s167 + $0x168] sm:$0xf]
      %v268 = vld [vmem:[%s167 + $0x16c] sm:$0xf]
      %v269 = vld [vmem:[%s167 + $0x170] sm:$0xf]
      %v270 = vld [vmem:[%s167 + $0x174] sm:$0xf]
      %v271 = vld [vmem:[%s167 + $0x178] sm:$0xf]
      %v272 = vld [vmem:[%s167 + $0x17c] sm:$0xf]
      %v273 = vld [vmem:[%s167 + $0x180] sm:$0xf]
      %v274 = vld [vmem:[%s167 + $0x184] sm:$0xf]
      %v275 = vld [vmem:[%s167 + $0x188] sm:$0xf]
      %v276 = vld [vmem:[%s167 + $0x18c] sm:$0xf]
      %v277 = vld [vmem:[%s167 + $0x190] sm:$0xf]
      %v278 = vld [vmem:[%s167 + $0x194] sm:$0xf]
      %v279 = vld [vmem:[%s167 + $0x198] sm:$0xf]
      %v280 = vld [vmem:[%s167 + $0x19c] sm:$0xf]
      %v281 = vld [vmem:[%s167 + $0x1a0] sm:$0xf]
      %v282 = vld [vmem:[%s167 + $0x1a4] sm:$0xf]
      %v283 = vld [vmem:[%s167 + $0x1a8] sm:$0xf]
      %v284 = vld [vmem:[%s167 + $0x1ac] sm:$0xf]
      %v285 = vld [vmem:[%s167 + $0x1b0] sm:$0xf]
      %v286 = vld [vmem:[%s167 + $0x1b4] sm:$0xf]
      %v287 = vld [vmem:[%s167 + $0x1b8] sm:$0xf]
      %v288 = vld [vmem:[%s167 + $0x1bc] sm:$0xf]
      %v289 = vld [vmem:[%s167 + $0x1c0] sm:$0xf]
      %v290 = vld [vmem:[%s167 + $0x1c4] sm:$0xf]
      %v291 = vld [vmem:[%s167 + $0x1c8] sm:$0xf]
      %v292 = vld [vmem:[%s167 + $0x1cc] sm:$0xf]
      %v293 = vld [vmem:[%s167 + $0x1d0] sm:$0xf]
      %v294 = vld [vmem:[%s167 + $0x1d4] sm:$0xf]
      %v295 = vld [vmem:[%s167 + $0x1d8] sm:$0xf]
      %v296 = vld [vmem:[%s167 + $0x1dc] sm:$0xf]
      %v297 = vld [vmem:[%s167 + $0x1e0] sm:$0xf]
      %v298 = vld [vmem:[%s167 + $0x1e4] sm:$0xf]
      %v299 = vld [vmem:[%s167 + $0x1e8] sm:$0xf]
      %v300 = vld [vmem:[%s167 + $0x1ec] sm:$0xf]
      %v301 = vld [vmem:[%s167 + $0x1f0] sm:$0xf]
      %v302 = vld [vmem:[%s167 + $0x1f4] sm:$0xf]
      %v303 = vld [vmem:[%s167 + $0x1f8] sm:$0xf]
      %v304 = vld [vmem:[%s167 + $0x1fc] sm:$0xf]
      %v305 = vld [vmem:[%s1] sm:$0xf]
      %v306 = vld [vmem:[%s1 + $0x4] sm:$0xf]
      %v307 = vld [vmem:[%s1 + $0x8] sm:$0xf]
      %v308 = vld [vmem:[%s1 + $0xc] sm:$0xf]
      %v309 = vld [vmem:[%s1 + $0x10] sm:$0xf]
      %v310 = vld [vmem:[%s1 + $0x14] sm:$0xf]
      %v311 = vld [vmem:[%s1 + $0x18] sm:$0xf]
      %v312 = vld [vmem:[%s1 + $0x1c] sm:$0xf]
      %v313 = vld [vmem:[%s1 + $0x20] sm:$0xf]
      %v314 = vld [vmem:[%s1 + $0x24] sm:$0x3]
      %v315 = vld [vmem:[%s2] sm:$0x1]
      %v317 = vlaneseq
      %v318 = vshrl.u32 %v317, 7
      %v319 = vsub.s32 0, %v318
      %v320 = vrot.slane %v315, %v319
      %v450 = vunpack.c.l.b16 %v177
      %v451 = vunpack.c.l.b16 %v178
      %v452 = vunpack.c.l.b16 %v179
      %v453 = vunpack.c.l.b16 %v180
      %v454 = vunpack.c.l.b16 %v181
      %v455 = vunpack.c.l.b16 %v182
      %v456 = vunpack.c.l.b16 %v183
      %v457 = vunpack.c.l.b16 %v184
      %v458 = vunpack.c.l.b16 %v185
      %v459 = vunpack.c.l.b16 %v186
      %v460 = vunpack.c.l.b16 %v187
      %v461 = vunpack.c.l.b16 %v188
      %v462 = vunpack.c.l.b16 %v189
      %v463 = vunpack.c.l.b16 %v190
      %v464 = vunpack.c.l.b16 %v191
      %v465 = vunpack.c.l.b16 %v192
      %v466 = vunpack.c.l.b16 %v193
      %v467 = vunpack.c.l.b16 %v194
      %v468 = vunpack.c.l.b16 %v195
      %v469 = vunpack.c.l.b16 %v196
      %v470 = vunpack.c.l.b16 %v197
      %v471 = vunpack.c.l.b16 %v198
      %v472 = vunpack.c.l.b16 %v199
      %v473 = vunpack.c.l.b16 %v200
      %v474 = vunpack.c.l.b16 %v201
      %v475 = vunpack.c.l.b16 %v202
      %v476 = vunpack.c.l.b16 %v203
      %v477 = vunpack.c.l.b16 %v204
      %v478 = vunpack.c.l.b16 %v205
      %v479 = vunpack.c.l.b16 %v206
      %v480 = vunpack.c.l.b16 %v207
      %v481 = vunpack.c.l.b16 %v208
      %v482 = vunpack.c.l.b16 %v209
      %v483 = vunpack.c.l.b16 %v210
      %v484 = vunpack.c.l.b16 %v211
      %v485 = vunpack.c.l.b16 %v212
      %v486 = vunpack.c.l.b16 %v213
      %v487 = vunpack.c.l.b16 %v214
      %v488 = vunpack.c.l.b16 %v215
      %v489 = vunpack.c.l.b16 %v216
      %v490 = vunpack.c.l.b16 %v217
      %v491 = vunpack.c.l.b16 %v218
      %v492 = vunpack.c.l.b16 %v219
      %v493 = vunpack.c.l.b16 %v220
      %v494 = vunpack.c.l.b16 %v221
      %v495 = vunpack.c.l.b16 %v222
      %v496 = vunpack.c.l.b16 %v223
      %v497 = vunpack.c.l.b16 %v224
      %v498 = vunpack.c.l.b16 %v225
      %v499 = vunpack.c.l.b16 %v226
      %v500 = vunpack.c.l.b16 %v227
      %v501 = vunpack.c.l.b16 %v228
      %v502 = vunpack.c.l.b16 %v229
      %v503 = vunpack.c.l.b16 %v230
      %v504 = vunpack.c.l.b16 %v231
      %v505 = vunpack.c.l.b16 %v232
      %v506 = vunpack.c.l.b16 %v233
      %v507 = vunpack.c.l.b16 %v234
      %v508 = vunpack.c.l.b16 %v235
      %v509 = vunpack.c.l.b16 %v236
      %v510 = vunpack.c.l.b16 %v237
      %v511 = vunpack.c.l.b16 %v238
      %v512 = vunpack.c.l.b16 %v239
      %v513 = vunpack.c.l.b16 %v240
      %v514 = vunpack.c.l.b16 %v241
      %v515 = vunpack.c.l.b16 %v242
      %v516 = vunpack.c.l.b16 %v243
      %v517 = vunpack.c.l.b16 %v244
      %v518 = vunpack.c.l.b16 %v245
      %v519 = vunpack.c.l.b16 %v246
      %v520 = vunpack.c.l.b16 %v247
      %v521 = vunpack.c.l.b16 %v248
      %v522 = vunpack.c.l.b16 %v249
      %v523 = vunpack.c.l.b16 %v250
      %v524 = vunpack.c.l.b16 %v251
      %v525 = vunpack.c.l.b16 %v252
      %v526 = vunpack.c.l.b16 %v253
      %v527 = vunpack.c.l.b16 %v254
      %v528 = vunpack.c.l.b16 %v255
      %v529 = vunpack.c.l.b16 %v256
      %v530 = vunpack.c.l.b16 %v257
      %v531 = vunpack.c.l.b16 %v258
      %v532 = vunpack.c.l.b16 %v259
      %v533 = vunpack.c.l.b16 %v260
      %v534 = vunpack.c.l.b16 %v261
      %v535 = vunpack.c.l.b16 %v262
      %v536 = vunpack.c.l.b16 %v263
      %v537 = vunpack.c.l.b16 %v264
      %v538 = vunpack.c.l.b16 %v265
      %v539 = vunpack.c.l.b16 %v266
      %v540 = vunpack.c.l.b16 %v267
      %v541 = vunpack.c.l.b16 %v268
      %v542 = vunpack.c.l.b16 %v269
      %v543 = vunpack.c.l.b16 %v270
      %v544 = vunpack.c.l.b16 %v271
      %v545 = vunpack.c.l.b16 %v272
      %v546 = vunpack.c.l.b16 %v273
      %v547 = vunpack.c.l.b16 %v274
      %v548 = vunpack.c.l.b16 %v275
      %v549 = vunpack.c.l.b16 %v276
      %v550 = vunpack.c.l.b16 %v277
      %v551 = vunpack.c.l.b16 %v278
      %v552 = vunpack.c.l.b16 %v279
      %v553 = vunpack.c.l.b16 %v280
      %v554 = vunpack.c.l.b16 %v281
      %v555 = vunpack.c.l.b16 %v282
      %v556 = vunpack.c.l.b16 %v283
      %v557 = vunpack.c.l.b16 %v284
      %v558 = vunpack.c.l.b16 %v285
      %v559 = vunpack.c.l.b16 %v286
      %v560 = vunpack.c.l.b16 %v287
      %v561 = vunpack.c.l.b16 %v288
      %v562 = vunpack.c.l.b16 %v289
      %v563 = vunpack.c.l.b16 %v290
      %v564 = vunpack.c.l.b16 %v291
      %v565 = vunpack.c.l.b16 %v292
      %v566 = vunpack.c.l.b16 %v293
      %v567 = vunpack.c.l.b16 %v294
      %v568 = vunpack.c.l.b16 %v295
      %v569 = vunpack.c.l.b16 %v296
      %v570 = vunpack.c.l.b16 %v297
      %v571 = vunpack.c.l.b16 %v298
      %v572 = vunpack.c.l.b16 %v299
      %v573 = vunpack.c.l.b16 %v300
      %v574 = vunpack.c.l.b16 %v301
      %v575 = vunpack.c.l.b16 %v302
      %v576 = vunpack.c.l.b16 %v303
      %v577 = vunpack.c.l.b16 %v304
      %v578 = vpack.c.b16 %v451, %v450
      %v579 = vpack.c.b16 %v453, %v452
      %v580 = vpack.c.b16 %v455, %v454
      %v581 = vpack.c.b16 %v457, %v456
      %v582 = vpack.c.b16 %v459, %v458
      %v583 = vpack.c.b16 %v461, %v460
      %v584 = vpack.c.b16 %v463, %v462
      %v585 = vpack.c.b16 %v465, %v464
      %v586 = vpack.c.b16 %v467, %v466
      %v587 = vpack.c.b16 %v469, %v468
      %v588 = vpack.c.b16 %v471, %v470
      %v589 = vpack.c.b16 %v473, %v472
      %v590 = vpack.c.b16 %v475, %v474
      %v591 = vpack.c.b16 %v477, %v476
      %v592 = vpack.c.b16 %v479, %v478
      %v593 = vpack.c.b16 %v481, %v480
      %v594 = vpack.c.b16 %v483, %v482
      %v595 = vpack.c.b16 %v485, %v484
      %v596 = vpack.c.b16 %v487, %v486
      %v597 = vpack.c.b16 %v489, %v488
      %v598 = vpack.c.b16 %v491, %v490
      %v599 = vpack.c.b16 %v493, %v492
      %v600 = vpack.c.b16 %v495, %v494
      %v601 = vpack.c.b16 %v497, %v496
      %v602 = vpack.c.b16 %v499, %v498
      %v603 = vpack.c.b16 %v501, %v500
      %v604 = vpack.c.b16 %v503, %v502
      %v605 = vpack.c.b16 %v505, %v504
      %v606 = vpack.c.b16 %v507, %v506
      %v607 = vpack.c.b16 %v509, %v508
      %v608 = vpack.c.b16 %v511, %v510
      %v609 = vpack.c.b16 %v513, %v512
      %v610 = vpack.c.b16 %v515, %v514
      %v611 = vpack.c.b16 %v517, %v516
      %v612 = vpack.c.b16 %v519, %v518
      %v613 = vpack.c.b16 %v521, %v520
      %v614 = vpack.c.b16 %v523, %v522
      %v615 = vpack.c.b16 %v525, %v524
      %v616 = vpack.c.b16 %v527, %v526
      %v617 = vpack.c.b16 %v529, %v528
      %v618 = vpack.c.b16 %v531, %v530
      %v619 = vpack.c.b16 %v533, %v532
      %v620 = vpack.c.b16 %v535, %v534
      %v621 = vpack.c.b16 %v537, %v536
      %v622 = vpack.c.b16 %v539, %v538
      %v623 = vpack.c.b16 %v541, %v540
      %v624 = vpack.c.b16 %v543, %v542
      %v625 = vpack.c.b16 %v545, %v544
      %v626 = vpack.c.b16 %v547, %v546
      %v627 = vpack.c.b16 %v549, %v548
      %v628 = vpack.c.b16 %v551, %v550
      %v629 = vpack.c.b16 %v553, %v552
      %v630 = vpack.c.b16 %v555, %v554
      %v631 = vpack.c.b16 %v557, %v556
      %v632 = vpack.c.b16 %v559, %v558
      %v633 = vpack.c.b16 %v561, %v560
      %v634 = vpack.c.b16 %v563, %v562
      %v635 = vpack.c.b16 %v565, %v564
      %v636 = vpack.c.b16 %v567, %v566
      %v637 = vpack.c.b16 %v569, %v568
      %v638 = vpack.c.b16 %v571, %v570
      %v639 = vpack.c.b16 %v573, %v572
      %v640 = vpack.c.b16 %v575, %v574
      %v641 = vpack.c.b16 %v577, %v576
      %v652 = vunpack.c.l.b16 %v305
      %v653 = vunpack.c.l.b16 %v306
      %v654 = vunpack.c.l.b16 %v307
      %v655 = vunpack.c.l.b16 %v308
      %v656 = vunpack.c.l.b16 %v309
      %v657 = vunpack.c.l.b16 %v310
      %v658 = vunpack.c.l.b16 %v311
      %v659 = vunpack.c.l.b16 %v312
      %v660 = vunpack.c.l.b16 %v313
      %v661 = vunpack.c.l.b16 %v314
      %v662 = vpack.c.b16 %v653, %v652
      %v663 = vpack.c.b16 %v655, %v654
      %v664 = vpack.c.b16 %v657, %v656
      %v665 = vpack.c.b16 %v659, %v658
      %v666 = vpack.c.b16 %v661, %v660
      %vm671 = vcmask 613376
      %v673 = vsel %vm671, %v578, 0
      %v676 = vsel %vm671, %v579, 0
      %v679 = vsel %vm671, %v580, 0
      %v682 = vsel %vm671, %v581, 0
      %v685 = vsel %vm671, %v582, 0
      %v688 = vsel %vm671, %v583, 0
      %v691 = vsel %vm671, %v584, 0
      %v694 = vsel %vm671, %v585, 0
      %v697 = vsel %vm671, %v586, 0
      %v700 = vsel %vm671, %v587, 0
      %v703 = vsel %vm671, %v588, 0
      %v706 = vsel %vm671, %v589, 0
      %v709 = vsel %vm671, %v590, 0
      %v712 = vsel %vm671, %v591, 0
      %v715 = vsel %vm671, %v592, 0
      %v718 = vsel %vm671, %v593, 0
      %v721 = vsel %vm671, %v594, 0
      %v724 = vsel %vm671, %v595, 0
      %v727 = vsel %vm671, %v596, 0
      %v730 = vsel %vm671, %v597, 0
      %v733 = vsel %vm671, %v598, 0
      %v736 = vsel %vm671, %v599, 0
      %v739 = vsel %vm671, %v600, 0
      %v742 = vsel %vm671, %v601, 0
      %v745 = vsel %vm671, %v602, 0
      %v748 = vsel %vm671, %v603, 0
      %v751 = vsel %vm671, %v604, 0
      %v754 = vsel %vm671, %v605, 0
      %v757 = vsel %vm671, %v606, 0
      %v760 = vsel %vm671, %v607, 0
      %v763 = vsel %vm671, %v608, 0
      %v766 = vsel %vm671, %v609, 0
      %v769 = vsel %vm671, %v610, 0
      %v772 = vsel %vm671, %v611, 0
      %v775 = vsel %vm671, %v612, 0
      %v778 = vsel %vm671, %v613, 0
      %v781 = vsel %vm671, %v614, 0
      %v784 = vsel %vm671, %v615, 0
      %v787 = vsel %vm671, %v616, 0
      %v790 = vsel %vm671, %v617, 0
      %v793 = vsel %vm671, %v618, 0
      %v796 = vsel %vm671, %v619, 0
      %v799 = vsel %vm671, %v620, 0
      %v802 = vsel %vm671, %v621, 0
      %v805 = vsel %vm671, %v622, 0
      %v808 = vsel %vm671, %v623, 0
      %v811 = vsel %vm671, %v624, 0
      %v814 = vsel %vm671, %v625, 0
      %v817 = vsel %vm671, %v626, 0
      %v820 = vsel %vm671, %v627, 0
      %v823 = vsel %vm671, %v628, 0
      %v826 = vsel %vm671, %v629, 0
      %v829 = vsel %vm671, %v630, 0
      %v832 = vsel %vm671, %v631, 0
      %v835 = vsel %vm671, %v632, 0
      %v838 = vsel %vm671, %v633, 0
      %v841 = vsel %vm671, %v634, 0
      %v844 = vsel %vm671, %v635, 0
      %v847 = vsel %vm671, %v636, 0
      %v850 = vsel %vm671, %v637, 0
      %v853 = vsel %vm671, %v638, 0
      %v856 = vsel %vm671, %v639, 0
      %v859 = vsel %vm671, %v640, 0
      %v862 = vsel %vm671, %v641, 0
      %vm864 = vcmask 1044480
      %vm865 = vcmask 1045504
      %v866 = vsel %vm864, 4294967295, 65535
      %v867 = vsel %vm865, %v866, 0
      %v869 = vand.u32 %v666, %v867
      %871 = vmatprep.subr.bf16.mxu0 0
      %872 = vmatpush1.bf16.msra.mxu0 %v662
      %873 = vmatprep.subr.bf16.mxu0 0
      %874 = vmatpush1.bf16.msra.mxu0 %v663
      %875 = vmatprep.subr.bf16.mxu0 0
      %876 = vmatpush1.bf16.msra.mxu0 %v664
      %877 = vmatprep.subr.bf16.mxu0 0
      %878 = vmatpush1.bf16.msra.mxu0 %v665
      %879 = vmatprep.subr.bf16.mxu0 0
      %880 = vmatpush1.bf16.msra.mxu0 %v869
      %881 = vmatprep.subr.bf16.mxu0 0
      %882 = vmatpush1.bf16.msra.mxu0 0
      %883 = vmatprep.subr.bf16.mxu0 0
      %884 = vmatpush1.bf16.msra.mxu0 0
      %885 = vmatprep.subr.bf16.mxu0 0
      %886 = vmatpush1.bf16.msra.mxu0 0
      %887 = vmatprep.subr.bf16.mxu0 0
      %888 = vmatpush1.bf16.msra.mxu0 0
      %889 = vmatprep.subr.bf16.mxu0 0
      %890 = vmatpush1.bf16.msra.mxu0 0
      %891 = vmatprep.subr.bf16.mxu0 0
      %892 = vmatpush1.bf16.msra.mxu0 0
      %893 = vmatprep.subr.bf16.mxu0 0
      %894 = vmatpush1.bf16.msra.mxu0 0
      %895 = vmatprep.subr.bf16.mxu0 0
      %896 = vmatpush1.bf16.msra.mxu0 0
      %897 = vmatprep.subr.bf16.mxu0 0
      %898 = vmatpush1.bf16.msra.mxu0 0
      %899 = vmatprep.subr.bf16.mxu0 0
      %900 = vmatpush1.bf16.msra.mxu0 0
      %901 = vmatprep.subr.bf16.mxu0 0
      %902 = vmatpush1.bf16.msra.mxu0 0
      %903 = vmatprep.mubr.bf16.mxu0 0
      %904 = vmatmul.mubr.bf16.gmra.mrb[0].mxu0 %v673
      %v905 = vpop.f32.mrb[0].mxu0
      %v906 = vadd.f32 %v320, %v905
      %v907 = vpop.f32.mrb[0].mxu0
      %v908 = vpop.f32.mrb[0].mxu0
      %v909 = vadd.f32 %v320, %v908
      %v910 = vpop.f32.mrb[0].mxu0
      %911 = vmatprep.mubr.bf16.mxu0 0
      %912 = vmatmul.mubr.bf16.gmra.mrb[0].mxu0 %v676
      %v913 = vpop.f32.mrb[0].mxu0
      %v914 = vadd.f32 %v320, %v913
      %v915 = vpop.f32.mrb[0].mxu0
      %v916 = vpop.f32.mrb[0].mxu0
      %v917 = vadd.f32 %v320, %v916
      %v918 = vpop.f32.mrb[0].mxu0
      %919 = vmatprep.mubr.bf16.mxu0 0
      %920 = vmatmul.mubr.bf16.gmra.mrb[0].mxu0 %v679
      %v921 = vpop.f32.mrb[0].mxu0
      %v922 = vadd.f32 %v320, %v921
      %v923 = vpop.f32.mrb[0].mxu0
      %v924 = vpop.f32.mrb[0].mxu0
      %v925 = vadd.f32 %v320, %v924
      %v926 = vpop.f32.mrb[0].mxu0
      %927 = vmatprep.mubr.bf16.mxu0 0
      %928 = vmatmul.mubr.bf16.gmra.mrb[0].mxu0 %v682
      %v929 = vpop.f32.mrb[0].mxu0
      %v930 = vadd.f32 %v320, %v929
      %v931 = vpop.f32.mrb[0].mxu0
      %v932 = vpop.f32.mrb[0].mxu0
      %v933 = vadd.f32 %v320, %v932
      %v934 = vpop.f32.mrb[0].mxu0
      %935 = vmatprep.mubr.bf16.mxu0 0
      %936 = vmatmul.mubr.bf16.gmra.mrb[0].mxu0 %v685
      %v937 = vpop.f32.mrb[0].mxu0
      %v938 = vadd.f32 %v320, %v937
      %v939 = vpop.f32.mrb[0].mxu0
      %v940 = vpop.f32.mrb[0].mxu0
      %v941 = vadd.f32 %v320, %v940
      %v942 = vpop.f32.mrb[0].mxu0
      %943 = vmatprep.mubr.bf16.mxu0 0
      %944 = vmatmul.mubr.bf16.gmra.mrb[0].mxu0 %v688
      %v945 = vpop.f32.mrb[0].mxu0
      %v946 = vadd.f32 %v320, %v945
      %v947 = vpop.f32.mrb[0].mxu0
      %v948 = vpop.f32.mrb[0].mxu0
      %v949 = vadd.f32 %v320, %v948
      %v950 = vpop.f32.mrb[0].mxu0
      %951 = vmatprep.mubr.bf16.mxu0 0
      %952 = vmatmul.mubr.bf16.gmra.mrb[0].mxu0 %v691
      %v953 = vpop.f32.mrb[0].mxu0
      %v954 = vadd.f32 %v320, %v953
      %v955 = vpop.f32.mrb[0].mxu0
      %v956 = vpop.f32.mrb[0].mxu0
      %v957 = vadd.f32 %v320, %v956
      %v958 = vpop.f32.mrb[0].mxu0
      %959 = vmatprep.mubr.bf16.mxu0 0
      %960 = vmatmul.mubr.bf16.gmra.mrb[0].mxu0 %v694
      %v961 = vpop.f32.mrb[0].mxu0
      %v962 = vadd.f32 %v320, %v961
      %v963 = vpop.f32.mrb[0].mxu0
      %v964 = vpop.f32.mrb[0].mxu0
      %v965 = vadd.f32 %v320, %v964
      %v966 = vpop.f32.mrb[0].mxu0
      %967 = vmatprep.mubr.bf16.mxu0 0
      %968 = vmatmul.mubr.bf16.gmra.mrb[0].mxu0 %v697
      %v969 = vpop.f32.mrb[0].mxu0
      %v970 = vadd.f32 %v320, %v969
      %v971 = vpop.f32.mrb[0].mxu0
      %v972 = vpop.f32.mrb[0].mxu0
      %v973 = vadd.f32 %v320, %v972
      %v974 = vpop.f32.mrb[0].mxu0
      %975 = vmatprep.mubr.bf16.mxu0 0
      %976 = vmatmul.mubr.bf16.gmra.mrb[0].mxu0 %v700
      %v977 = vpop.f32.mrb[0].mxu0
      %v978 = vadd.f32 %v320, %v977
      %v979 = vpop.f32.mrb[0].mxu0
      %v980 = vpop.f32.mrb[0].mxu0
      %v981 = vadd.f32 %v320, %v980
      %v982 = vpop.f32.mrb[0].mxu0
      %983 = vmatprep.mubr.bf16.mxu0 0
      %984 = vmatmul.mubr.bf16.gmra.mrb[0].mxu0 %v703
      %v985 = vpop.f32.mrb[0].mxu0
      %v986 = vadd.f32 %v320, %v985
      %v987 = vpop.f32.mrb[0].mxu0
      %v988 = vpop.f32.mrb[0].mxu0
      %v989 = vadd.f32 %v320, %v988
      %v990 = vpop.f32.mrb[0].mxu0
      %991 = vmatprep.mubr.bf16.mxu0 0
      %992 = vmatmul.mubr.bf16.gmra.mrb[0].mxu0 %v706
      %v993 = vpop.f32.mrb[0].mxu0
      %v994 = vadd.f32 %v320, %v993
      %v995 = vpop.f32.mrb[0].mxu0
      %v996 = vpop.f32.mrb[0].mxu0
      %v997 = vadd.f32 %v320, %v996
      %v998 = vpop.f32.mrb[0].mxu0
      %999 = vmatprep.mubr.bf16.mxu0 0
      %1000 = vmatmul.mubr.bf16.gmra.mrb[0].mxu0 %v709
      %v1001 = vpop.f32.mrb[0].mxu0
      %v1002 = vadd.f32 %v320, %v1001
      %v1003 = vpop.f32.mrb[0].mxu0
      %v1004 = vpop.f32.mrb[0].mxu0
      %v1005 = vadd.f32 %v320, %v1004
      %v1006 = vpop.f32.mrb[0].mxu0
      %1007 = vmatprep.mubr.bf16.mxu0 0
      %1008 = vmatmul.mubr.bf16.gmra.mrb[0].mxu0 %v712
      %v1009 = vpop.f32.mrb[0].mxu0
      %v1010 = vadd.f32 %v320, %v1009
      %v1011 = vpop.f32.mrb[0].mxu0
      %v1012 = vpop.f32.mrb[0].mxu0
      %v1013 = vadd.f32 %v320, %v1012
      %v1014 = vpop.f32.mrb[0].mxu0
      %1015 = vmatprep.mubr.bf16.mxu0 0
      %1016 = vmatmul.mubr.bf16.gmra.mrb[0].mxu0 %v715
      %v1017 = vpop.f32.mrb[0].mxu0
      %v1018 = vadd.f32 %v320, %v1017
      %v1019 = vpop.f32.mrb[0].mxu0
      %v1020 = vpop.f32.mrb[0].mxu0
      %v1021 = vadd.f32 %v320, %v1020
      %v1022 = vpop.f32.mrb[0].mxu0
      %1023 = vmatprep.mubr.bf16.mxu0 0
      %1024 = vmatmul.mubr.bf16.gmra.mrb[0].mxu0 %v718
      %v1025 = vpop.f32.mrb[0].mxu0
      %v1026 = vadd.f32 %v320, %v1025
      %v1027 = vpop.f32.mrb[0].mxu0
      %v1028 = vpop.f32.mrb[0].mxu0
      %v1029 = vadd.f32 %v320, %v1028
      %v1030 = vpop.f32.mrb[0].mxu0
      %1031 = vmatprep.mubr.bf16.mxu0 0
      %1032 = vmatmul.mubr.bf16.gmra.mrb[0].mxu0 %v721
      %v1033 = vpop.f32.mrb[0].mxu0
      %v1034 = vadd.f32 %v320, %v1033
      %v1035 = vpop.f32.mrb[0].mxu0
      %v1036 = vpop.f32.mrb[0].mxu0
      %v1037 = vadd.f32 %v320, %v1036
      %v1038 = vpop.f32.mrb[0].mxu0
      %1039 = vmatprep.mubr.bf16.mxu0 0
      %1040 = vmatmul.mubr.bf16.gmra.mrb[0].mxu0 %v724
      %v1041 = vpop.f32.mrb[0].mxu0
      %v1042 = vadd.f32 %v320, %v1041
      %v1043 = vpop.f32.mrb[0].mxu0
      %v1044 = vpop.f32.mrb[0].mxu0
      %v1045 = vadd.f32 %v320, %v1044
      %v1046 = vpop.f32.mrb[0].mxu0
      %1047 = vmatprep.mubr.bf16.mxu0 0
      %1048 = vmatmul.mubr.bf16.gmra.mrb[0].mxu0 %v727
      %v1049 = vpop.f32.mrb[0].mxu0
      %v1050 = vadd.f32 %v320, %v1049
      %v1051 = vpop.f32.mrb[0].mxu0
      %v1052 = vpop.f32.mrb[0].mxu0
      %v1053 = vadd.f32 %v320, %v1052
      %v1054 = vpop.f32.mrb[0].mxu0
      %1055 = vmatprep.mubr.bf16.mxu0 0
      %1056 = vmatmul.mubr.bf16.gmra.mrb[0].mxu0 %v730
      %v1057 = vpop.f32.mrb[0].mxu0
      %v1058 = vadd.f32 %v320, %v1057
      %v1059 = vpop.f32.mrb[0].mxu0
      %v1060 = vpop.f32.mrb[0].mxu0
      %v1061 = vadd.f32 %v320, %v1060
      %v1062 = vpop.f32.mrb[0].mxu0
      %1063 = vmatprep.mubr.bf16.mxu0 0
      %1064 = vmatmul.mubr.bf16.gmra.mrb[0].mxu0 %v733
      %v1065 = vpop.f32.mrb[0].mxu0
      %v1066 = vadd.f32 %v320, %v1065
      %v1067 = vpop.f32.mrb[0].mxu0
      %v1068 = vpop.f32.mrb[0].mxu0
      %v1069 = vadd.f32 %v320, %v1068
      %v1070 = vpop.f32.mrb[0].mxu0
      %1071 = vmatprep.mubr.bf16.mxu0 0
      %1072 = vmatmul.mubr.bf16.gmra.mrb[0].mxu0 %v736
      %v1073 = vpop.f32.mrb[0].mxu0
      %v1074 = vadd.f32 %v320, %v1073
      %v1075 = vpop.f32.mrb[0].mxu0
      %v1076 = vpop.f32.mrb[0].mxu0
      %v1077 = vadd.f32 %v320, %v1076
      %v1078 = vpop.f32.mrb[0].mxu0
      %1079 = vmatprep.mubr.bf16.mxu0 0
      %1080 = vmatmul.mubr.bf16.gmra.mrb[0].mxu0 %v739
      %v1081 = vpop.f32.mrb[0].mxu0
      %v1082 = vadd.f32 %v320, %v1081
      %v1083 = vpop.f32.mrb[0].mxu0
      %v1084 = vpop.f32.mrb[0].mxu0
      %v1085 = vadd.f32 %v320, %v1084
      %v1086 = vpop.f32.mrb[0].mxu0
      %1087 = vmatprep.mubr.bf16.mxu0 0
      %1088 = vmatmul.mubr.bf16.gmra.mrb[0].mxu0 %v742
      %v1089 = vpop.f32.mrb[0].mxu0
      %v1090 = vadd.f32 %v320, %v1089
      %v1091 = vpop.f32.mrb[0].mxu0
      %v1092 = vpop.f32.mrb[0].mxu0
      %v1093 = vadd.f32 %v320, %v1092
      %v1094 = vpop.f32.mrb[0].mxu0
      %1095 = vmatprep.mubr.bf16.mxu0 0
      %1096 = vmatmul.mubr.bf16.gmra.mrb[0].mxu0 %v745
      %v1097 = vpop.f32.mrb[0].mxu0
      %v1098 = vadd.f32 %v320, %v1097
      %v1099 = vpop.f32.mrb[0].mxu0
      %v1100 = vpop.f32.mrb[0].mxu0
      %v1101 = vadd.f32 %v320, %v1100
      %v1102 = vpop.f32.mrb[0].mxu0
      %1103 = vmatprep.mubr.bf16.mxu0 0
      %1104 = vmatmul.mubr.bf16.gmra.mrb[0].mxu0 %v748
      %v1105 = vpop.f32.mrb[0].mxu0
      %v1106 = vadd.f32 %v320, %v1105
      %v1107 = vpop.f32.mrb[0].mxu0
      %v1108 = vpop.f32.mrb[0].mxu0
      %v1109 = vadd.f32 %v320, %v1108
      %v1110 = vpop.f32.mrb[0].mxu0
      %1111 = vmatprep.mubr.bf16.mxu0 0
      %1112 = vmatmul.mubr.bf16.gmra.mrb[0].mxu0 %v751
      %v1113 = vpop.f32.mrb[0].mxu0
      %v1114 = vadd.f32 %v320, %v1113
      %v1115 = vpop.f32.mrb[0].mxu0
      %v1116 = vpop.f32.mrb[0].mxu0
      %v1117 = vadd.f32 %v320, %v1116
      %v1118 = vpop.f32.mrb[0].mxu0
      %1119 = vmatprep.mubr.bf16.mxu0 0
      %1120 = vmatmul.mubr.bf16.gmra.mrb[0].mxu0 %v754
      %v1121 = vpop.f32.mrb[0].mxu0
      %v1122 = vadd.f32 %v320, %v1121
      %v1123 = vpop.f32.mrb[0].mxu0
      %v1124 = vpop.f32.mrb[0].mxu0
      %v1125 = vadd.f32 %v320, %v1124
      %v1126 = vpop.f32.mrb[0].mxu0
      %1127 = vmatprep.mubr.bf16.mxu0 0
      %1128 = vmatmul.mubr.bf16.gmra.mrb[0].mxu0 %v757
      %v1129 = vpop.f32.mrb[0].mxu0
      %v1130 = vadd.f32 %v320, %v1129
      %v1131 = vpop.f32.mrb[0].mxu0
      %v1132 = vpop.f32.mrb[0].mxu0
      %v1133 = vadd.f32 %v320, %v1132
      %v1134 = vpop.f32.mrb[0].mxu0
      %1135 = vmatprep.mubr.bf16.mxu0 0
      %1136 = vmatmul.mubr.bf16.gmra.mrb[0].mxu0 %v760
      %v1137 = vpop.f32.mrb[0].mxu0
      %v1138 = vadd.f32 %v320, %v1137
      %v1139 = vpop.f32.mrb[0].mxu0
      %v1140 = vpop.f32.mrb[0].mxu0
      %v1141 = vadd.f32 %v320, %v1140
      %v1142 = vpop.f32.mrb[0].mxu0
      %1143 = vmatprep.mubr.bf16.mxu0 0
      %1144 = vmatmul.mubr.bf16.gmra.mrb[0].mxu0 %v763
      %v1145 = vpop.f32.mrb[0].mxu0
      %v1146 = vadd.f32 %v320, %v1145
      %v1147 = vpop.f32.mrb[0].mxu0
      %v1148 = vpop.f32.mrb[0].mxu0
      %v1149 = vadd.f32 %v320, %v1148
      %v1150 = vpop.f32.mrb[0].mxu0
      %1151 = vmatprep.mubr.bf16.mxu0 0
      %1152 = vmatmul.mubr.bf16.gmra.mrb[0].mxu0 %v766
      %v1153 = vpop.f32.mrb[0].mxu0
      %v1154 = vadd.f32 %v320, %v1153
      %v1155 = vpop.f32.mrb[0].mxu0
      %v1156 = vpop.f32.mrb[0].mxu0
      %v1157 = vadd.f32 %v320, %v1156
      %v1158 = vpop.f32.mrb[0].mxu0
      %1159 = vmatprep.mubr.bf16.mxu0 0
      %1160 = vmatmul.mubr.bf16.gmra.mrb[0].mxu0 %v769
      %v1161 = vpop.f32.mrb[0].mxu0
      %v1162 = vadd.f32 %v320, %v1161
      %v1163 = vpop.f32.mrb[0].mxu0
      %v1164 = vpop.f32.mrb[0].mxu0
      %v1165 = vadd.f32 %v320, %v1164
      %v1166 = vpop.f32.mrb[0].mxu0
      %1167 = vmatprep.mubr.bf16.mxu0 0
      %1168 = vmatmul.mubr.bf16.gmra.mrb[0].mxu0 %v772
      %v1169 = vpop.f32.mrb[0].mxu0
      %v1170 = vadd.f32 %v320, %v1169
      %v1171 = vpop.f32.mrb[0].mxu0
      %v1172 = vpop.f32.mrb[0].mxu0
      %v1173 = vadd.f32 %v320, %v1172
      %v1174 = vpop.f32.mrb[0].mxu0
      %1175 = vmatprep.mubr.bf16.mxu0 0
      %1176 = vmatmul.mubr.bf16.gmra.mrb[0].mxu0 %v775
      %v1177 = vpop.f32.mrb[0].mxu0
      %v1178 = vadd.f32 %v320, %v1177
      %v1179 = vpop.f32.mrb[0].mxu0
      %v1180 = vpop.f32.mrb[0].mxu0
      %v1181 = vadd.f32 %v320, %v1180
      %v1182 = vpop.f32.mrb[0].mxu0
      %1183 = vmatprep.mubr.bf16.mxu0 0
      %1184 = vmatmul.mubr.bf16.gmra.mrb[0].mxu0 %v778
      %v1185 = vpop.f32.mrb[0].mxu0
      %v1186 = vadd.f32 %v320, %v1185
      %v1187 = vpop.f32.mrb[0].mxu0
      %v1188 = vpop.f32.mrb[0].mxu0
      %v1189 = vadd.f32 %v320, %v1188
      %v1190 = vpop.f32.mrb[0].mxu0
      %1191 = vmatprep.mubr.bf16.mxu0 0
      %1192 = vmatmul.mubr.bf16.gmra.mrb[0].mxu0 %v781
      %v1193 = vpop.f32.mrb[0].mxu0
      %v1194 = vadd.f32 %v320, %v1193
      %v1195 = vpop.f32.mrb[0].mxu0
      %v1196 = vpop.f32.mrb[0].mxu0
      %v1197 = vadd.f32 %v320, %v1196
      %v1198 = vpop.f32.mrb[0].mxu0
      %1199 = vmatprep.mubr.bf16.mxu0 0
      %1200 = vmatmul.mubr.bf16.gmra.mrb[0].mxu0 %v784
      %v1201 = vpop.f32.mrb[0].mxu0
      %v1202 = vadd.f32 %v320, %v1201
      %v1203 = vpop.f32.mrb[0].mxu0
      %v1204 = vpop.f32.mrb[0].mxu0
      %v1205 = vadd.f32 %v320, %v1204
      %v1206 = vpop.f32.mrb[0].mxu0
      %1207 = vmatprep.mubr.bf16.mxu0 0
      %1208 = vmatmul.mubr.bf16.gmra.mrb[0].mxu0 %v787
      %v1209 = vpop.f32.mrb[0].mxu0
      %v1210 = vadd.f32 %v320, %v1209
      %v1211 = vpop.f32.mrb[0].mxu0
      %v1212 = vpop.f32.mrb[0].mxu0
      %v1213 = vadd.f32 %v320, %v1212
      %v1214 = vpop.f32.mrb[0].mxu0
      %1215 = vmatprep.mubr.bf16.mxu0 0
      %1216 = vmatmul.mubr.bf16.gmra.mrb[0].mxu0 %v790
      %v1217 = vpop.f32.mrb[0].mxu0
      %v1218 = vadd.f32 %v320, %v1217
      %v1219 = vpop.f32.mrb[0].mxu0
      %v1220 = vpop.f32.mrb[0].mxu0
      %v1221 = vadd.f32 %v320, %v1220
      %v1222 = vpop.f32.mrb[0].mxu0
      %1223 = vmatprep.mubr.bf16.mxu0 0
      %1224 = vmatmul.mubr.bf16.gmra.mrb[0].mxu0 %v793
      %v1225 = vpop.f32.mrb[0].mxu0
      %v1226 = vadd.f32 %v320, %v1225
      %v1227 = vpop.f32.mrb[0].mxu0
      %v1228 = vpop.f32.mrb[0].mxu0
      %v1229 = vadd.f32 %v320, %v1228
      %v1230 = vpop.f32.mrb[0].mxu0
      %1231 = vmatprep.mubr.bf16.mxu0 0
      %1232 = vmatmul.mubr.bf16.gmra.mrb[0].mxu0 %v796
      %v1233 = vpop.f32.mrb[0].mxu0
      %v1234 = vadd.f32 %v320, %v1233
      %v1235 = vpop.f32.mrb[0].mxu0
      %v1236 = vpop.f32.mrb[0].mxu0
      %v1237 = vadd.f32 %v320, %v1236
      %v1238 = vpop.f32.mrb[0].mxu0
      %1239 = vmatprep.mubr.bf16.mxu0 0
      %1240 = vmatmul.mubr.bf16.gmra.mrb[0].mxu0 %v799
      %v1241 = vpop.f32.mrb[0].mxu0
      %v1242 = vadd.f32 %v320, %v1241
      %v1243 = vpop.f32.mrb[0].mxu0
      %v1244 = vpop.f32.mrb[0].mxu0
      %v1245 = vadd.f32 %v320, %v1244
      %v1246 = vpop.f32.mrb[0].mxu0
      %1247 = vmatprep.mubr.bf16.mxu0 0
      %1248 = vmatmul.mubr.bf16.gmra.mrb[0].mxu0 %v802
      %v1249 = vpop.f32.mrb[0].mxu0
      %v1250 = vadd.f32 %v320, %v1249
      %v1251 = vpop.f32.mrb[0].mxu0
      %v1252 = vpop.f32.mrb[0].mxu0
      %v1253 = vadd.f32 %v320, %v1252
      %v1254 = vpop.f32.mrb[0].mxu0
      %1255 = vmatprep.mubr.bf16.mxu0 0
      %1256 = vmatmul.mubr.bf16.gmra.mrb[0].mxu0 %v805
      %v1257 = vpop.f32.mrb[0].mxu0
      %v1258 = vadd.f32 %v320, %v1257
      %v1259 = vpop.f32.mrb[0].mxu0
      %v1260 = vpop.f32.mrb[0].mxu0
      %v1261 = vadd.f32 %v320, %v1260
      %v1262 = vpop.f32.mrb[0].mxu0
      %1263 = vmatprep.mubr.bf16.mxu0 0
      %1264 = vmatmul.mubr.bf16.gmra.mrb[0].mxu0 %v808
      %v1265 = vpop.f32.mrb[0].mxu0
      %v1266 = vadd.f32 %v320, %v1265
      %v1267 = vpop.f32.mrb[0].mxu0
      %v1268 = vpop.f32.mrb[0].mxu0
      %v1269 = vadd.f32 %v320, %v1268
      %v1270 = vpop.f32.mrb[0].mxu0
      %1271 = vmatprep.mubr.bf16.mxu0 0
      %1272 = vmatmul.mubr.bf16.gmra.mrb[0].mxu0 %v811
      %v1273 = vpop.f32.mrb[0].mxu0
      %v1274 = vadd.f32 %v320, %v1273
      %v1275 = vpop.f32.mrb[0].mxu0
      %v1276 = vpop.f32.mrb[0].mxu0
      %v1277 = vadd.f32 %v320, %v1276
      %v1278 = vpop.f32.mrb[0].mxu0
      %1279 = vmatprep.mubr.bf16.mxu0 0
      %1280 = vmatmul.mubr.bf16.gmra.mrb[0].mxu0 %v814
      %v1281 = vpop.f32.mrb[0].mxu0
      %v1282 = vadd.f32 %v320, %v1281
      %v1283 = vpop.f32.mrb[0].mxu0
      %v1284 = vpop.f32.mrb[0].mxu0
      %v1285 = vadd.f32 %v320, %v1284
      %v1286 = vpop.f32.mrb[0].mxu0
      %1287 = vmatprep.mubr.bf16.mxu0 0
      %1288 = vmatmul.mubr.bf16.gmra.mrb[0].mxu0 %v817
      %v1289 = vpop.f32.mrb[0].mxu0
      %v1290 = vadd.f32 %v320, %v1289
      %v1291 = vpop.f32.mrb[0].mxu0
      %v1292 = vpop.f32.mrb[0].mxu0
      %v1293 = vadd.f32 %v320, %v1292
      %v1294 = vpop.f32.mrb[0].mxu0
      %1295 = vmatprep.mubr.bf16.mxu0 0
      %1296 = vmatmul.mubr.bf16.gmra.mrb[0].mxu0 %v820
      %v1297 = vpop.f32.mrb[0].mxu0
      %v1298 = vadd.f32 %v320, %v1297
      %v1299 = vpop.f32.mrb[0].mxu0
      %v1300 = vpop.f32.mrb[0].mxu0
      %v1301 = vadd.f32 %v320, %v1300
      %v1302 = vpop.f32.mrb[0].mxu0
      %1303 = vmatprep.mubr.bf16.mxu0 0
      %1304 = vmatmul.mubr.bf16.gmra.mrb[0].mxu0 %v823
      %v1305 = vpop.f32.mrb[0].mxu0
      %v1306 = vadd.f32 %v320, %v1305
      %v1307 = vpop.f32.mrb[0].mxu0
      %v1308 = vpop.f32.mrb[0].mxu0
      %v1309 = vadd.f32 %v320, %v1308
      %v1310 = vpop.f32.mrb[0].mxu0
      %1311 = vmatprep.mubr.bf16.mxu0 0
      %1312 = vmatmul.mubr.bf16.gmra.mrb[0].mxu0 %v826
      %v1313 = vpop.f32.mrb[0].mxu0
      %v1314 = vadd.f32 %v320, %v1313
      %v1315 = vpop.f32.mrb[0].mxu0
      %v1316 = vpop.f32.mrb[0].mxu0
      %v1317 = vadd.f32 %v320, %v1316
      %v1318 = vpop.f32.mrb[0].mxu0
      %1319 = vmatprep.mubr.bf16.mxu0 0
      %1320 = vmatmul.mubr.bf16.gmra.mrb[0].mxu0 %v829
      %v1321 = vpop.f32.mrb[0].mxu0
      %v1322 = vadd.f32 %v320, %v1321
      %v1323 = vpop.f32.mrb[0].mxu0
      %v1324 = vpop.f32.mrb[0].mxu0
      %v1325 = vadd.f32 %v320, %v1324
      %v1326 = vpop.f32.mrb[0].mxu0
      %1327 = vmatprep.mubr.bf16.mxu0 0
      %1328 = vmatmul.mubr.bf16.gmra.mrb[0].mxu0 %v832
      %v1329 = vpop.f32.mrb[0].mxu0
      %v1330 = vadd.f32 %v320, %v1329
      %v1331 = vpop.f32.mrb[0].mxu0
      %v1332 = vpop.f32.mrb[0].mxu0
      %v1333 = vadd.f32 %v320, %v1332
      %v1334 = vpop.f32.mrb[0].mxu0
      %1335 = vmatprep.mubr.bf16.mxu0 0
      %1336 = vmatmul.mubr.bf16.gmra.mrb[0].mxu0 %v835
      %v1337 = vpop.f32.mrb[0].mxu0
      %v1338 = vadd.f32 %v320, %v1337
      %v1339 = vpop.f32.mrb[0].mxu0
      %v1340 = vpop.f32.mrb[0].mxu0
      %v1341 = vadd.f32 %v320, %v1340
      %v1342 = vpop.f32.mrb[0].mxu0
      %1343 = vmatprep.mubr.bf16.mxu0 0
      %1344 = vmatmul.mubr.bf16.gmra.mrb[0].mxu0 %v838
      %v1345 = vpop.f32.mrb[0].mxu0
      %v1346 = vadd.f32 %v320, %v1345
      %v1347 = vpop.f32.mrb[0].mxu0
      %v1348 = vpop.f32.mrb[0].mxu0
      %v1349 = vadd.f32 %v320, %v1348
      %v1350 = vpop.f32.mrb[0].mxu0
      %1351 = vmatprep.mubr.bf16.mxu0 0
      %1352 = vmatmul.mubr.bf16.gmra.mrb[0].mxu0 %v841
      %v1353 = vpop.f32.mrb[0].mxu0
      %v1354 = vadd.f32 %v320, %v1353
      %v1355 = vpop.f32.mrb[0].mxu0
      %v1356 = vpop.f32.mrb[0].mxu0
      %v1357 = vadd.f32 %v320, %v1356
      %v1358 = vpop.f32.mrb[0].mxu0
      %1359 = vmatprep.mubr.bf16.mxu0 0
      %1360 = vmatmul.mubr.bf16.gmra.mrb[0].mxu0 %v844
      %v1361 = vpop.f32.mrb[0].mxu0
      %v1362 = vadd.f32 %v320, %v1361
      %v1363 = vpop.f32.mrb[0].mxu0
      %v1364 = vpop.f32.mrb[0].mxu0
      %v1365 = vadd.f32 %v320, %v1364
      %v1366 = vpop.f32.mrb[0].mxu0
      %1367 = vmatprep.mubr.bf16.mxu0 0
      %1368 = vmatmul.mubr.bf16.gmra.mrb[0].mxu0 %v847
      %v1369 = vpop.f32.mrb[0].mxu0
      %v1370 = vadd.f32 %v320, %v1369
      %v1371 = vpop.f32.mrb[0].mxu0
      %v1372 = vpop.f32.mrb[0].mxu0
      %v1373 = vadd.f32 %v320, %v1372
      %v1374 = vpop.f32.mrb[0].mxu0
      %1375 = vmatprep.mubr.bf16.mxu0 0
      %1376 = vmatmul.mubr.bf16.gmra.mrb[0].mxu0 %v850
      %v1377 = vpop.f32.mrb[0].mxu0
      %v1378 = vadd.f32 %v320, %v1377
      %v1379 = vpop.f32.mrb[0].mxu0
      %v1380 = vpop.f32.mrb[0].mxu0
      %v1381 = vadd.f32 %v320, %v1380
      %v1382 = vpop.f32.mrb[0].mxu0
      %1383 = vmatprep.mubr.bf16.mxu0 0
      %1384 = vmatmul.mubr.bf16.gmra.mrb[0].mxu0 %v853
      %v1385 = vpop.f32.mrb[0].mxu0
      %v1386 = vadd.f32 %v320, %v1385
      %v1387 = vpop.f32.mrb[0].mxu0
      %v1388 = vpop.f32.mrb[0].mxu0
      %v1389 = vadd.f32 %v320, %v1388
      %v1390 = vpop.f32.mrb[0].mxu0
      %1391 = vmatprep.mubr.bf16.mxu0 0
      %1392 = vmatmul.mubr.bf16.gmra.mrb[0].mxu0 %v856
      %v1393 = vpop.f32.mrb[0].mxu0
      %v1394 = vadd.f32 %v320, %v1393
      %v1395 = vpop.f32.mrb[0].mxu0
      %v1396 = vpop.f32.mrb[0].mxu0
      %v1397 = vadd.f32 %v320, %v1396
      %v1398 = vpop.f32.mrb[0].mxu0
      %1399 = vmatprep.mubr.bf16.mxu0 0
      %1400 = vmatmul.mubr.bf16.gmra.mrb[0].mxu0 %v859
      %v1401 = vpop.f32.mrb[0].mxu0
      %v1402 = vadd.f32 %v320, %v1401
      %v1403 = vpop.f32.mrb[0].mxu0
      %v1404 = vpop.f32.mrb[0].mxu0
      %v1405 = vadd.f32 %v320, %v1404
      %v1406 = vpop.f32.mrb[0].mxu0
      %1407 = vmatprep.mubr.bf16.mxu0 0
      %1408 = vmatmul.mubr.bf16.gmra.mrb[0].mxu0 %v862
      %v1409 = vpop.f32.mrb[0].mxu0
      %v1410 = vadd.f32 %v320, %v1409
      %v1411 = vpop.f32.mrb[0].mxu0
      %v1412 = vpop.f32.mrb[0].mxu0
      %v1413 = vadd.f32 %v320, %v1412
      %v1414 = vpop.f32.mrb[0].mxu0
      %1415 = vdwg.mxu0
      %1416 = vst [vmem:[#allocation2] sm:$0xff] %v906
      %1417 = vst [vmem:[#allocation2 + $0x8] sm:$0xff] %v909
      %1418 = vst [vmem:[#allocation2 + $0x10] sm:$0xff] %v914
      %1419 = vst [vmem:[#allocation2 + $0x18] sm:$0xff] %v917
      %1420 = vst [vmem:[#allocation2 + $0x20] sm:$0xff] %v922
      %1421 = vst [vmem:[#allocation2 + $0x28] sm:$0xff] %v925
      %1422 = vst [vmem:[#allocation2 + $0x30] sm:$0xff] %v930
      %1423 = vst [vmem:[#allocation2 + $0x38] sm:$0xff] %v933
      %1424 = vst [vmem:[#allocation2 + $0x40] sm:$0xff] %v938
      %1425 = vst [vmem:[#allocation2 + $0x48] sm:$0xff] %v941
      %1426 = vst [vmem:[#allocation2 + $0x50] sm:$0xff] %v946
      %1427 = vst [vmem:[#allocation2 + $0x58] sm:$0xff] %v949
      %1428 = vst [vmem:[#allocation2 + $0x60] sm:$0xff] %v954
      %1429 = vst [vmem:[#allocation2 + $0x68] sm:$0xff] %v957
      %1430 = vst [vmem:[#allocation2 + $0x70] sm:$0xff] %v962
      %1431 = vst [vmem:[#allocation2 + $0x78] sm:$0xff] %v965
      %1432 = vst [vmem:[#allocation2 + $0x80] sm:$0xff] %v970
      %1433 = vst [vmem:[#allocation2 + $0x88] sm:$0xff] %v973
      %1434 = vst [vmem:[#allocation2 + $0x90] sm:$0xff] %v978
      %1435 = vst [vmem:[#allocation2 + $0x98] sm:$0xff] %v981
      %1436 = vst [vmem:[#allocation2 + $0xa0] sm:$0xff] %v986
      %1437 = vst [vmem:[#allocation2 + $0xa8] sm:$0xff] %v989
      %1438 = vst [vmem:[#allocation2 + $0xb0] sm:$0xff] %v994
      %1439 = vst [vmem:[#allocation2 + $0xb8] sm:$0xff] %v997
      %1440 = vst [vmem:[#allocation2 + $0xc0] sm:$0xff] %v1002
      %1441 = vst [vmem:[#allocation2 + $0xc8] sm:$0xff] %v1005
      %1442 = vst [vmem:[#allocation2 + $0xd0] sm:$0xff] %v1010
      %1443 = vst [vmem:[#allocation2 + $0xd8] sm:$0xff] %v1013
      %1444 = vst [vmem:[#allocation2 + $0xe0] sm:$0xff] %v1018
      %1445 = vst [vmem:[#allocation2 + $0xe8] sm:$0xff] %v1021
      %1446 = vst [vmem:[#allocation2 + $0xf0] sm:$0xff] %v1026
      %1447 = vst [vmem:[#allocation2 + $0xf8] sm:$0xff] %v1029
      %1448 = vst [vmem:[#allocation2 + $0x100] sm:$0xff] %v1034
      %1449 = vst [vmem:[#allocation2 + $0x108] sm:$0xff] %v1037
      %1450 = vst [vmem:[#allocation2 + $0x110] sm:$0xff] %v1042
      %1451 = vst [vmem:[#allocation2 + $0x118] sm:$0xff] %v1045
      %1452 = vst [vmem:[#allocation2 + $0x120] sm:$0xff] %v1050
      %1453 = vst [vmem:[#allocation2 + $0x128] sm:$0xff] %v1053
      %1454 = vst [vmem:[#allocation2 + $0x130] sm:$0xff] %v1058
      %1455 = vst [vmem:[#allocation2 + $0x138] sm:$0xff] %v1061
      %1456 = vst [vmem:[#allocation2 + $0x140] sm:$0xff] %v1066
      %1457 = vst [vmem:[#allocation2 + $0x148] sm:$0xff] %v1069
      %1458 = vst [vmem:[#allocation2 + $0x150] sm:$0xff] %v1074
      %1459 = vst [vmem:[#allocation2 + $0x158] sm:$0xff] %v1077
      %1460 = vst [vmem:[#allocation2 + $0x160] sm:$0xff] %v1082
      %1461 = vst [vmem:[#allocation2 + $0x168] sm:$0xff] %v1085
      %1462 = vst [vmem:[#allocation2 + $0x170] sm:$0xff] %v1090
      %1463 = vst [vmem:[#allocation2 + $0x178] sm:$0xff] %v1093
      %1464 = vst [vmem:[#allocation2 + $0x180] sm:$0xff] %v1098
      %1465 = vst [vmem:[#allocation2 + $0x188] sm:$0xff] %v1101
      %1466 = vst [vmem:[#allocation2 + $0x190] sm:$0xff] %v1106
      %1467 = vst [vmem:[#allocation2 + $0x198] sm:$0xff] %v1109
      %1468 = vst [vmem:[#allocation2 + $0x1a0] sm:$0xff] %v1114
      %1469 = vst [vmem:[#allocation2 + $0x1a8] sm:$0xff] %v1117
      %1470 = vst [vmem:[#allocation2 + $0x1b0] sm:$0xff] %v1122
      %1471 = vst [vmem:[#allocation2 + $0x1b8] sm:$0xff] %v1125
      %1472 = vst [vmem:[#allocation2 + $0x1c0] sm:$0xff] %v1130
      %1473 = vst [vmem:[#allocation2 + $0x1c8] sm:$0xff] %v1133
      %1474 = vst [vmem:[#allocation2 + $0x1d0] sm:$0xff] %v1138
      %1475 = vst [vmem:[#allocation2 + $0x1d8] sm:$0xff] %v1141
      %1476 = vst [vmem:[#allocation2 + $0x1e0] sm:$0xff] %v1146
      %1477 = vst [vmem:[#allocation2 + $0x1e8] sm:$0xff] %v1149
      %1478 = vst [vmem:[#allocation2 + $0x1f0] sm:$0xff] %v1154
      %1479 = vst [vmem:[#allocation2 + $0x1f8] sm:$0xff] %v1157
      %1480 = vst [vmem:[#allocation2 + $0x200] sm:$0xff] %v1162
      %1481 = vst [vmem:[#allocation2 + $0x208] sm:$0xff] %v1165
      %1482 = vst [vmem:[#allocation2 + $0x210] sm:$0xff] %v1170
      %1483 = vst [vmem:[#allocation2 + $0x218] sm:$0xff] %v1173
      %1484 = vst [vmem:[#allocation2 + $0x220] sm:$0xff] %v1178
      %1485 = vst [vmem:[#allocation2 + $0x228] sm:$0xff] %v1181
      %1486 = vst [vmem:[#allocation2 + $0x230] sm:$0xff] %v1186
      %1487 = vst [vmem:[#allocation2 + $0x238] sm:$0xff] %v1189
      %1488 = vst [vmem:[#allocation2 + $0x240] sm:$0xff] %v1194
      %1489 = vst [vmem:[#allocation2 + $0x248] sm:$0xff] %v1197
      %1490 = vst [vmem:[#allocation2 + $0x250] sm:$0xff] %v1202
      %1491 = vst [vmem:[#allocation2 + $0x258] sm:$0xff] %v1205
      %1492 = vst [vmem:[#allocation2 + $0x260] sm:$0xff] %v1210
      %1493 = vst [vmem:[#allocation2 + $0x268] sm:$0xff] %v1213
      %1494 = vst [vmem:[#allocation2 + $0x270] sm:$0xff] %v1218
      %1495 = vst [vmem:[#allocation2 + $0x278] sm:$0xff] %v1221
      %1496 = vst [vmem:[#allocation2 + $0x280] sm:$0xff] %v1226
      %1497 = vst [vmem:[#allocation2 + $0x288] sm:$0xff] %v1229
      %1498 = vst [vmem:[#allocation2 + $0x290] sm:$0xff] %v1234
      %1499 = vst [vmem:[#allocation2 + $0x298] sm:$0xff] %v1237
      %1500 = vst [vmem:[#allocation2 + $0x2a0] sm:$0xff] %v1242
      %1501 = vst [vmem:[#allocation2 + $0x2a8] sm:$0xff] %v1245
      %1502 = vst [vmem:[#allocation2 + $0x2b0] sm:$0xff] %v1250
      %1503 = vst [vmem:[#allocation2 + $0x2b8] sm:$0xff] %v1253
      %1504 = vst [vmem:[#allocation2 + $0x2c0] sm:$0xff] %v1258
      %1505 = vst [vmem:[#allocation2 + $0x2c8] sm:$0xff] %v1261
      %1506 = vst [vmem:[#allocation2 + $0x2d0] sm:$0xff] %v1266
      %1507 = vst [vmem:[#allocation2 + $0x2d8] sm:$0xff] %v1269
      %1508 = vst [vmem:[#allocation2 + $0x2e0] sm:$0xff] %v1274
      %1509 = vst [vmem:[#allocation2 + $0x2e8] sm:$0xff] %v1277
      %1510 = vst [vmem:[#allocation2 + $0x2f0] sm:$0xff] %v1282
      %1511 = vst [vmem:[#allocation2 + $0x2f8] sm:$0xff] %v1285
      %1512 = vst [vmem:[#allocation2 + $0x300] sm:$0xff] %v1290
      %1513 = vst [vmem:[#allocation2 + $0x308] sm:$0xff] %v1293
      %1514 = vst [vmem:[#allocation2 + $0x310] sm:$0xff] %v1298
      %1515 = vst [vmem:[#allocation2 + $0x318] sm:$0xff] %v1301
      %1516 = vst [vmem:[#allocation2 + $0x320] sm:$0xff] %v1306
      %1517 = vst [vmem:[#allocation2 + $0x328] sm:$0xff] %v1309
      %1518 = vst [vmem:[#allocation2 + $0x330] sm:$0xff] %v1314
      %1519 = vst [vmem:[#allocation2 + $0x338] sm:$0xff] %v1317
      %1520 = vst [vmem:[#allocation2 + $0x340] sm:$0xff] %v1322
      %1521 = vst [vmem:[#allocation2 + $0x348] sm:$0xff] %v1325
      %1522 = vst [vmem:[#allocation2 + $0x350] sm:$0xff] %v1330
      %1523 = vst [vmem:[#allocation2 + $0x358] sm:$0xff] %v1333
      %1524 = vst [vmem:[#allocation2 + $0x360] sm:$0xff] %v1338
      %1525 = vst [vmem:[#allocation2 + $0x368] sm:$0xff] %v1341
      %1526 = vst [vmem:[#allocation2 + $0x370] sm:$0xff] %v1346
      %1527 = vst [vmem:[#allocation2 + $0x378] sm:$0xff] %v1349
      %1528 = vst [vmem:[#allocation2 + $0x380] sm:$0xff] %v1354
      %1529 = vst [vmem:[#allocation2 + $0x388] sm:$0xff] %v1357
      %1530 = vst [vmem:[#allocation2 + $0x390] sm:$0xff] %v1362
      %1531 = vst [vmem:[#allocation2 + $0x398] sm:$0xff] %v1365
      %1532 = vst [vmem:[#allocation2 + $0x3a0] sm:$0xff] %v1370
      %1533 = vst [vmem:[#allocation2 + $0x3a8] sm:$0xff] %v1373
      %1534 = vst [vmem:[#allocation2 + $0x3b0] sm:$0xff] %v1378
      %1535 = vst [vmem:[#allocation2 + $0x3b8] sm:$0xff] %v1381
      %1536 = vst [vmem:[#allocation2 + $0x3c0] sm:$0xff] %v1386
      %1537 = vst [vmem:[#allocation2 + $0x3c8] sm:$0xff] %v1389
      %1538 = vst [vmem:[#allocation2 + $0x3d0] sm:$0xff] %v1394
      %1539 = vst [vmem:[#allocation2 + $0x3d8] sm:$0xff] %v1397
      %1540 = vst [vmem:[#allocation2 + $0x3e0] sm:$0xff] %v1402
      %1541 = vst [vmem:[#allocation2 + $0x3e8] sm:$0xff] %v1405
      %1542 = vst [vmem:[#allocation2 + $0x3f0] sm:$0xff] %v1410
      %1543 = vst [vmem:[#allocation2 + $0x3f8] sm:$0xff] %v1413
      %v1544 = vld [vmem:[#allocation2] ss:$2 sm:$0xff]
      %s1545 = scalar_lea.vmem [#allocation2], 16
      %v1546 = vld [vmem:[%s1545] ss:$2 sm:$0xff]
      %s1547 = scalar_lea.vmem [#allocation2], 32
      %v1548 = vld [vmem:[%s1547] ss:$2 sm:$0xff]
      %s1549 = scalar_lea.vmem [#allocation2], 48
      %v1550 = vld [vmem:[%s1549] ss:$2 sm:$0xff]
      %s1551 = scalar_lea.vmem [#allocation2], 64
      %v1552 = vld [vmem:[%s1551] ss:$2 sm:$0xff]
      %s1553 = scalar_lea.vmem [#allocation2], 80
      %v1554 = vld [vmem:[%s1553] ss:$2 sm:$0xff]
      %s1555 = scalar_lea.vmem [#allocation2], 96
      %v1556 = vld [vmem:[%s1555] ss:$2 sm:$0xff]
      %s1557 = scalar_lea.vmem [#allocation2], 112
      %v1558 = vld [vmem:[%s1557] ss:$2 sm:$0xff]
      %s1559 = scalar_lea.vmem [#allocation2], 128
      %v1560 = vld [vmem:[%s1559] ss:$2 sm:$0xff]
      %s1561 = scalar_lea.vmem [#allocation2], 144
      %v1562 = vld [vmem:[%s1561] ss:$2 sm:$0xff]
      %s1563 = scalar_lea.vmem [#allocation2], 160
      %v1564 = vld [vmem:[%s1563] ss:$2 sm:$0xff]
      %s1565 = scalar_lea.vmem [#allocation2], 176
      %v1566 = vld [vmem:[%s1565] ss:$2 sm:$0xff]
      %s1567 = scalar_lea.vmem [#allocation2], 192
      %v1568 = vld [vmem:[%s1567] ss:$2 sm:$0xff]
      %s1569 = scalar_lea.vmem [#allocation2], 208
      %v1570 = vld [vmem:[%s1569] ss:$2 sm:$0xff]
      %s1571 = scalar_lea.vmem [#allocation2], 224
      %v1572 = vld [vmem:[%s1571] ss:$2 sm:$0xff]
      %s1573 = scalar_lea.vmem [#allocation2], 240
      %v1574 = vld [vmem:[%s1573] ss:$2 sm:$0xff]
      %s1575 = scalar_lea.vmem [#allocation2], 256
      %v1576 = vld [vmem:[%s1575] ss:$2 sm:$0xff]
      %s1577 = scalar_lea.vmem [#allocation2], 272
      %v1578 = vld [vmem:[%s1577] ss:$2 sm:$0xff]
      %s1579 = scalar_lea.vmem [#allocation2], 288
      %v1580 = vld [vmem:[%s1579] ss:$2 sm:$0xff]
      %s1581 = scalar_lea.vmem [#allocation2], 304
      %v1582 = vld [vmem:[%s1581] ss:$2 sm:$0xff]
      %s1583 = scalar_lea.vmem [#allocation2], 320
      %v1584 = vld [vmem:[%s1583] ss:$2 sm:$0xff]
      %s1585 = scalar_lea.vmem [#allocation2], 336
      %v1586 = vld [vmem:[%s1585] ss:$2 sm:$0xff]
      %s1587 = scalar_lea.vmem [#allocation2], 352
      %v1588 = vld [vmem:[%s1587] ss:$2 sm:$0xff]
      %s1589 = scalar_lea.vmem [#allocation2], 368
      %v1590 = vld [vmem:[%s1589] ss:$2 sm:$0xff]
      %s1591 = scalar_lea.vmem [#allocation2], 384
      %v1592 = vld [vmem:[%s1591] ss:$2 sm:$0xff]
      %s1593 = scalar_lea.vmem [#allocation2], 400
      %v1594 = vld [vmem:[%s1593] ss:$2 sm:$0xff]
      %s1595 = scalar_lea.vmem [#allocation2], 416
      %v1596 = vld [vmem:[%s1595] ss:$2 sm:$0xff]
      %s1597 = scalar_lea.vmem [#allocation2], 432
      %v1598 = vld [vmem:[%s1597] ss:$2 sm:$0xff]
      %s1599 = scalar_lea.vmem [#allocation2], 448
      %v1600 = vld [vmem:[%s1599] ss:$2 sm:$0xff]
      %s1601 = scalar_lea.vmem [#allocation2], 464
      %v1602 = vld [vmem:[%s1601] ss:$2 sm:$0xff]
      %s1603 = scalar_lea.vmem [#allocation2], 480
      %v1604 = vld [vmem:[%s1603] ss:$2 sm:$0xff]
      %s1605 = scalar_lea.vmem [#allocation2], 496
      %v1606 = vld [vmem:[%s1605] ss:$2 sm:$0xff]
      %s1607 = scalar_lea.vmem [#allocation2], 512
      %v1608 = vld [vmem:[%s1607] ss:$2 sm:$0xff]
      %s1609 = scalar_lea.vmem [#allocation2], 528
      %v1610 = vld [vmem:[%s1609] ss:$2 sm:$0xff]
      %s1611 = scalar_lea.vmem [#allocation2], 544
      %v1612 = vld [vmem:[%s1611] ss:$2 sm:$0xff]
      %s1613 = scalar_lea.vmem [#allocation2], 560
      %v1614 = vld [vmem:[%s1613] ss:$2 sm:$0xff]
      %s1615 = scalar_lea.vmem [#allocation2], 576
      %v1616 = vld [vmem:[%s1615] ss:$2 sm:$0xff]
      %s1617 = scalar_lea.vmem [#allocation2], 592
      %v1618 = vld [vmem:[%s1617] ss:$2 sm:$0xff]
      %s1619 = scalar_lea.vmem [#allocation2], 608
      %v1620 = vld [vmem:[%s1619] ss:$2 sm:$0xff]
      %s1621 = scalar_lea.vmem [#allocation2], 624
      %v1622 = vld [vmem:[%s1621] ss:$2 sm:$0xff]
      %s1623 = scalar_lea.vmem [#allocation2], 640
      %v1624 = vld [vmem:[%s1623] ss:$2 sm:$0xff]
      %s1625 = scalar_lea.vmem [#allocation2], 656
      %v1626 = vld [vmem:[%s1625] ss:$2 sm:$0xff]
      %s1627 = scalar_lea.vmem [#allocation2], 672
      %v1628 = vld [vmem:[%s1627] ss:$2 sm:$0xff]
      %s1629 = scalar_lea.vmem [#allocation2], 688
      %v1630 = vld [vmem:[%s1629] ss:$2 sm:$0xff]
      %s1631 = scalar_lea.vmem [#allocation2], 704
      %v1632 = vld [vmem:[%s1631] ss:$2 sm:$0xff]
      %s1633 = scalar_lea.vmem [#allocation2], 720
      %v1634 = vld [vmem:[%s1633] ss:$2 sm:$0xff]
      %s1635 = scalar_lea.vmem [#allocation2], 736
      %v1636 = vld [vmem:[%s1635] ss:$2 sm:$0xff]
      %s1637 = scalar_lea.vmem [#allocation2], 752
      %v1638 = vld [vmem:[%s1637] ss:$2 sm:$0xff]
      %s1639 = scalar_lea.vmem [#allocation2], 768
      %v1640 = vld [vmem:[%s1639] ss:$2 sm:$0xff]
      %s1641 = scalar_lea.vmem [#allocation2], 784
      %v1642 = vld [vmem:[%s1641] ss:$2 sm:$0xff]
      %s1643 = scalar_lea.vmem [#allocation2], 800
      %v1644 = vld [vmem:[%s1643] ss:$2 sm:$0xff]
      %s1645 = scalar_lea.vmem [#allocation2], 816
      %v1646 = vld [vmem:[%s1645] ss:$2 sm:$0xff]
      %s1647 = scalar_lea.vmem [#allocation2], 832
      %v1648 = vld [vmem:[%s1647] ss:$2 sm:$0xff]
      %s1649 = scalar_lea.vmem [#allocation2], 848
      %v1650 = vld [vmem:[%s1649] ss:$2 sm:$0xff]
      %s1651 = scalar_lea.vmem [#allocation2], 864
      %v1652 = vld [vmem:[%s1651] ss:$2 sm:$0xff]
      %s1653 = scalar_lea.vmem [#allocation2], 880
      %v1654 = vld [vmem:[%s1653] ss:$2 sm:$0xff]
      %s1655 = scalar_lea.vmem [#allocation2], 896
      %v1656 = vld [vmem:[%s1655] ss:$2 sm:$0xff]
      %s1657 = scalar_lea.vmem [#allocation2], 912
      %v1658 = vld [vmem:[%s1657] ss:$2 sm:$0xff]
      %s1659 = scalar_lea.vmem [#allocation2], 928
      %v1660 = vld [vmem:[%s1659] ss:$2 sm:$0xff]
      %s1661 = scalar_lea.vmem [#allocation2], 944
      %v1662 = vld [vmem:[%s1661] ss:$2 sm:$0xff]
      %s1663 = scalar_lea.vmem [#allocation2], 960
      %v1664 = vld [vmem:[%s1663] ss:$2 sm:$0xff]
      %s1665 = scalar_lea.vmem [#allocation2], 976
      %v1666 = vld [vmem:[%s1665] ss:$2 sm:$0xff]
      %s1667 = scalar_lea.vmem [#allocation2], 992
      %v1668 = vld [vmem:[%s1667] ss:$2 sm:$0xff]
      %s1669 = scalar_lea.vmem [#allocation2], 1008
      %v1670 = vld [vmem:[%s1669] ss:$2 sm:$0xff]
      %s1671 = scalar_lea.vmem [#allocation2], 1
      %v1672 = vld [vmem:[%s1671] ss:$2 sm:$0xff]
      %s1673 = scalar_lea.vmem [#allocation2], 17
      %v1674 = vld [vmem:[%s1673] ss:$2 sm:$0xff]
      %s1675 = scalar_lea.vmem [#allocation2], 33
      %v1676 = vld [vmem:[%s1675] ss:$2 sm:$0xff]
      %s1677 = scalar_lea.vmem [#allocation2], 49
      %v1678 = vld [vmem:[%s1677] ss:$2 sm:$0xff]
      %s1679 = scalar_lea.vmem [#allocation2], 65
      %v1680 = vld [vmem:[%s1679] ss:$2 sm:$0xff]
      %s1681 = scalar_lea.vmem [#allocation2], 81
      %v1682 = vld [vmem:[%s1681] ss:$2 sm:$0xff]
      %s1683 = scalar_lea.vmem [#allocation2], 97
      %v1684 = vld [vmem:[%s1683] ss:$2 sm:$0xff]
      %s1685 = scalar_lea.vmem [#allocation2], 113
      %v1686 = vld [vmem:[%s1685] ss:$2 sm:$0xff]
      %s1687 = scalar_lea.vmem [#allocation2], 129
      %v1688 = vld [vmem:[%s1687] ss:$2 sm:$0xff]
      %s1689 = scalar_lea.vmem [#allocation2], 145
      %v1690 = vld [vmem:[%s1689] ss:$2 sm:$0xff]
      %s1691 = scalar_lea.vmem [#allocation2], 161
      %v1692 = vld [vmem:[%s1691] ss:$2 sm:$0xff]
      %s1693 = scalar_lea.vmem [#allocation2], 177
      %v1694 = vld [vmem:[%s1693] ss:$2 sm:$0xff]
      %s1695 = scalar_lea.vmem [#allocation2], 193
      %v1696 = vld [vmem:[%s1695] ss:$2 sm:$0xff]
      %s1697 = scalar_lea.vmem [#allocation2], 209
      %v1698 = vld [vmem:[%s1697] ss:$2 sm:$0xff]
      %s1699 = scalar_lea.vmem [#allocation2], 225
      %v1700 = vld [vmem:[%s1699] ss:$2 sm:$0xff]
      %s1701 = scalar_lea.vmem [#allocation2], 241
      %v1702 = vld [vmem:[%s1701] ss:$2 sm:$0xff]
      %s1703 = scalar_lea.vmem [#allocation2], 257
      %v1704 = vld [vmem:[%s1703] ss:$2 sm:$0xff]
      %s1705 = scalar_lea.vmem [#allocation2], 273
      %v1706 = vld [vmem:[%s1705] ss:$2 sm:$0xff]
      %s1707 = scalar_lea.vmem [#allocation2], 289
      %v1708 = vld [vmem:[%s1707] ss:$2 sm:$0xff]
      %s1709 = scalar_lea.vmem [#allocation2], 305
      %v1710 = vld [vmem:[%s1709] ss:$2 sm:$0xff]
      %s1711 = scalar_lea.vmem [#allocation2], 321
      %v1712 = vld [vmem:[%s1711] ss:$2 sm:$0xff]
      %s1713 = scalar_lea.vmem [#allocation2], 337
      %v1714 = vld [vmem:[%s1713] ss:$2 sm:$0xff]
      %s1715 = scalar_lea.vmem [#allocation2], 353
      %v1716 = vld [vmem:[%s1715] ss:$2 sm:$0xff]
      %s1717 = scalar_lea.vmem [#allocation2], 369
      %v1718 = vld [vmem:[%s1717] ss:$2 sm:$0xff]
      %s1719 = scalar_lea.vmem [#allocation2], 385
      %v1720 = vld [vmem:[%s1719] ss:$2 sm:$0xff]
      %s1721 = scalar_lea.vmem [#allocation2], 401
      %v1722 = vld [vmem:[%s1721] ss:$2 sm:$0xff]
      %s1723 = scalar_lea.vmem [#allocation2], 417
      %v1724 = vld [vmem:[%s1723] ss:$2 sm:$0xff]
      %s1725 = scalar_lea.vmem [#allocation2], 433
      %v1726 = vld [vmem:[%s1725] ss:$2 sm:$0xff]
      %s1727 = scalar_lea.vmem [#allocation2], 449
      %v1728 = vld [vmem:[%s1727] ss:$2 sm:$0xff]
      %s1729 = scalar_lea.vmem [#allocation2], 465
      %v1730 = vld [vmem:[%s1729] ss:$2 sm:$0xff]
      %s1731 = scalar_lea.vmem [#allocation2], 481
      %v1732 = vld [vmem:[%s1731] ss:$2 sm:$0xff]
      %s1733 = scalar_lea.vmem [#allocation2], 497
      %v1734 = vld [vmem:[%s1733] ss:$2 sm:$0xff]
      %s1735 = scalar_lea.vmem [#allocation2], 513
      %v1736 = vld [vmem:[%s1735] ss:$2 sm:$0xff]
      %s1737 = scalar_lea.vmem [#allocation2], 529
      %v1738 = vld [vmem:[%s1737] ss:$2 sm:$0xff]
      %s1739 = scalar_lea.vmem [#allocation2], 545
      %v1740 = vld [vmem:[%s1739] ss:$2 sm:$0xff]
      %s1741 = scalar_lea.vmem [#allocation2], 561
      %v1742 = vld [vmem:[%s1741] ss:$2 sm:$0xff]
      %s1743 = scalar_lea.vmem [#allocation2], 577
      %v1744 = vld [vmem:[%s1743] ss:$2 sm:$0xff]
      %s1745 = scalar_lea.vmem [#allocation2], 593
      %v1746 = vld [vmem:[%s1745] ss:$2 sm:$0xff]
      %s1747 = scalar_lea.vmem [#allocation2], 609
      %v1748 = vld [vmem:[%s1747] ss:$2 sm:$0xff]
      %s1749 = scalar_lea.vmem [#allocation2], 625
      %v1750 = vld [vmem:[%s1749] ss:$2 sm:$0xff]
      %s1751 = scalar_lea.vmem [#allocation2], 641
      %v1752 = vld [vmem:[%s1751] ss:$2 sm:$0xff]
      %s1753 = scalar_lea.vmem [#allocation2], 657
      %v1754 = vld [vmem:[%s1753] ss:$2 sm:$0xff]
      %s1755 = scalar_lea.vmem [#allocation2], 673
      %v1756 = vld [vmem:[%s1755] ss:$2 sm:$0xff]
      %s1757 = scalar_lea.vmem [#allocation2], 689
      %v1758 = vld [vmem:[%s1757] ss:$2 sm:$0xff]
      %s1759 = scalar_lea.vmem [#allocation2], 705
      %v1760 = vld [vmem:[%s1759] ss:$2 sm:$0xff]
      %s1761 = scalar_lea.vmem [#allocation2], 721
      %v1762 = vld [vmem:[%s1761] ss:$2 sm:$0xff]
      %s1763 = scalar_lea.vmem [#allocation2], 737
      %v1764 = vld [vmem:[%s1763] ss:$2 sm:$0xff]
      %s1765 = scalar_lea.vmem [#allocation2], 753
      %v1766 = vld [vmem:[%s1765] ss:$2 sm:$0xff]
      %s1767 = scalar_lea.vmem [#allocation2], 769
      %v1768 = vld [vmem:[%s1767] ss:$2 sm:$0xff]
      %s1769 = scalar_lea.vmem [#allocation2], 785
      %v1770 = vld [vmem:[%s1769] ss:$2 sm:$0xff]
      %s1771 = scalar_lea.vmem [#allocation2], 801
      %v1772 = vld [vmem:[%s1771] ss:$2 sm:$0xff]
      %s1773 = scalar_lea.vmem [#allocation2], 817
      %v1774 = vld [vmem:[%s1773] ss:$2 sm:$0xff]
      %s1775 = scalar_lea.vmem [#allocation2], 833
      %v1776 = vld [vmem:[%s1775] ss:$2 sm:$0xff]
      %s1777 = scalar_lea.vmem [#allocation2], 849
      %v1778 = vld [vmem:[%s1777] ss:$2 sm:$0xff]
      %s1779 = scalar_lea.vmem [#allocation2], 865
      %v1780 = vld [vmem:[%s1779] ss:$2 sm:$0xff]
      %s1781 = scalar_lea.vmem [#allocation2], 881
      %v1782 = vld [vmem:[%s1781] ss:$2 sm:$0xff]
      %s1783 = scalar_lea.vmem [#allocation2], 897
      %v1784 = vld [vmem:[%s1783] ss:$2 sm:$0xff]
      %s1785 = scalar_lea.vmem [#allocation2], 913
      %v1786 = vld [vmem:[%s1785] ss:$2 sm:$0xff]
      %s1787 = scalar_lea.vmem [#allocation2], 929
      %v1788 = vld [vmem:[%s1787] ss:$2 sm:$0xff]
      %s1789 = scalar_lea.vmem [#allocation2], 945
      %v1790 = vld [vmem:[%s1789] ss:$2 sm:$0xff]
      %s1791 = scalar_lea.vmem [#allocation2], 961
      %v1792 = vld [vmem:[%s1791] ss:$2 sm:$0xff]
      %s1793 = scalar_lea.vmem [#allocation2], 977
      %v1794 = vld [vmem:[%s1793] ss:$2 sm:$0xff]
      %s1795 = scalar_lea.vmem [#allocation2], 993
      %v1796 = vld [vmem:[%s1795] ss:$2 sm:$0xff]
      %s1797 = scalar_lea.vmem [#allocation2], 1009
      %v1798 = vld [vmem:[%s1797] ss:$2 sm:$0xff]
      %v1799 = vmax.f32 %v1544, %v1672
      %v1800 = vmax.f32 %v1546, %v1674
      %v1801 = vmax.f32 %v1548, %v1676
      %v1802 = vmax.f32 %v1550, %v1678
      %v1803 = vmax.f32 %v1552, %v1680
      %v1804 = vmax.f32 %v1554, %v1682
      %v1805 = vmax.f32 %v1556, %v1684
      %v1806 = vmax.f32 %v1558, %v1686
      %v1807 = vmax.f32 %v1560, %v1688
      %v1808 = vmax.f32 %v1562, %v1690
      %v1809 = vmax.f32 %v1564, %v1692
      %v1810 = vmax.f32 %v1566, %v1694
      %v1811 = vmax.f32 %v1568, %v1696
      %v1812 = vmax.f32 %v1570, %v1698
      %v1813 = vmax.f32 %v1572, %v1700
      %v1814 = vmax.f32 %v1574, %v1702
      %v1815 = vmax.f32 %v1576, %v1704
      %v1816 = vmax.f32 %v1578, %v1706
      %v1817 = vmax.f32 %v1580, %v1708
      %v1818 = vmax.f32 %v1582, %v1710
      %v1819 = vmax.f32 %v1584, %v1712
      %v1820 = vmax.f32 %v1586, %v1714
      %v1821 = vmax.f32 %v1588, %v1716
      %v1822 = vmax.f32 %v1590, %v1718
      %v1823 = vmax.f32 %v1592, %v1720
      %v1824 = vmax.f32 %v1594, %v1722
      %v1825 = vmax.f32 %v1596, %v1724
      %v1826 = vmax.f32 %v1598, %v1726
      %v1827 = vmax.f32 %v1600, %v1728
      %v1828 = vmax.f32 %v1602, %v1730
      %v1829 = vmax.f32 %v1604, %v1732
      %v1830 = vmax.f32 %v1606, %v1734
      %v1831 = vmax.f32 %v1608, %v1736
      %v1832 = vmax.f32 %v1610, %v1738
      %v1833 = vmax.f32 %v1612, %v1740
      %v1834 = vmax.f32 %v1614, %v1742
      %v1835 = vmax.f32 %v1616, %v1744
      %v1836 = vmax.f32 %v1618, %v1746
      %v1837 = vmax.f32 %v1620, %v1748
      %v1838 = vmax.f32 %v1622, %v1750
      %v1839 = vmax.f32 %v1624, %v1752
      %v1840 = vmax.f32 %v1626, %v1754
      %v1841 = vmax.f32 %v1628, %v1756
      %v1842 = vmax.f32 %v1630, %v1758
      %v1843 = vmax.f32 %v1632, %v1760
      %v1844 = vmax.f32 %v1634, %v1762
      %v1845 = vmax.f32 %v1636, %v1764
      %v1846 = vmax.f32 %v1638, %v1766
      %v1847 = vmax.f32 %v1640, %v1768
      %v1848 = vmax.f32 %v1642, %v1770
      %v1849 = vmax.f32 %v1644, %v1772
      %v1850 = vmax.f32 %v1646, %v1774
      %v1851 = vmax.f32 %v1648, %v1776
      %v1852 = vmax.f32 %v1650, %v1778
      %v1853 = vmax.f32 %v1652, %v1780
      %v1854 = vmax.f32 %v1654, %v1782
      %v1855 = vmax.f32 %v1656, %v1784
      %v1856 = vmax.f32 %v1658, %v1786
      %v1857 = vmax.f32 %v1660, %v1788
      %v1858 = vmax.f32 %v1662, %v1790
      %v1859 = vmax.f32 %v1664, %v1792
      %v1860 = vmax.f32 %v1666, %v1794
      %v1861 = vmax.f32 %v1668, %v1796
      %v1862 = vmax.f32 %v1670, %v1798
      %1863 = vst [vmem:[#allocation3] sm:$0xff] %v1799
      %1864 = vst [vmem:[#allocation3 + $0x8] sm:$0xff] %v1800
      %1865 = vst [vmem:[#allocation3 + $0x10] sm:$0xff] %v1801
      %1866 = vst [vmem:[#allocation3 + $0x18] sm:$0xff] %v1802
      %1867 = vst [vmem:[#allocation3 + $0x20] sm:$0xff] %v1803
      %1868 = vst [vmem:[#allocation3 + $0x28] sm:$0xff] %v1804
      %1869 = vst [vmem:[#allocation3 + $0x30] sm:$0xff] %v1805
      %1870 = vst [vmem:[#allocation3 + $0x38] sm:$0xff] %v1806
      %1871 = vst [vmem:[#allocation3 + $0x40] sm:$0xff] %v1807
      %1872 = vst [vmem:[#allocation3 + $0x48] sm:$0xff] %v1808
      %1873 = vst [vmem:[#allocation3 + $0x50] sm:$0xff] %v1809
      %1874 = vst [vmem:[#allocation3 + $0x58] sm:$0xff] %v1810
      %1875 = vst [vmem:[#allocation3 + $0x60] sm:$0xff] %v1811
      %1876 = vst [vmem:[#allocation3 + $0x68] sm:$0xff] %v1812
      %1877 = vst [vmem:[#allocation3 + $0x70] sm:$0xff] %v1813
      %1878 = vst [vmem:[#allocation3 + $0x78] sm:$0xff] %v1814
      %1879 = vst [vmem:[#allocation3 + $0x80] sm:$0xff] %v1815
      %1880 = vst [vmem:[#allocation3 + $0x88] sm:$0xff] %v1816
      %1881 = vst [vmem:[#allocation3 + $0x90] sm:$0xff] %v1817
      %1882 = vst [vmem:[#allocation3 + $0x98] sm:$0xff] %v1818
      %1883 = vst [vmem:[#allocation3 + $0xa0] sm:$0xff] %v1819
      %1884 = vst [vmem:[#allocation3 + $0xa8] sm:$0xff] %v1820
      %1885 = vst [vmem:[#allocation3 + $0xb0] sm:$0xff] %v1821
      %1886 = vst [vmem:[#allocation3 + $0xb8] sm:$0xff] %v1822
      %1887 = vst [vmem:[#allocation3 + $0xc0] sm:$0xff] %v1823
      %1888 = vst [vmem:[#allocation3 + $0xc8] sm:$0xff] %v1824
      %1889 = vst [vmem:[#allocation3 + $0xd0] sm:$0xff] %v1825
      %1890 = vst [vmem:[#allocation3 + $0xd8] sm:$0xff] %v1826
      %1891 = vst [vmem:[#allocation3 + $0xe0] sm:$0xff] %v1827
      %1892 = vst [vmem:[#allocation3 + $0xe8] sm:$0xff] %v1828
      %1893 = vst [vmem:[#allocation3 + $0xf0] sm:$0xff] %v1829
      %1894 = vst [vmem:[#allocation3 + $0xf8] sm:$0xff] %v1830
      %1895 = vst [vmem:[#allocation3 + $0x100] sm:$0xff] %v1831
      %1896 = vst [vmem:[#allocation3 + $0x108] sm:$0xff] %v1832
      %1897 = vst [vmem:[#allocation3 + $0x110] sm:$0xff] %v1833
      %1898 = vst [vmem:[#allocation3 + $0x118] sm:$0xff] %v1834
      %1899 = vst [vmem:[#allocation3 + $0x120] sm:$0xff] %v1835
      %1900 = vst [vmem:[#allocation3 + $0x128] sm:$0xff] %v1836
      %1901 = vst [vmem:[#allocation3 + $0x130] sm:$0xff] %v1837
      %1902 = vst [vmem:[#allocation3 + $0x138] sm:$0xff] %v1838
      %1903 = vst [vmem:[#allocation3 + $0x140] sm:$0xff] %v1839
      %1904 = vst [vmem:[#allocation3 + $0x148] sm:$0xff] %v1840
      %1905 = vst [vmem:[#allocation3 + $0x150] sm:$0xff] %v1841
      %1906 = vst [vmem:[#allocation3 + $0x158] sm:$0xff] %v1842
      %1907 = vst [vmem:[#allocation3 + $0x160] sm:$0xff] %v1843
      %1908 = vst [vmem:[#allocation3 + $0x168] sm:$0xff] %v1844
      %1909 = vst [vmem:[#allocation3 + $0x170] sm:$0xff] %v1845
      %1910 = vst [vmem:[#allocation3 + $0x178] sm:$0xff] %v1846
      %1911 = vst [vmem:[#allocation3 + $0x180] sm:$0xff] %v1847
      %1912 = vst [vmem:[#allocation3 + $0x188] sm:$0xff] %v1848
      %1913 = vst [vmem:[#allocation3 + $0x190] sm:$0xff] %v1849
      %1914 = vst [vmem:[#allocation3 + $0x198] sm:$0xff] %v1850
      %1915 = vst [vmem:[#allocation3 + $0x1a0] sm:$0xff] %v1851
      %1916 = vst [vmem:[#allocation3 + $0x1a8] sm:$0xff] %v1852
      %1917 = vst [vmem:[#allocation3 + $0x1b0] sm:$0xff] %v1853
      %1918 = vst [vmem:[#allocation3 + $0x1b8] sm:$0xff] %v1854
      %1919 = vst [vmem:[#allocation3 + $0x1c0] sm:$0xff] %v1855
      %1920 = vst [vmem:[#allocation3 + $0x1c8] sm:$0xff] %v1856
      %1921 = vst [vmem:[#allocation3 + $0x1d0] sm:$0xff] %v1857
      %1922 = vst [vmem:[#allocation3 + $0x1d8] sm:$0xff] %v1858
      %1923 = vst [vmem:[#allocation3 + $0x1e0] sm:$0xff] %v1859
      %1924 = vst [vmem:[#allocation3 + $0x1e8] sm:$0xff] %v1860
      %1925 = vst [vmem:[#allocation3 + $0x1f0] sm:$0xff] %v1861
      %1926 = vst [vmem:[#allocation3 + $0x1f8] sm:$0xff] %v1862
      %v1927 = vld [vmem:[#allocation3] sm:$0xff]
      %v1928 = vld [vmem:[#allocation3 + $0x8] sm:$0xff]
      %v1929 = vld [vmem:[#allocation3 + $0x20] sm:$0xff]
      %v1930 = vld [vmem:[#allocation3 + $0x28] sm:$0xff]
      %v1931 = vld [vmem:[#allocation3 + $0x40] sm:$0xff]
      %v1932 = vld [vmem:[#allocation3 + $0x48] sm:$0xff]
      %v1933 = vld [vmem:[#allocation3 + $0x60] sm:$0xff]
      %v1934 = vld [vmem:[#allocation3 + $0x68] sm:$0xff]
      %v1935 = vld [vmem:[#allocation3 + $0x80] sm:$0xff]
      %v1936 = vld [vmem:[#allocation3 + $0x88] sm:$0xff]
      %v1937 = vld [vmem:[#allocation3 + $0xa0] sm:$0xff]
      %v1938 = vld [vmem:[#allocation3 + $0xa8] sm:$0xff]
      %v1939 = vld [vmem:[#allocation3 + $0xc0] sm:$0xff]
      %v1940 = vld [vmem:[#allocation3 + $0xc8] sm:$0xff]
      %v1941 = vld [vmem:[#allocation3 + $0xe0] sm:$0xff]
      %v1942 = vld [vmem:[#allocation3 + $0xe8] sm:$0xff]
      %v1943 = vld [vmem:[#allocation3 + $0x100] sm:$0xff]
      %v1944 = vld [vmem:[#allocation3 + $0x108] sm:$0xff]
      %v1945 = vld [vmem:[#allocation3 + $0x120] sm:$0xff]
      %v1946 = vld [vmem:[#allocation3 + $0x128] sm:$0xff]
      %v1947 = vld [vmem:[#allocation3 + $0x140] sm:$0xff]
      %v1948 = vld [vmem:[#allocation3 + $0x148] sm:$0xff]
      %v1949 = vld [vmem:[#allocation3 + $0x160] sm:$0xff]
      %v1950 = vld [vmem:[#allocation3 + $0x168] sm:$0xff]
      %v1951 = vld [vmem:[#allocation3 + $0x180] sm:$0xff]
      %v1952 = vld [vmem:[#allocation3 + $0x188] sm:$0xff]
      %v1953 = vld [vmem:[#allocation3 + $0x1a0] sm:$0xff]
      %v1954 = vld [vmem:[#allocation3 + $0x1a8] sm:$0xff]
      %v1955 = vld [vmem:[#allocation3 + $0x1c0] sm:$0xff]
      %v1956 = vld [vmem:[#allocation3 + $0x1c8] sm:$0xff]
      %v1957 = vld [vmem:[#allocation3 + $0x1e0] sm:$0xff]
      %v1958 = vld [vmem:[#allocation3 + $0x1e8] sm:$0xff]
      %s1959 = scalar_lea.vmem [#allocation3], 16
      %v1960 = vld [vmem:[%s1959] sm:$0xff]
      %v1961 = vld [vmem:[%s1959 + $0x8] sm:$0xff]
      %v1962 = vld [vmem:[%s1959 + $0x20] sm:$0xff]
      %v1963 = vld [vmem:[%s1959 + $0x28] sm:$0xff]
      %v1964 = vld [vmem:[%s1959 + $0x40] sm:$0xff]
      %v1965 = vld [vmem:[%s1959 + $0x48] sm:$0xff]
      %v1966 = vld [vmem:[%s1959 + $0x60] sm:$0xff]
      %v1967 = vld [vmem:[%s1959 + $0x68] sm:$0xff]
      %v1968 = vld [vmem:[%s1959 + $0x80] sm:$0xff]
      %v1969 = vld [vmem:[%s1959 + $0x88] sm:$0xff]
      %v1970 = vld [vmem:[%s1959 + $0xa0] sm:$0xff]
      %v1971 = vld [vmem:[%s1959 + $0xa8] sm:$0xff]
      %v1972 = vld [vmem:[%s1959 + $0xc0] sm:$0xff]
      %v1973 = vld [vmem:[%s1959 + $0xc8] sm:$0xff]
      %v1974 = vld [vmem:[%s1959 + $0xe0] sm:$0xff]
      %v1975 = vld [vmem:[%s1959 + $0xe8] sm:$0xff]
      %v1976 = vld [vmem:[%s1959 + $0x100] sm:$0xff]
      %v1977 = vld [vmem:[%s1959 + $0x108] sm:$0xff]
      %v1978 = vld [vmem:[%s1959 + $0x120] sm:$0xff]
      %v1979 = vld [vmem:[%s1959 + $0x128] sm:$0xff]
      %v1980 = vld [vmem:[%s1959 + $0x140] sm:$0xff]
      %v1981 = vld [vmem:[%s1959 + $0x148] sm:$0xff]
      %v1982 = vld [vmem:[%s1959 + $0x160] sm:$0xff]
      %v1983 = vld [vmem:[%s1959 + $0x168] sm:$0xff]
      %v1984 = vld [vmem:[%s1959 + $0x180] sm:$0xff]
      %v1985 = vld [vmem:[%s1959 + $0x188] sm:$0xff]
      %v1986 = vld [vmem:[%s1959 + $0x1a0] sm:$0xff]
      %v1987 = vld [vmem:[%s1959 + $0x1a8] sm:$0xff]
      %v1988 = vld [vmem:[%s1959 + $0x1c0] sm:$0xff]
      %v1989 = vld [vmem:[%s1959 + $0x1c8] sm:$0xff]
      %v1990 = vld [vmem:[%s1959 + $0x1e0] sm:$0xff]
      %v1991 = vld [vmem:[%s1959 + $0x1e8] sm:$0xff]
      %v1992 = vmax.f32 %v1927, %v1960
      %v1993 = vmax.f32 %v1928, %v1961
      %v1994 = vmax.f32 %v1929, %v1962
      %v1995 = vmax.f32 %v1930, %v1963
      %v1996 = vmax.f32 %v1931, %v1964
      %v1997 = vmax.f32 %v1932, %v1965
      %v1998 = vmax.f32 %v1933, %v1966
      %v1999 = vmax.f32 %v1934, %v1967
      %v2000 = vmax.f32 %v1935, %v1968
      %v2001 = vmax.f32 %v1936, %v1969
      %v2002 = vmax.f32 %v1937, %v1970
      %v2003 = vmax.f32 %v1938, %v1971
      %v2004 = vmax.f32 %v1939, %v1972
      %v2005 = vmax.f32 %v1940, %v1973
      %v2006 = vmax.f32 %v1941, %v1974
      %v2007 = vmax.f32 %v1942, %v1975
      %v2008 = vmax.f32 %v1943, %v1976
      %v2009 = vmax.f32 %v1944, %v1977
      %v2010 = vmax.f32 %v1945, %v1978
      %v2011 = vmax.f32 %v1946, %v1979
      %v2012 = vmax.f32 %v1947, %v1980
      %v2013 = vmax.f32 %v1948, %v1981
      %v2014 = vmax.f32 %v1949, %v1982
      %v2015 = vmax.f32 %v1950, %v1983
      %v2016 = vmax.f32 %v1951, %v1984
      %v2017 = vmax.f32 %v1952, %v1985
      %v2018 = vmax.f32 %v1953, %v1986
      %v2019 = vmax.f32 %v1954, %v1987
      %v2020 = vmax.f32 %v1955, %v1988
      %v2021 = vmax.f32 %v1956, %v1989
      %v2022 = vmax.f32 %v1957, %v1990
      %v2023 = vmax.f32 %v1958, %v1991
      %v2024 = vpack.c.bf16 %v1993, %v1992
      %v2025 = vpack.c.bf16 %v1995, %v1994
      %v2026 = vpack.c.bf16 %v1997, %v1996
      %v2027 = vpack.c.bf16 %v1999, %v1998
      %v2028 = vpack.c.bf16 %v2001, %v2000
      %v2029 = vpack.c.bf16 %v2003, %v2002
      %v2030 = vpack.c.bf16 %v2005, %v2004
      %v2031 = vpack.c.bf16 %v2007, %v2006
      %v2032 = vpack.c.bf16 %v2009, %v2008
      %v2033 = vpack.c.bf16 %v2011, %v2010
      %v2034 = vpack.c.bf16 %v2013, %v2012
      %v2035 = vpack.c.bf16 %v2015, %v2014
      %v2036 = vpack.c.bf16 %v2017, %v2016
      %v2037 = vpack.c.bf16 %v2019, %v2018
      %v2038 = vpack.c.bf16 %v2021, %v2020
      %v2039 = vpack.c.bf16 %v2023, %v2022
      %v2056 = vunpack.c.l.b16 %v2024
      %v2057 = vunpack.c.h.b16 %v2024
      %v2058 = vunpack.c.l.b16 %v2025
      %v2059 = vunpack.c.h.b16 %v2025
      %v2060 = vunpack.c.l.b16 %v2026
      %v2061 = vunpack.c.h.b16 %v2026
      %v2062 = vunpack.c.l.b16 %v2027
      %v2063 = vunpack.c.h.b16 %v2027
      %v2064 = vunpack.c.l.b16 %v2028
      %v2065 = vunpack.c.h.b16 %v2028
      %v2066 = vunpack.c.l.b16 %v2029
      %v2067 = vunpack.c.h.b16 %v2029
      %v2068 = vunpack.c.l.b16 %v2030
      %v2069 = vunpack.c.h.b16 %v2030
      %v2070 = vunpack.c.l.b16 %v2031
      %v2071 = vunpack.c.h.b16 %v2031
      %v2072 = vunpack.c.l.b16 %v2032
      %v2073 = vunpack.c.h.b16 %v2032
      %v2074 = vunpack.c.l.b16 %v2033
      %v2075 = vunpack.c.h.b16 %v2033
      %v2076 = vunpack.c.l.b16 %v2034
      %v2077 = vunpack.c.h.b16 %v2034
      %v2078 = vunpack.c.l.b16 %v2035
      %v2079 = vunpack.c.h.b16 %v2035
      %v2080 = vunpack.c.l.b16 %v2036
      %v2081 = vunpack.c.h.b16 %v2036
      %v2082 = vunpack.c.l.b16 %v2037
      %v2083 = vunpack.c.h.b16 %v2037
      %v2084 = vunpack.c.l.b16 %v2038
      %v2085 = vunpack.c.h.b16 %v2038
      %v2086 = vunpack.c.l.b16 %v2039
      %v2087 = vunpack.c.h.b16 %v2039
      %v2088 = vpack.c.b16 %v2056, %v2056
      %v2089 = vpack.c.b16 %v2057, %v2057
      %v2090 = vpack.c.b16 %v2058, %v2058
      %v2091 = vpack.c.b16 %v2059, %v2059
      %v2092 = vpack.c.b16 %v2060, %v2060
      %v2093 = vpack.c.b16 %v2061, %v2061
      %v2094 = vpack.c.b16 %v2062, %v2062
      %v2095 = vpack.c.b16 %v2063, %v2063
      %v2096 = vpack.c.b16 %v2064, %v2064
      %v2097 = vpack.c.b16 %v2065, %v2065
      %v2098 = vpack.c.b16 %v2066, %v2066
      %v2099 = vpack.c.b16 %v2067, %v2067
      %v2100 = vpack.c.b16 %v2068, %v2068
      %v2101 = vpack.c.b16 %v2069, %v2069
      %v2102 = vpack.c.b16 %v2070, %v2070
      %v2103 = vpack.c.b16 %v2071, %v2071
      %v2104 = vpack.c.b16 %v2072, %v2072
      %v2105 = vpack.c.b16 %v2073, %v2073
      %v2106 = vpack.c.b16 %v2074, %v2074
      %v2107 = vpack.c.b16 %v2075, %v2075
      %v2108 = vpack.c.b16 %v2076, %v2076
      %v2109 = vpack.c.b16 %v2077, %v2077
      %v2110 = vpack.c.b16 %v2078, %v2078
      %v2111 = vpack.c.b16 %v2079, %v2079
      %v2112 = vpack.c.b16 %v2080, %v2080
      %v2113 = vpack.c.b16 %v2081, %v2081
      %v2114 = vpack.c.b16 %v2082, %v2082
      %v2115 = vpack.c.b16 %v2083, %v2083
      %v2116 = vpack.c.b16 %v2084, %v2084
      %v2117 = vpack.c.b16 %v2085, %v2085
      %v2118 = vpack.c.b16 %v2086, %v2086
      %v2119 = vpack.c.b16 %v2087, %v2087
      %2152 = vst [vmem:[%s174] sm:$0xf] %v2088
      %2153 = vst [vmem:[%s174 + $0x4] sm:$0xf] %v2089
      %2154 = vst [vmem:[%s174 + $0x8] sm:$0xf] %v2090
      %2155 = vst [vmem:[%s174 + $0xc] sm:$0xf] %v2091
      %2156 = vst [vmem:[%s174 + $0x10] sm:$0xf] %v2092
      %2157 = vst [vmem:[%s174 + $0x14] sm:$0xf] %v2093
      %2158 = vst [vmem:[%s174 + $0x18] sm:$0xf] %v2094
      %2159 = vst [vmem:[%s174 + $0x1c] sm:$0xf] %v2095
      %2160 = vst [vmem:[%s174 + $0x20] sm:$0xf] %v2096
      %2161 = vst [vmem:[%s174 + $0x24] sm:$0xf] %v2097
      %2162 = vst [vmem:[%s174 + $0x28] sm:$0xf] %v2098
      %2163 = vst [vmem:[%s174 + $0x2c] sm:$0xf] %v2099
      %2164 = vst [vmem:[%s174 + $0x30] sm:$0xf] %v2100
      %2165 = vst [vmem:[%s174 + $0x34] sm:$0xf] %v2101
      %2166 = vst [vmem:[%s174 + $0x38] sm:$0xf] %v2102
      %2167 = vst [vmem:[%s174 + $0x3c] sm:$0xf] %v2103
      %2168 = vst [vmem:[%s174 + $0x40] sm:$0xf] %v2104
      %2169 = vst [vmem:[%s174 + $0x44] sm:$0xf] %v2105
      %2170 = vst [vmem:[%s174 + $0x48] sm:$0xf] %v2106
      %2171 = vst [vmem:[%s174 + $0x4c] sm:$0xf] %v2107
      %2172 = vst [vmem:[%s174 + $0x50] sm:$0xf] %v2108
      %2173 = vst [vmem:[%s174 + $0x54] sm:$0xf] %v2109
      %2174 = vst [vmem:[%s174 + $0x58] sm:$0xf] %v2110
      %2175 = vst [vmem:[%s174 + $0x5c] sm:$0xf] %v2111
      %2176 = vst [vmem:[%s174 + $0x60] sm:$0xf] %v2112
      %2177 = vst [vmem:[%s174 + $0x64] sm:$0xf] %v2113
      %2178 = vst [vmem:[%s174 + $0x68] sm:$0xf] %v2114
      %2179 = vst [vmem:[%s174 + $0x6c] sm:$0xf] %v2115
      %2180 = vst [vmem:[%s174 + $0x70] sm:$0xf] %v2116
      %2181 = vst [vmem:[%s174 + $0x74] sm:$0xf] %v2117
      %2182 = vst [vmem:[%s174 + $0x78] sm:$0xf] %v2118
      %2183 = vst [vmem:[%s174 + $0x7c] sm:$0xf] %v2119
      %s2184 = smul.u32 16, %s14
      %p2185 = scmp.lt.s32.totalorder %s2184, 31
      %s2186 = scalar_select %p2185, %s2184, 31
      %s2187 = smul.addr %s2186, 2
      %s2188 = smul.addr %s2187, 4
      %s2189 = scalar_lea.vmem %s3, %s2188
      // Predicated region
      $region33: #{howjul_forward.4} parent=31 // pred_check
        %p2190 = pneg %p100
      $region34: #{howjul_forward.4} parent=31 // pred_check_branch
        %2192 = sbr.rel (%p2190) target = $region36
      $region35: #{howjul_forward.4} parent=31 // pred_region
        %s2193 = smul.u32 16, %s14
      $region36: #{howjul_forward.4} parent=31 // pred_fallthru
        _
    $region32: #{howjul_forward.4} parent=5 // pred_fallthru
      _
    %p2194 = scmp.le.s32.totalorder 2, %s9
    // Predicated region
    $region37: #{howjul_forward.4} parent=5 // pred_check
      %p2195 = pneg %p2194
    $region38: #{howjul_forward.4} parent=5 // pred_check_branch
      %2197 = sbr.rel (%p2195) target = $region40
    $region39: #{howjul_forward.4} parent=5 // pred_region
      %s2198 = ssub.s32 %s9, 2
      // Predicated region
      $region41: #{howjul_forward.4} parent=39 // pred_check
        %p2199 = pneg %p106
      $region42: #{howjul_forward.4} parent=39 // pred_check_branch
        %2201 = sbr.rel (%p2199) target = $region44
      $region43: #{howjul_forward.4} parent=39 // pred_region
        %s2202 = smul.u32 16, %s15
        %p2203 = scmp.lt.s32.totalorder %s2202, 31
        %s2204 = scalar_select %p2203, %s2202, 31
        %s2205 = smul.addr %s2204, 2
        %s2206 = smul.addr %s2205, 4
        %s2207 = scalar_lea.vmem %s3, %s2206
      $region44: #{howjul_forward.4} parent=39 // pred_fallthru
        _
    $region40: #{howjul_forward.4} parent=5 // pred_fallthru
      _
  $region6: #{howjul_forward.4} parent=0 // loop_footer
    %s13 = sadd.s32 1, %s9
  $region7: #{howjul_forward.4} parent=0 // loop_footer_branch
    %8 = sbr.rel target = $region3
  $region8: #{howjul_forward.4} parent=0 // loop_exit
    _

// kernel: howjul_forward.5
$region0: #{howjul_forward.5}
  #allocation0 [shape = 'u32[]', space=smem, size = 0x4, offset = 0x4, fixed_abs, tag = 'smem constant byte address 0x4 - core index']
  #allocation1 [shape = 'u32[144,128]{1,0:T(1,128)}', space=vmem, size = 0x12000, scoped, tag = 'internal scratch']
  #allocation2 [shape = 'f32[16,16,128]{2,1,0:T(8,128)}', space=vmem, size = 0x20000, scoped, tag = 'scratch operand']
  #allocation3 [shape = 'f32[16,8,128]{2,1,0:T(8,128)}', space=vmem, size = 0x10000, scoped, tag = 'scratch operand']
  %s0 = inlined_call_operand.vmem [shape: bf16[512,800], index: 0, kind: input, shape index: {}]
  %s1 = inlined_call_operand.vmem [shape: bf16[800,128], index: 1, kind: input, shape index: {}]
  %s2 = inlined_call_operand.vmem [shape: f32[1,128], index: 2, kind: input, shape index: {}]
  %s3 = inlined_call_operand.vmem [shape: bf16[16,8,128], index: 3, kind: output, shape index: {}]
  %s4 = sld [smem:[#allocation0]]
  $region45: #{howjul_forward.5} parent=0
    _
  %s6 = ssub.s32 1, %s4
  %s7 = scalar_select 0, %s6, %s4
  loop: start=0, step=1, limit=4
  $region2: #{howjul_forward.5} parent=0 // loop_pre_header
    _
  $region3: #{howjul_forward.5} parent=0 // loop_header
    %s9 = sphi 0, %s13
    %p10 = scmp.ge.s32.totalorder %s9, 4
    %s19 = sphi 0, %s21
    %s22 = sphi 0, %s19
    %s23 = sphi 0, %s22
    %s39 = sphi 0, %s23
    %s43 = sphi 0, %s43
    %s45 = sphi 0, %s43
    %s46 = sphi 0, %s45
    %s60 = sphi 0, %s46
    %s64 = sphi 0, %s64
    %s66 = sphi 0, %s64
    %s67 = sphi 0, %s66
    %s81 = sphi 0, %s67
    %s87 = sphi 0, %s89
    %s90 = sphi 0, %s87
    %s91 = sphi 0, %s90
    %s107 = sphi 0, %s91
  $region4: #{howjul_forward.5} parent=0 // loop_header_branch
    %12 = sbr.rel (%p10) target = $region8
  $region5: #{howjul_forward.5} parent=0 // loop_body
    %s14 = ssub.s32 %s9, 1
    %s15 = ssub.s32 %s9, 2
    %s16 = sadd.s32 %s9, 1
    %s17 = ssub.s32 %s9, %s16
    %p18 = scmp.eq.s32.totalorder %s17, 0
    %s20 = sadd.s32 %s19, 1
    %s21 = scalar_select %p18, %s19, %s20
    %p24 = pneg %p18
    %p25 = scmp.eq.s32.totalorder %s9, 1
    %p26 = por %p24, %p25
    %p27 = scmp.ne.s32.totalorder %s19, %s22
    %p28 = scmp.eq.s32.totalorder %s9, 0
    %p29 = por %p27, %p28
    %p30 = scmp.ne.s32.totalorder %s19, %s22
    %p31 = scmp.eq.s32.totalorder %s14, 1
    %p32 = por %p30, %p31
    %p33 = scmp.ne.s32.totalorder %s22, %s23
    %p34 = scmp.eq.s32.totalorder %s14, 0
    %p35 = por %p33, %p34
    %p36 = scmp.ne.s32.totalorder %s22, %s23
    %p37 = scmp.eq.s32.totalorder %s15, 1
    %p38 = por %p36, %p37
    %p40 = scmp.ne.s32.totalorder %s23, %s39
    %p41 = scmp.eq.s32.totalorder %s15, 0
    %p42 = por %p40, %p41
    %s44 = sadd.s32 %s43, 1
    %p47 = scmp.eq.s32.totalorder %s9, 1
    %p48 = scmp.ne.s32.totalorder %s43, %s45
    %p49 = scmp.eq.s32.totalorder %s9, 0
    %p50 = por %p48, %p49
    %p51 = scmp.ne.s32.totalorder %s43, %s45
    %p52 = scmp.eq.s32.totalorder %s14, 1
    %p53 = por %p51, %p52
    %p54 = scmp.ne.s32.totalorder %s45, %s46
    %p55 = scmp.eq.s32.totalorder %s14, 0
    %p56 = por %p54, %p55
    %p57 = scmp.ne.s32.totalorder %s45, %s46
    %p58 = scmp.eq.s32.totalorder %s15, 1
    %p59 = por %p57, %p58
    %p61 = scmp.ne.s32.totalorder %s46, %s60
    %p62 = scmp.eq.s32.totalorder %s15, 0
    %p63 = por %p61, %p62
    %s65 = sadd.s32 %s64, 1
    %p68 = scmp.eq.s32.totalorder %s9, 1
    %p69 = scmp.ne.s32.totalorder %s64, %s66
    %p70 = scmp.eq.s32.totalorder %s9, 0
    %p71 = por %p69, %p70
    %p72 = scmp.ne.s32.totalorder %s64, %s66
    %p73 = scmp.eq.s32.totalorder %s14, 1
    %p74 = por %p72, %p73
    %p75 = scmp.ne.s32.totalorder %s66, %s67
    %p76 = scmp.eq.s32.totalorder %s14, 0
    %p77 = por %p75, %p76
    %p78 = scmp.ne.s32.totalorder %s66, %s67
    %p79 = scmp.eq.s32.totalorder %s15, 1
    %p80 = por %p78, %p79
    %p82 = scmp.ne.s32.totalorder %s67, %s81
    %p83 = scmp.eq.s32.totalorder %s15, 0
    %p84 = por %p82, %p83
    %s85 = ssub.s32 %s9, %s16
    %p86 = scmp.eq.s32.totalorder %s85, 0
    %s88 = sadd.s32 %s87, 1
    %s89 = scalar_select %p86, %s87, %s88
    %p92 = pneg %p86
    %p93 = scmp.eq.s32.totalorder %s9, 1
    %p94 = por %p92, %p93
    %p95 = scmp.ne.s32.totalorder %s87, %s90
    %p96 = scmp.eq.s32.totalorder %s9, 0
    %p97 = por %p95, %p96
    %p98 = scmp.ne.s32.totalorder %s87, %s90
    %p99 = scmp.eq.s32.totalorder %s14, 1
    %p100 = por %p98, %p99
    %p101 = scmp.ne.s32.totalorder %s90, %s91
    %p102 = scmp.eq.s32.totalorder %s14, 0
    %p103 = por %p101, %p102
    %p104 = scmp.ne.s32.totalorder %s90, %s91
    %p105 = scmp.eq.s32.totalorder %s15, 1
    %p106 = por %p104, %p105
    %p108 = scmp.ne.s32.totalorder %s91, %s107
    %p109 = scmp.eq.s32.totalorder %s15, 0
    %p110 = por %p108, %p109
    %p111 = scmp.le.s32.totalorder 1, %s9
    %p112 = scmp.lt.s32.totalorder %s9, 3
    %p113 = pnand %p111, %p112
    %p114 = pneg %p113
    // Predicated region
    $region9: #{howjul_forward.5} parent=5 // pred_check
      _
    $region10: #{howjul_forward.5} parent=5 // pred_check_branch
      %116 = sbr.rel (%p113) target = $region12
    $region11: #{howjul_forward.5} parent=5 // pred_region
      %s117 = ssub.s32 %s9, 1
      // Predicated region
      $region13: #{howjul_forward.5} parent=11 // pred_check
        %p118 = pneg %p56
      $region14: #{howjul_forward.5} parent=11 // pred_check_branch
        %120 = sbr.rel (%p118) target = $region16
      $region15: #{howjul_forward.5} parent=11 // pred_region
        _
      $region16: #{howjul_forward.5} parent=11 // pred_fallthru
        _
      // Predicated region
      $region17: #{howjul_forward.5} parent=11 // pred_check
        %p121 = pneg %p77
      $region18: #{howjul_forward.5} parent=11 // pred_check_branch
        %123 = sbr.rel (%p121) target = $region20
      $region19: #{howjul_forward.5} parent=11 // pred_region
        _
      $region20: #{howjul_forward.5} parent=11 // pred_fallthru
        _
    $region12: #{howjul_forward.5} parent=5 // pred_fallthru
      _
    %p124 = scmp.lt.s32.totalorder %s9, 2
    // Predicated region
    $region21: #{howjul_forward.5} parent=5 // pred_check
      %p125 = pneg %p124
    $region22: #{howjul_forward.5} parent=5 // pred_check_branch
      %127 = sbr.rel (%p125) target = $region24
    $region23: #{howjul_forward.5} parent=5 // pred_region
      // Predicated region
      $region25: #{howjul_forward.5} parent=23 // pred_check
        %p128 = pneg %p29
      $region26: #{howjul_forward.5} parent=23 // pred_check_branch
        %130 = sbr.rel (%p128) target = $region28
      $region27: #{howjul_forward.5} parent=23 // pred_region
        %s131 = smul.u32 32, %s9
        %p132 = scmp.lt.s32.totalorder %s131, 63
        %s133 = scalar_select %p132, %s131, 63
        %s134 = smul.addr %s133, 7
        %s135 = smul.addr %s134, 4
        %s136 = scalar_lea.vmem %s0, %s135
        %s137 = smul.u32 32, %s9
      $region28: #{howjul_forward.5} parent=23 // pred_fallthru
        _
    $region24: #{howjul_forward.5} parent=5 // pred_fallthru
      _
    %p138 = scmp.le.s32.totalorder 1, %s9
    %p139 = scmp.lt.s32.totalorder %s9, 3
    %p140 = pnand %p138, %p139
    %p141 = pneg %p140
    // Predicated region
    $region29: #{howjul_forward.5} parent=5 // pred_check
      _
    $region30: #{howjul_forward.5} parent=5 // pred_check_branch
      %143 = sbr.rel (%p140) target = $region32
    $region31: #{howjul_forward.5} parent=5 // pred_region
      %s144 = ssub.s32 %s9, 1
      %s145 = smul.u32 32, %s14
      %p146 = scmp.lt.s32.totalorder %s145, 63
      %s147 = scalar_select %p146, %s145, 63
      %s148 = smul.addr %s147, 7
      %s149 = smul.addr %s148, 4
      %s150 = scalar_lea.vmem %s0, %s149
      %p151 = pneg %p35
      %p152 = pneg %p32
      %p153 = pneg %p56
      %p154 = pneg %p53
      %p155 = pneg %p77
      %p156 = pneg %p74
      %p157 = pneg %p103
      %p158 = pneg %p100
      %s159 = smul.u32 8, %s14
      %p160 = scmp.lt.s32.totalorder %s159, 15
      %s161 = scalar_select %p160, %s159, 15
      %s162 = smul.addr %s161, 4
      %s163 = scalar_lea.vmem %s3, %s162
      %s164 = smul.u32 32, %s14
      %p165 = scmp.lt.s32.totalorder %s164, 63
      %s166 = scalar_select %p165, %s164, 63
      %s167 = smul.addr %s166, 7
      %s168 = smul.addr %s167, 4
      %s169 = scalar_lea.vmem %s0, %s168
      %s170 = smul.u32 32, %s14
      %s171 = smul.u32 8, %s14
      %p172 = scmp.lt.s32.totalorder %s171, 15
      %s173 = scalar_select %p172, %s171, 15
      %s174 = smul.addr %s173, 4
      %s175 = scalar_lea.vmem %s3, %s174
      %s176 = smul.u32 8, %s14
      %v178 = vld [vmem:[%s169] sm:$0xff]
      %v179 = vld [vmem:[%s169 + $0x8] sm:$0xff]
      %v180 = vld [vmem:[%s169 + $0x10] sm:$0xff]
      %v181 = vld [vmem:[%s169 + $0x18] sm:$0xf]
      %v182 = vld [vmem:[%s169 + $0x1c] sm:$0xff]
      %v183 = vld [vmem:[%s169 + $0x24] sm:$0xff]
      %v184 = vld [vmem:[%s169 + $0x2c] sm:$0xff]
      %v185 = vld [vmem:[%s169 + $0x34] sm:$0xf]
      %v186 = vld [vmem:[%s169 + $0x38] sm:$0xff]
      %v187 = vld [vmem:[%s169 + $0x40] sm:$0xff]
      %v188 = vld [vmem:[%s169 + $0x48] sm:$0xff]
      %v189 = vld [vmem:[%s169 + $0x50] sm:$0xf]
      %v190 = vld [vmem:[%s169 + $0x54] sm:$0xff]
      %v191 = vld [vmem:[%s169 + $0x5c] sm:$0xff]
      %v192 = vld [vmem:[%s169 + $0x64] sm:$0xff]
      %v193 = vld [vmem:[%s169 + $0x6c] sm:$0xf]
      %v194 = vld [vmem:[%s169 + $0x70] sm:$0xff]
      %v195 = vld [vmem:[%s169 + $0x78] sm:$0xff]
      %v196 = vld [vmem:[%s169 + $0x80] sm:$0xff]
      %v197 = vld [vmem:[%s169 + $0x88] sm:$0xf]
      %v198 = vld [vmem:[%s169 + $0x8c] sm:$0xff]
      %v199 = vld [vmem:[%s169 + $0x94] sm:$0xff]
      %v200 = vld [vmem:[%s169 + $0x9c] sm:$0xff]
      %v201 = vld [vmem:[%s169 + $0xa4] sm:$0xf]
      %v202 = vld [vmem:[%s169 + $0xa8] sm:$0xff]
      %v203 = vld [vmem:[%s169 + $0xb0] sm:$0xff]
      %v204 = vld [vmem:[%s169 + $0xb8] sm:$0xff]
      %v205 = vld [vmem:[%s169 + $0xc0] sm:$0xf]
      %v206 = vld [vmem:[%s169 + $0xc4] sm:$0xff]
      %v207 = vld [vmem:[%s169 + $0xcc] sm:$0xff]
      %v208 = vld [vmem:[%s169 + $0xd4] sm:$0xff]
      %v209 = vld [vmem:[%s169 + $0xdc] sm:$0xf]
      %v210 = vld [vmem:[%s169 + $0xe0] sm:$0xff]
      %v211 = vld [vmem:[%s169 + $0xe8] sm:$0xff]
      %v212 = vld [vmem:[%s169 + $0xf0] sm:$0xff]
      %v213 = vld [vmem:[%s169 + $0xf8] sm:$0xf]
      %v214 = vld [vmem:[%s169 + $0xfc] sm:$0xff]
      %v215 = vld [vmem:[%s169 + $0x104] sm:$0xff]
      %v216 = vld [vmem:[%s169 + $0x10c] sm:$0xff]
      %v217 = vld [vmem:[%s169 + $0x114] sm:$0xf]
      %v218 = vld [vmem:[%s169 + $0x118] sm:$0xff]
      %v219 = vld [vmem:[%s169 + $0x120] sm:$0xff]
      %v220 = vld [vmem:[%s169 + $0x128] sm:$0xff]
      %v221 = vld [vmem:[%s169 + $0x130] sm:$0xf]
      %v222 = vld [vmem:[%s169 + $0x134] sm:$0xff]
      %v223 = vld [vmem:[%s169 + $0x13c] sm:$0xff]
      %v224 = vld [vmem:[%s169 + $0x144] sm:$0xff]
      %v225 = vld [vmem:[%s169 + $0x14c] sm:$0xf]
      %v226 = vld [vmem:[%s169 + $0x150] sm:$0xff]
      %v227 = vld [vmem:[%s169 + $0x158] sm:$0xff]
      %v228 = vld [vmem:[%s169 + $0x160] sm:$0xff]
      %v229 = vld [vmem:[%s169 + $0x168] sm:$0xf]
      %v230 = vld [vmem:[%s169 + $0x16c] sm:$0xff]
      %v231 = vld [vmem:[%s169 + $0x174] sm:$0xff]
      %v232 = vld [vmem:[%s169 + $0x17c] sm:$0xff]
      %v233 = vld [vmem:[%s169 + $0x184] sm:$0xf]
      %v234 = vld [vmem:[%s169 + $0x188] sm:$0xff]
      %v235 = vld [vmem:[%s169 + $0x190] sm:$0xff]
      %v236 = vld [vmem:[%s169 + $0x198] sm:$0xff]
      %v237 = vld [vmem:[%s169 + $0x1a0] sm:$0xf]
      %v238 = vld [vmem:[%s169 + $0x1a4] sm:$0xff]
      %v239 = vld [vmem:[%s169 + $0x1ac] sm:$0xff]
      %v240 = vld [vmem:[%s169 + $0x1b4] sm:$0xff]
      %v241 = vld [vmem:[%s169 + $0x1bc] sm:$0xf]
      %v242 = vld [vmem:[%s169 + $0x1c0] sm:$0xff]
      %v243 = vld [vmem:[%s169 + $0x1c8] sm:$0xff]
      %v244 = vld [vmem:[%s169 + $0x1d0] sm:$0xff]
      %v245 = vld [vmem:[%s169 + $0x1d8] sm:$0xf]
      %v246 = vld [vmem:[%s169 + $0x1dc] sm:$0xff]
      %v247 = vld [vmem:[%s169 + $0x1e4] sm:$0xff]
      %v248 = vld [vmem:[%s169 + $0x1ec] sm:$0xff]
      %v249 = vld [vmem:[%s169 + $0x1f4] sm:$0xf]
      %v250 = vld [vmem:[%s169 + $0x1f8] sm:$0xff]
      %v251 = vld [vmem:[%s169 + $0x200] sm:$0xff]
      %v252 = vld [vmem:[%s169 + $0x208] sm:$0xff]
      %v253 = vld [vmem:[%s169 + $0x210] sm:$0xf]
      %v254 = vld [vmem:[%s169 + $0x214] sm:$0xff]
      %v255 = vld [vmem:[%s169 + $0x21c] sm:$0xff]
      %v256 = vld [vmem:[%s169 + $0x224] sm:$0xff]
      %v257 = vld [vmem:[%s169 + $0x22c] sm:$0xf]
      %v258 = vld [vmem:[%s169 + $0x230] sm:$0xff]
      %v259 = vld [vmem:[%s169 + $0x238] sm:$0xff]
      %v260 = vld [vmem:[%s169 + $0x240] sm:$0xff]
      %v261 = vld [vmem:[%s169 + $0x248] sm:$0xf]
      %v262 = vld [vmem:[%s169 + $0x24c] sm:$0xff]
      %v263 = vld [vmem:[%s169 + $0x254] sm:$0xff]
      %v264 = vld [vmem:[%s169 + $0x25c] sm:$0xff]
      %v265 = vld [vmem:[%s169 + $0x264] sm:$0xf]
      %v266 = vld [vmem:[%s169 + $0x268] sm:$0xff]
      %v267 = vld [vmem:[%s169 + $0x270] sm:$0xff]
      %v268 = vld [vmem:[%s169 + $0x278] sm:$0xff]
      %v269 = vld [vmem:[%s169 + $0x280] sm:$0xf]
      %v270 = vld [vmem:[%s169 + $0x284] sm:$0xff]
      %v271 = vld [vmem:[%s169 + $0x28c] sm:$0xff]
      %v272 = vld [vmem:[%s169 + $0x294] sm:$0xff]
      %v273 = vld [vmem:[%s169 + $0x29c] sm:$0xf]
      %v274 = vld [vmem:[%s169 + $0x2a0] sm:$0xff]
      %v275 = vld [vmem:[%s169 + $0x2a8] sm:$0xff]
      %v276 = vld [vmem:[%s169 + $0x2b0] sm:$0xff]
      %v277 = vld [vmem:[%s169 + $0x2b8] sm:$0xf]
      %v278 = vld [vmem:[%s169 + $0x2bc] sm:$0xff]
      %v279 = vld [vmem:[%s169 + $0x2c4] sm:$0xff]
      %v280 = vld [vmem:[%s169 + $0x2cc] sm:$0xff]
      %v281 = vld [vmem:[%s169 + $0x2d4] sm:$0xf]
      %v282 = vld [vmem:[%s169 + $0x2d8] sm:$0xff]
      %v283 = vld [vmem:[%s169 + $0x2e0] sm:$0xff]
      %v284 = vld [vmem:[%s169 + $0x2e8] sm:$0xff]
      %v285 = vld [vmem:[%s169 + $0x2f0] sm:$0xf]
      %v286 = vld [vmem:[%s169 + $0x2f4] sm:$0xff]
      %v287 = vld [vmem:[%s169 + $0x2fc] sm:$0xff]
      %v288 = vld [vmem:[%s169 + $0x304] sm:$0xff]
      %v289 = vld [vmem:[%s169 + $0x30c] sm:$0xf]
      %v290 = vld [vmem:[%s169 + $0x310] sm:$0xff]
      %v291 = vld [vmem:[%s169 + $0x318] sm:$0xff]
      %v292 = vld [vmem:[%s169 + $0x320] sm:$0xff]
      %v293 = vld [vmem:[%s169 + $0x328] sm:$0xf]
      %v294 = vld [vmem:[%s169 + $0x32c] sm:$0xff]
      %v295 = vld [vmem:[%s169 + $0x334] sm:$0xff]
      %v296 = vld [vmem:[%s169 + $0x33c] sm:$0xff]
      %v297 = vld [vmem:[%s169 + $0x344] sm:$0xf]
      %v298 = vld [vmem:[%s169 + $0x348] sm:$0xff]
      %v299 = vld [vmem:[%s169 + $0x350] sm:$0xff]
      %v300 = vld [vmem:[%s169 + $0x358] sm:$0xff]
      %v301 = vld [vmem:[%s169 + $0x360] sm:$0xf]
      %v302 = vld [vmem:[%s169 + $0x364] sm:$0xff]
      %v303 = vld [vmem:[%s169 + $0x36c] sm:$0xff]
      %v304 = vld [vmem:[%s169 + $0x374] sm:$0xff]
      %v305 = vld [vmem:[%s169 + $0x37c] sm:$0xf]
      %v306 = vld [vmem:[%s1] sm:$0xf]
      %v307 = vld [vmem:[%s1 + $0x4] sm:$0xf]
      %v308 = vld [vmem:[%s1 + $0x8] sm:$0xf]
      %v309 = vld [vmem:[%s1 + $0xc] sm:$0xf]
      %v310 = vld [vmem:[%s1 + $0x10] sm:$0xf]
      %v311 = vld [vmem:[%s1 + $0x14] sm:$0xf]
      %v312 = vld [vmem:[%s1 + $0x18] sm:$0xf]
      %v313 = vld [vmem:[%s1 + $0x1c] sm:$0xf]
      %v314 = vld [vmem:[%s1 + $0x20] sm:$0xf]
      %v315 = vld [vmem:[%s1 + $0x24] sm:$0xf]
      %v316 = vld [vmem:[%s1 + $0x28] sm:$0xf]
      %v317 = vld [vmem:[%s1 + $0x2c] sm:$0xf]
      %v318 = vld [vmem:[%s1 + $0x30] sm:$0xf]
      %v319 = vld [vmem:[%s1 + $0x34] sm:$0xf]
      %v320 = vld [vmem:[%s1 + $0x38] sm:$0xf]
      %v321 = vld [vmem:[%s1 + $0x3c] sm:$0xf]
      %v322 = vld [vmem:[%s1 + $0x40] sm:$0xf]
      %v323 = vld [vmem:[%s1 + $0x44] sm:$0xf]
      %v324 = vld [vmem:[%s1 + $0x48] sm:$0xf]
      %v325 = vld [vmem:[%s1 + $0x4c] sm:$0xf]
      %v326 = vld [vmem:[%s1 + $0x50] sm:$0xf]
      %v327 = vld [vmem:[%s1 + $0x54] sm:$0xf]
      %v328 = vld [vmem:[%s1 + $0x58] sm:$0xf]
      %v329 = vld [vmem:[%s1 + $0x5c] sm:$0xf]
      %v330 = vld [vmem:[%s1 + $0x60] sm:$0xf]
      %v331 = vld [vmem:[%s1 + $0x64] sm:$0xf]
      %v332 = vld [vmem:[%s1 + $0x68] sm:$0xf]
      %v333 = vld [vmem:[%s1 + $0x6c] sm:$0xf]
      %v334 = vld [vmem:[%s1 + $0x70] sm:$0xf]
      %v335 = vld [vmem:[%s1 + $0x74] sm:$0xf]
      %v336 = vld [vmem:[%s1 + $0x78] sm:$0xf]
      %v337 = vld [vmem:[%s1 + $0x7c] sm:$0xf]
      %v338 = vld [vmem:[%s1 + $0x80] sm:$0xf]
      %v339 = vld [vmem:[%s1 + $0x84] sm:$0xf]
      %v340 = vld [vmem:[%s1 + $0x88] sm:$0xf]
      %v341 = vld [vmem:[%s1 + $0x8c] sm:$0xf]
      %v342 = vld [vmem:[%s1 + $0x90] sm:$0xf]
      %v343 = vld [vmem:[%s1 + $0x94] sm:$0xf]
      %v344 = vld [vmem:[%s1 + $0x98] sm:$0xf]
      %v345 = vld [vmem:[%s1 + $0x9c] sm:$0xf]
      %v346 = vld [vmem:[%s1 + $0xa0] sm:$0xf]
      %v347 = vld [vmem:[%s1 + $0xa4] sm:$0xf]
      %v348 = vld [vmem:[%s1 + $0xa8] sm:$0xf]
      %v349 = vld [vmem:[%s1 + $0xac] sm:$0xf]
      %v350 = vld [vmem:[%s1 + $0xb0] sm:$0xf]
      %v351 = vld [vmem:[%s1 + $0xb4] sm:$0xf]
      %v352 = vld [vmem:[%s1 + $0xb8] sm:$0xf]
      %v353 = vld [vmem:[%s1 + $0xbc] sm:$0xf]
      %v354 = vld [vmem:[%s1 + $0xc0] sm:$0xf]
      %v355 = vld [vmem:[%s1 + $0xc4] sm:$0xf]
      %v356 = vld [vmem:[%s1 + $0xc8] sm:$0xf]
      %v357 = vld [vmem:[%s1 + $0xcc] sm:$0xf]
      %v358 = vld [vmem:[%s1 + $0xd0] sm:$0xf]
      %v359 = vld [vmem:[%s1 + $0xd4] sm:$0xf]
      %v360 = vld [vmem:[%s1 + $0xd8] sm:$0xf]
      %v361 = vld [vmem:[%s1 + $0xdc] sm:$0xf]
      %v362 = vld [vmem:[%s1 + $0xe0] sm:$0xf]
      %v363 = vld [vmem:[%s1 + $0xe4] sm:$0xf]
      %v364 = vld [vmem:[%s1 + $0xe8] sm:$0xf]
      %v365 = vld [vmem:[%s1 + $0xec] sm:$0xf]
      %v366 = vld [vmem:[%s1 + $0xf0] sm:$0xf]
      %v367 = vld [vmem:[%s1 + $0xf4] sm:$0xf]
      %v368 = vld [vmem:[%s1 + $0xf8] sm:$0xf]
      %v369 = vld [vmem:[%s1 + $0xfc] sm:$0xf]
      %v370 = vld [vmem:[%s1 + $0x100] sm:$0xf]
      %v371 = vld [vmem:[%s1 + $0x104] sm:$0xf]
      %v372 = vld [vmem:[%s1 + $0x108] sm:$0xf]
      %v373 = vld [vmem:[%s1 + $0x10c] sm:$0xf]
      %v374 = vld [vmem:[%s1 + $0x110] sm:$0xf]
      %v375 = vld [vmem:[%s1 + $0x114] sm:$0xf]
      %v376 = vld [vmem:[%s1 + $0x118] sm:$0xf]
      %v377 = vld [vmem:[%s1 + $0x11c] sm:$0xf]
      %v378 = vld [vmem:[%s1 + $0x120] sm:$0xf]
      %v379 = vld [vmem:[%s1 + $0x124] sm:$0xf]
      %v380 = vld [vmem:[%s1 + $0x128] sm:$0xf]
      %v381 = vld [vmem:[%s1 + $0x12c] sm:$0xf]
      %v382 = vld [vmem:[%s1 + $0x130] sm:$0xf]
      %v383 = vld [vmem:[%s1 + $0x134] sm:$0xf]
      %v384 = vld [vmem:[%s1 + $0x138] sm:$0xf]
      %v385 = vld [vmem:[%s1 + $0x13c] sm:$0xf]
      %v386 = vld [vmem:[%s1 + $0x140] sm:$0xf]
      %v387 = vld [vmem:[%s1 + $0x144] sm:$0xf]
      %v388 = vld [vmem:[%s1 + $0x148] sm:$0xf]
      %v389 = vld [vmem:[%s1 + $0x14c] sm:$0xf]
      %v390 = vld [vmem:[%s1 + $0x150] sm:$0xf]
      %v391 = vld [vmem:[%s1 + $0x154] sm:$0xf]
      %v392 = vld [vmem:[%s1 + $0x158] sm:$0xf]
      %v393 = vld [vmem:[%s1 + $0x15c] sm:$0xf]
      %v394 = vld [vmem:[%s1 + $0x160] sm:$0xf]
      %v395 = vld [vmem:[%s1 + $0x164] sm:$0xf]
      %v396 = vld [vmem:[%s1 + $0x168] sm:$0xf]
      %v397 = vld [vmem:[%s1 + $0x16c] sm:$0xf]
      %v398 = vld [vmem:[%s1 + $0x170] sm:$0xf]
      %v399 = vld [vmem:[%s1 + $0x174] sm:$0xf]
      %v400 = vld [vmem:[%s1 + $0x178] sm:$0xf]
      %v401 = vld [vmem:[%s1 + $0x17c] sm:$0xf]
      %v402 = vld [vmem:[%s1 + $0x180] sm:$0xf]
      %v403 = vld [vmem:[%s1 + $0x184] sm:$0xf]
      %v404 = vld [vmem:[%s1 + $0x188] sm:$0xf]
      %v405 = vld [vmem:[%s1 + $0x18c] sm:$0xf]
      %v406 = vld [vmem:[%s2] sm:$0x1]
      %v408 = vlaneseq
      %v409 = vshrl.u32 %v408, 7
      %v410 = vsub.s32 0, %v409
      %v411 = vrot.slane %v406, %v410
      %v541 = vunpack.c.l.b16 %v178
      %v542 = vunpack.c.h.b16 %v178
      %v543 = vunpack.c.l.b16 %v179
      %v544 = vunpack.c.h.b16 %v179
      %v545 = vunpack.c.l.b16 %v180
      %v546 = vunpack.c.h.b16 %v180
      %v547 = vunpack.c.l.b16 %v181
      %v548 = vunpack.c.l.b16 %v182
      %v549 = vunpack.c.h.b16 %v182
      %v550 = vunpack.c.l.b16 %v183
      %v551 = vunpack.c.h.b16 %v183
      %v552 = vunpack.c.l.b16 %v184
      %v553 = vunpack.c.h.b16 %v184
      %v554 = vunpack.c.l.b16 %v185
      %v555 = vunpack.c.l.b16 %v186
      %v556 = vunpack.c.h.b16 %v186
      %v557 = vunpack.c.l.b16 %v187
      %v558 = vunpack.c.h.b16 %v187
      %v559 = vunpack.c.l.b16 %v188
      %v560 = vunpack.c.h.b16 %v188
      %v561 = vunpack.c.l.b16 %v189
      %v562 = vunpack.c.l.b16 %v190
      %v563 = vunpack.c.h.b16 %v190
      %v564 = vunpack.c.l.b16 %v191
      %v565 = vunpack.c.h.b16 %v191
      %v566 = vunpack.c.l.b16 %v192
      %v567 = vunpack.c.h.b16 %v192
      %v568 = vunpack.c.l.b16 %v193
      %v569 = vunpack.c.l.b16 %v194
      %v570 = vunpack.c.h.b16 %v194
      %v571 = vunpack.c.l.b16 %v195
      %v572 = vunpack.c.h.b16 %v195
      %v573 = vunpack.c.l.b16 %v196
      %v574 = vunpack.c.h.b16 %v196
      %v575 = vunpack.c.l.b16 %v197
      %v576 = vunpack.c.l.b16 %v198
      %v577 = vunpack.c.h.b16 %v198
      %v578 = vunpack.c.l.b16 %v199
      %v579 = vunpack.c.h.b16 %v199
      %v580 = vunpack.c.l.b16 %v200
      %v581 = vunpack.c.h.b16 %v200
      %v582 = vunpack.c.l.b16 %v201
      %v583 = vunpack.c.l.b16 %v202
      %v584 = vunpack.c.h.b16 %v202
      %v585 = vunpack.c.l.b16 %v203
      %v586 = vunpack.c.h.b16 %v203
      %v587 = vunpack.c.l.b16 %v204
      %v588 = vunpack.c.h.b16 %v204
      %v589 = vunpack.c.l.b16 %v205
      %v590 = vunpack.c.l.b16 %v206
      %v591 = vunpack.c.h.b16 %v206
      %v592 = vunpack.c.l.b16 %v207
      %v593 = vunpack.c.h.b16 %v207
      %v594 = vunpack.c.l.b16 %v208
      %v595 = vunpack.c.h.b16 %v208
      %v596 = vunpack.c.l.b16 %v209
      %v597 = vunpack.c.l.b16 %v210
      %v598 = vunpack.c.h.b16 %v210
      %v599 = vunpack.c.l.b16 %v211
      %v600 = vunpack.c.h.b16 %v211
      %v601 = vunpack.c.l.b16 %v212
      %v602 = vunpack.c.h.b16 %v212
      %v603 = vunpack.c.l.b16 %v213
      %v604 = vunpack.c.l.b16 %v214
      %v605 = vunpack.c.h.b16 %v214
      %v606 = vunpack.c.l.b16 %v215
      %v607 = vunpack.c.h.b16 %v215
      %v608 = vunpack.c.l.b16 %v216
      %v609 = vunpack.c.h.b16 %v216
      %v610 = vunpack.c.l.b16 %v217
      %v611 = vunpack.c.l.b16 %v218
      %v612 = vunpack.c.h.b16 %v218
      %v613 = vunpack.c.l.b16 %v219
      %v614 = vunpack.c.h.b16 %v219
      %v615 = vunpack.c.l.b16 %v220
      %v616 = vunpack.c.h.b16 %v220
      %v617 = vunpack.c.l.b16 %v221
      %v618 = vunpack.c.l.b16 %v222
      %v619 = vunpack.c.h.b16 %v222
      %v620 = vunpack.c.l.b16 %v223
      %v621 = vunpack.c.h.b16 %v223
      %v622 = vunpack.c.l.b16 %v224
      %v623 = vunpack.c.h.b16 %v224
      %v624 = vunpack.c.l.b16 %v225
      %v625 = vunpack.c.l.b16 %v226
      %v626 = vunpack.c.h.b16 %v226
      %v627 = vunpack.c.l.b16 %v227
      %v628 = vunpack.c.h.b16 %v227
      %v629 = vunpack.c.l.b16 %v228
      %v630 = vunpack.c.h.b16 %v228
      %v631 = vunpack.c.l.b16 %v229
      %v632 = vunpack.c.l.b16 %v230
      %v633 = vunpack.c.h.b16 %v230
      %v634 = vunpack.c.l.b16 %v231
      %v635 = vunpack.c.h.b16 %v231
      %v636 = vunpack.c.l.b16 %v232
      %v637 = vunpack.c.h.b16 %v232
      %v638 = vunpack.c.l.b16 %v233
      %v639 = vunpack.c.l.b16 %v234
      %v640 = vunpack.c.h.b16 %v234
      %v641 = vunpack.c.l.b16 %v235
      %v642 = vunpack.c.h.b16 %v235
      %v643 = vunpack.c.l.b16 %v236
      %v644 = vunpack.c.h.b16 %v236
      %v645 = vunpack.c.l.b16 %v237
      %v646 = vunpack.c.l.b16 %v238
      %v647 = vunpack.c.h.b16 %v238
      %v648 = vunpack.c.l.b16 %v239
      %v649 = vunpack.c.h.b16 %v239
      %v650 = vunpack.c.l.b16 %v240
      %v651 = vunpack.c.h.b16 %v240
      %v652 = vunpack.c.l.b16 %v241
      %v653 = vunpack.c.l.b16 %v242
      %v654 = vunpack.c.h.b16 %v242
      %v655 = vunpack.c.l.b16 %v243
      %v656 = vunpack.c.h.b16 %v243
      %v657 = vunpack.c.l.b16 %v244
      %v658 = vunpack.c.h.b16 %v244
      %v659 = vunpack.c.l.b16 %v245
      %v660 = vunpack.c.l.b16 %v246
      %v661 = vunpack.c.h.b16 %v246
      %v662 = vunpack.c.l.b16 %v247
      %v663 = vunpack.c.h.b16 %v247
      %v664 = vunpack.c.l.b16 %v248
      %v665 = vunpack.c.h.b16 %v248
      %v666 = vunpack.c.l.b16 %v249
      %v667 = vunpack.c.l.b16 %v250
      %v668 = vunpack.c.h.b16 %v250
      %v669 = vunpack.c.l.b16 %v251
      %v670 = vunpack.c.h.b16 %v251
      %v671 = vunpack.c.l.b16 %v252
      %v672 = vunpack.c.h.b16 %v252
      %v673 = vunpack.c.l.b16 %v253
      %v674 = vunpack.c.l.b16 %v254
      %v675 = vunpack.c.h.b16 %v254
      %v676 = vunpack.c.l.b16 %v255
      %v677 = vunpack.c.h.b16 %v255
      %v678 = vunpack.c.l.b16 %v256
      %v679 = vunpack.c.h.b16 %v256
      %v680 = vunpack.c.l.b16 %v257
      %v681 = vunpack.c.l.b16 %v258
      %v682 = vunpack.c.h.b16 %v258
      %v683 = vunpack.c.l.b16 %v259
      %v684 = vunpack.c.h.b16 %v259
      %v685 = vunpack.c.l.b16 %v260
      %v686 = vunpack.c.h.b16 %v260
      %v687 = vunpack.c.l.b16 %v261
      %v688 = vunpack.c.l.b16 %v262
      %v689 = vunpack.c.h.b16 %v262
      %v690 = vunpack.c.l.b16 %v263
      %v691 = vunpack.c.h.b16 %v263
      %v692 = vunpack.c.l.b16 %v264
      %v693 = vunpack.c.h.b16 %v264
      %v694 = vunpack.c.l.b16 %v265
      %v695 = vunpack.c.l.b16 %v266
      %v696 = vunpack.c.h.b16 %v266
      %v697 = vunpack.c.l.b16 %v267
      %v698 = vunpack.c.h.b16 %v267
      %v699 = vunpack.c.l.b16 %v268
      %v700 = vunpack.c.h.b16 %v268
      %v701 = vunpack.c.l.b16 %v269
      %v702 = vunpack.c.l.b16 %v270
      %v703 = vunpack.c.h.b16 %v270
      %v704 = vunpack.c.l.b16 %v271
      %v705 = vunpack.c.h.b16 %v271
      %v706 = vunpack.c.l.b16 %v272
      %v707 = vunpack.c.h.b16 %v272
      %v708 = vunpack.c.l.b16 %v273
      %v709 = vunpack.c.l.b16 %v274
      %v710 = vunpack.c.h.b16 %v274
      %v711 = vunpack.c.l.b16 %v275
      %v712 = vunpack.c.h.b16 %v275
      %v713 = vunpack.c.l.b16 %v276
      %v714 = vunpack.c.h.b16 %v276
      %v715 = vunpack.c.l.b16 %v277
      %v716 = vunpack.c.l.b16 %v278
      %v717 = vunpack.c.h.b16 %v278
      %v718 = vunpack.c.l.b16 %v279
      %v719 = vunpack.c.h.b16 %v279
      %v720 = vunpack.c.l.b16 %v280
      %v721 = vunpack.c.h.b16 %v280
      %v722 = vunpack.c.l.b16 %v281
      %v723 = vunpack.c.l.b16 %v282
      %v724 = vunpack.c.h.b16 %v282
      %v725 = vunpack.c.l.b16 %v283
      %v726 = vunpack.c.h.b16 %v283
      %v727 = vunpack.c.l.b16 %v284
      %v728 = vunpack.c.h.b16 %v284
      %v729 = vunpack.c.l.b16 %v285
      %v730 = vunpack.c.l.b16 %v286
      %v731 = vunpack.c.h.b16 %v286
      %v732 = vunpack.c.l.b16 %v287
      %v733 = vunpack.c.h.b16 %v287
      %v734 = vunpack.c.l.b16 %v288
      %v735 = vunpack.c.h.b16 %v288
      %v736 = vunpack.c.l.b16 %v289
      %v737 = vunpack.c.l.b16 %v290
      %v738 = vunpack.c.h.b16 %v290
      %v739 = vunpack.c.l.b16 %v291
      %v740 = vunpack.c.h.b16 %v291
      %v741 = vunpack.c.l.b16 %v292
      %v742 = vunpack.c.h.b16 %v292
      %v743 = vunpack.c.l.b16 %v293
      %v744 = vunpack.c.l.b16 %v294
      %v745 = vunpack.c.h.b16 %v294
      %v746 = vunpack.c.l.b16 %v295
      %v747 = vunpack.c.h.b16 %v295
      %v748 = vunpack.c.l.b16 %v296
      %v749 = vunpack.c.h.b16 %v296
      %v750 = vunpack.c.l.b16 %v297
      %v751 = vunpack.c.l.b16 %v298
      %v752 = vunpack.c.h.b16 %v298
      %v753 = vunpack.c.l.b16 %v299
      %v754 = vunpack.c.h.b16 %v299
      %v755 = vunpack.c.l.b16 %v300
      %v756 = vunpack.c.h.b16 %v300
      %v757 = vunpack.c.l.b16 %v301
      %v758 = vunpack.c.l.b16 %v302
      %v759 = vunpack.c.h.b16 %v302
      %v760 = vunpack.c.l.b16 %v303
      %v761 = vunpack.c.h.b16 %v303
      %v762 = vunpack.c.l.b16 %v304
      %v763 = vunpack.c.h.b16 %v304
      %v764 = vunpack.c.l.b16 %v305
      %v765 = vpack.c.b16 %v548, %v541
      %v766 = vpack.c.b16 %v549, %v542
      %v767 = vpack.c.b16 %v550, %v543
      %v768 = vpack.c.b16 %v551, %v544
      %v769 = vpack.c.b16 %v552, %v545
      %v770 = vpack.c.b16 %v553, %v546
      %v771 = vpack.c.b16 %v554, %v547
      %v772 = vpack.c.b16 %v562, %v555
      %v773 = vpack.c.b16 %v563, %v556
      %v774 = vpack.c.b16 %v564, %v557
      %v775 = vpack.c.b16 %v565, %v558
      %v776 = vpack.c.b16 %v566, %v559
      %v777 = vpack.c.b16 %v567, %v560
      %v778 = vpack.c.b16 %v568, %v561
      %v779 = vpack.c.b16 %v576, %v569
      %v780 = vpack.c.b16 %v577, %v570
      %v781 = vpack.c.b16 %v578, %v571
      %v782 = vpack.c.b16 %v579, %v572
      %v783 = vpack.c.b16 %v580, %v573
      %v784 = vpack.c.b16 %v581, %v574
      %v785 = vpack.c.b16 %v582, %v575
      %v786 = vpack.c.b16 %v590, %v583
      %v787 = vpack.c.b16 %v591, %v584
      %v788 = vpack.c.b16 %v592, %v585
      %v789 = vpack.c.b16 %v593, %v586
      %v790 = vpack.c.b16 %v594, %v587
      %v791 = vpack.c.b16 %v595, %v588
      %v792 = vpack.c.b16 %v596, %v589
      %v793 = vpack.c.b16 %v604, %v597
      %v794 = vpack.c.b16 %v605, %v598
      %v795 = vpack.c.b16 %v606, %v599
      %v796 = vpack.c.b16 %v607, %v600
      %v797 = vpack.c.b16 %v608, %v601
      %v798 = vpack.c.b16 %v609, %v602
      %v799 = vpack.c.b16 %v610, %v603
      %v800 = vpack.c.b16 %v618, %v611
      %v801 = vpack.c.b16 %v619, %v612
      %v802 = vpack.c.b16 %v620, %v613
      %v803 = vpack.c.b16 %v621, %v614
      %v804 = vpack.c.b16 %v622, %v615
      %v805 = vpack.c.b16 %v623, %v616
      %v806 = vpack.c.b16 %v624, %v617
      %v807 = vpack.c.b16 %v632, %v625
      %v808 = vpack.c.b16 %v633, %v626
      %v809 = vpack.c.b16 %v634, %v627
      %v810 = vpack.c.b16 %v635, %v628
      %v811 = vpack.c.b16 %v636, %v629
      %v812 = vpack.c.b16 %v637, %v630
      %v813 = vpack.c.b16 %v638, %v631
      %v814 = vpack.c.b16 %v646, %v639
      %v815 = vpack.c.b16 %v647, %v640
      %v816 = vpack.c.b16 %v648, %v641
      %v817 = vpack.c.b16 %v649, %v642
      %v818 = vpack.c.b16 %v650, %v643
      %v819 = vpack.c.b16 %v651, %v644
      %v820 = vpack.c.b16 %v652, %v645
      %v821 = vpack.c.b16 %v660, %v653
      %v822 = vpack.c.b16 %v661, %v654
      %v823 = vpack.c.b16 %v662, %v655
      %v824 = vpack.c.b16 %v663, %v656
      %v825 = vpack.c.b16 %v664, %v657
      %v826 = vpack.c.b16 %v665, %v658
      %v827 = vpack.c.b16 %v666, %v659
      %v828 = vpack.c.b16 %v674, %v667
      %v829 = vpack.c.b16 %v675, %v668
      %v830 = vpack.c.b16 %v676, %v669
      %v831 = vpack.c.b16 %v677, %v670
      %v832 = vpack.c.b16 %v678, %v671
      %v833 = vpack.c.b16 %v679, %v672
      %v834 = vpack.c.b16 %v680, %v673
      %v835 = vpack.c.b16 %v688, %v681
      %v836 = vpack.c.b16 %v689, %v682
      %v837 = vpack.c.b16 %v690, %v683
      %v838 = vpack.c.b16 %v691, %v684
      %v839 = vpack.c.b16 %v692, %v685
      %v840 = vpack.c.b16 %v693, %v686
      %v841 = vpack.c.b16 %v694, %v687
      %v842 = vpack.c.b16 %v702, %v695
      %v843 = vpack.c.b16 %v703, %v696
      %v844 = vpack.c.b16 %v704, %v697
      %v845 = vpack.c.b16 %v705, %v698
      %v846 = vpack.c.b16 %v706, %v699
      %v847 = vpack.c.b16 %v707, %v700
      %v848 = vpack.c.b16 %v708, %v701
      %v849 = vpack.c.b16 %v716, %v709
      %v850 = vpack.c.b16 %v717, %v710
      %v851 = vpack.c.b16 %v718, %v711
      %v852 = vpack.c.b16 %v719, %v712
      %v853 = vpack.c.b16 %v720, %v713
      %v854 = vpack.c.b16 %v721, %v714
      %v855 = vpack.c.b16 %v722, %v715
      %v856 = vpack.c.b16 %v730, %v723
      %v857 = vpack.c.b16 %v731, %v724
      %v858 = vpack.c.b16 %v732, %v725
      %v859 = vpack.c.b16 %v733, %v726
      %v860 = vpack.c.b16 %v734, %v727
      %v861 = vpack.c.b16 %v735, %v728
      %v862 = vpack.c.b16 %v736, %v729
      %v863 = vpack.c.b16 %v744, %v737
      %v864 = vpack.c.b16 %v745, %v738
      %v865 = vpack.c.b16 %v746, %v739
      %v866 = vpack.c.b16 %v747, %v740
      %v867 = vpack.c.b16 %v748, %v741
      %v868 = vpack.c.b16 %v749, %v742
      %v869 = vpack.c.b16 %v750, %v743
      %v870 = vpack.c.b16 %v758, %v751
      %v871 = vpack.c.b16 %v759, %v752
      %v872 = vpack.c.b16 %v760, %v753
      %v873 = vpack.c.b16 %v761, %v754
      %v874 = vpack.c.b16 %v762, %v755
      %v875 = vpack.c.b16 %v763, %v756
      %v876 = vpack.c.b16 %v764, %v757
      %v1073 = vunpack.c.l.b16 %v306
      %v1074 = vunpack.c.l.b16 %v307
      %v1075 = vunpack.c.l.b16 %v308
      %v1076 = vunpack.c.l.b16 %v309
      %v1077 = vunpack.c.l.b16 %v310
      %v1078 = vunpack.c.l.b16 %v311
      %v1079 = vunpack.c.l.b16 %v312
      %v1080 = vunpack.c.l.b16 %v313
      %v1081 = vunpack.c.l.b16 %v314
      %v1082 = vunpack.c.l.b16 %v315
      %v1083 = vunpack.c.l.b16 %v316
      %v1084 = vunpack.c.l.b16 %v317
      %v1085 = vunpack.c.l.b16 %v318
      %v1086 = vunpack.c.l.b16 %v319
      %v1087 = vunpack.c.l.b16 %v320
      %v1088 = vunpack.c.l.b16 %v321
      %v1089 = vunpack.c.l.b16 %v322
      %v1090 = vunpack.c.l.b16 %v323
      %v1091 = vunpack.c.l.b16 %v324
      %v1092 = vunpack.c.l.b16 %v325
      %v1093 = vunpack.c.l.b16 %v326
      %v1094 = vunpack.c.l.b16 %v327
      %v1095 = vunpack.c.l.b16 %v328
      %v1096 = vunpack.c.l.b16 %v329
      %v1097 = vunpack.c.l.b16 %v330
      %v1098 = vunpack.c.l.b16 %v331
      %v1099 = vunpack.c.l.b16 %v332
      %v1100 = vunpack.c.l.b16 %v333
      %v1101 = vunpack.c.l.b16 %v334
      %v1102 = vunpack.c.l.b16 %v335
      %v1103 = vunpack.c.l.b16 %v336
      %v1104 = vunpack.c.l.b16 %v337
      %v1105 = vunpack.c.l.b16 %v338
      %v1106 = vunpack.c.l.b16 %v339
      %v1107 = vunpack.c.l.b16 %v340
      %v1108 = vunpack.c.l.b16 %v341
      %v1109 = vunpack.c.l.b16 %v342
      %v1110 = vunpack.c.l.b16 %v343
      %v1111 = vunpack.c.l.b16 %v344
      %v1112 = vunpack.c.l.b16 %v345
      %v1113 = vunpack.c.l.b16 %v346
      %v1114 = vunpack.c.l.b16 %v347
      %v1115 = vunpack.c.l.b16 %v348
      %v1116 = vunpack.c.l.b16 %v349
      %v1117 = vunpack.c.l.b16 %v350
      %v1118 = vunpack.c.l.b16 %v351
      %v1119 = vunpack.c.l.b16 %v352
      %v1120 = vunpack.c.l.b16 %v353
      %v1121 = vunpack.c.l.b16 %v354
      %v1122 = vunpack.c.l.b16 %v355
      %v1123 = vunpack.c.l.b16 %v356
      %v1124 = vunpack.c.l.b16 %v357
      %v1125 = vunpack.c.l.b16 %v358
      %v1126 = vunpack.c.l.b16 %v359
      %v1127 = vunpack.c.l.b16 %v360
      %v1128 = vunpack.c.l.b16 %v361
      %v1129 = vunpack.c.l.b16 %v362
      %v1130 = vunpack.c.l.b16 %v363
      %v1131 = vunpack.c.l.b16 %v364
      %v1132 = vunpack.c.l.b16 %v365
      %v1133 = vunpack.c.l.b16 %v366
      %v1134 = vunpack.c.l.b16 %v367
      %v1135 = vunpack.c.l.b16 %v368
      %v1136 = vunpack.c.l.b16 %v369
      %v1137 = vunpack.c.l.b16 %v370
      %v1138 = vunpack.c.l.b16 %v371
      %v1139 = vunpack.c.l.b16 %v372
      %v1140 = vunpack.c.l.b16 %v373
      %v1141 = vunpack.c.l.b16 %v374
      %v1142 = vunpack.c.l.b16 %v375
      %v1143 = vunpack.c.l.b16 %v376
      %v1144 = vunpack.c.l.b16 %v377
      %v1145 = vunpack.c.l.b16 %v378
      %v1146 = vunpack.c.l.b16 %v379
      %v1147 = vunpack.c.l.b16 %v380
      %v1148 = vunpack.c.l.b16 %v381
      %v1149 = vunpack.c.l.b16 %v382
      %v1150 = vunpack.c.l.b16 %v383
      %v1151 = vunpack.c.l.b16 %v384
      %v1152 = vunpack.c.l.b16 %v385
      %v1153 = vunpack.c.l.b16 %v386
      %v1154 = vunpack.c.l.b16 %v387
      %v1155 = vunpack.c.l.b16 %v388
      %v1156 = vunpack.c.l.b16 %v389
      %v1157 = vunpack.c.l.b16 %v390
      %v1158 = vunpack.c.l.b16 %v391
      %v1159 = vunpack.c.l.b16 %v392
      %v1160 = vunpack.c.l.b16 %v393
      %v1161 = vunpack.c.l.b16 %v394
      %v1162 = vunpack.c.l.b16 %v395
      %v1163 = vunpack.c.l.b16 %v396
      %v1164 = vunpack.c.l.b16 %v397
      %v1165 = vunpack.c.l.b16 %v398
      %v1166 = vunpack.c.l.b16 %v399
      %v1167 = vunpack.c.l.b16 %v400
      %v1168 = vunpack.c.l.b16 %v401
      %v1169 = vunpack.c.l.b16 %v402
      %v1170 = vunpack.c.l.b16 %v403
      %v1171 = vunpack.c.l.b16 %v404
      %v1172 = vunpack.c.l.b16 %v405
      %v1173 = vpack.c.b16 %v1074, %v1073
      %v1174 = vpack.c.b16 %v1076, %v1075
      %v1175 = vpack.c.b16 %v1078, %v1077
      %v1176 = vpack.c.b16 %v1080, %v1079
      %v1177 = vpack.c.b16 %v1082, %v1081
      %v1178 = vpack.c.b16 %v1084, %v1083
      %v1179 = vpack.c.b16 %v1086, %v1085
      %v1180 = vpack.c.b16 %v1088, %v1087
      %v1181 = vpack.c.b16 %v1090, %v1089
      %v1182 = vpack.c.b16 %v1092, %v1091
      %v1183 = vpack.c.b16 %v1094, %v1093
      %v1184 = vpack.c.b16 %v1096, %v1095
      %v1185 = vpack.c.b16 %v1098, %v1097
      %v1186 = vpack.c.b16 %v1100, %v1099
      %v1187 = vpack.c.b16 %v1102, %v1101
      %v1188 = vpack.c.b16 %v1104, %v1103
      %v1189 = vpack.c.b16 %v1106, %v1105
      %v1190 = vpack.c.b16 %v1108, %v1107
      %v1191 = vpack.c.b16 %v1110, %v1109
      %v1192 = vpack.c.b16 %v1112, %v1111
      %v1193 = vpack.c.b16 %v1114, %v1113
      %v1194 = vpack.c.b16 %v1116, %v1115
      %v1195 = vpack.c.b16 %v1118, %v1117
      %v1196 = vpack.c.b16 %v1120, %v1119
      %v1197 = vpack.c.b16 %v1122, %v1121
      %v1198 = vpack.c.b16 %v1124, %v1123
      %v1199 = vpack.c.b16 %v1126, %v1125
      %v1200 = vpack.c.b16 %v1128, %v1127
      %v1201 = vpack.c.b16 %v1130, %v1129
      %v1202 = vpack.c.b16 %v1132, %v1131
      %v1203 = vpack.c.b16 %v1134, %v1133
      %v1204 = vpack.c.b16 %v1136, %v1135
      %v1205 = vpack.c.b16 %v1138, %v1137
      %v1206 = vpack.c.b16 %v1140, %v1139
      %v1207 = vpack.c.b16 %v1142, %v1141
      %v1208 = vpack.c.b16 %v1144, %v1143
      %v1209 = vpack.c.b16 %v1146, %v1145
      %v1210 = vpack.c.b16 %v1148, %v1147
      %v1211 = vpack.c.b16 %v1150, %v1149
      %v1212 = vpack.c.b16 %v1152, %v1151
      %v1213 = vpack.c.b16 %v1154, %v1153
      %v1214 = vpack.c.b16 %v1156, %v1155
      %v1215 = vpack.c.b16 %v1158, %v1157
      %v1216 = vpack.c.b16 %v1160, %v1159
      %v1217 = vpack.c.b16 %v1162, %v1161
      %v1218 = vpack.c.b16 %v1164, %v1163
      %v1219 = vpack.c.b16 %v1166, %v1165
      %v1220 = vpack.c.b16 %v1168, %v1167
      %v1221 = vpack.c.b16 %v1170, %v1169
      %v1222 = vpack.c.b16 %v1172, %v1171
      %vm1273 = vcmask 261120
      %v1275 = vsel %vm1273, %v771, 0
      %v1278 = vsel %vm1273, %v778, 0
      %v1281 = vsel %vm1273, %v785, 0
      %v1284 = vsel %vm1273, %v792, 0
      %v1287 = vsel %vm1273, %v799, 0
      %v1290 = vsel %vm1273, %v806, 0
      %v1293 = vsel %vm1273, %v813, 0
      %v1296 = vsel %vm1273, %v820, 0
      %v1299 = vsel %vm1273, %v827, 0
      %v1302 = vsel %vm1273, %v834, 0
      %v1305 = vsel %vm1273, %v841, 0
      %v1308 = vsel %vm1273, %v848, 0
      %v1311 = vsel %vm1273, %v855, 0
      %v1314 = vsel %vm1273, %v862, 0
      %v1317 = vsel %vm1273, %v869, 0
      %v1320 = vsel %vm1273, %v876, 0
      %1322 = vmatprep.subr.bf16.mxu0 0
      %1323 = vmatpush1.bf16.msra.mxu0 %v1173
      %1324 = vmatprep.subr.bf16.mxu0 0
      %1325 = vmatpush1.bf16.msra.mxu0 %v1174
      %1326 = vmatprep.subr.bf16.mxu0 0
      %1327 = vmatpush1.bf16.msra.mxu0 %v1175
      %1328 = vmatprep.subr.bf16.mxu0 0
      %1329 = vmatpush1.bf16.msra.mxu0 %v1176
      %1330 = vmatprep.subr.bf16.mxu0 0
      %1331 = vmatpush1.bf16.msra.mxu0 %v1177
      %1332 = vmatprep.subr.bf16.mxu0 0
      %1333 = vmatpush1.bf16.msra.mxu0 %v1178
      %1334 = vmatprep.subr.bf16.mxu0 0
      %1335 = vmatpush1.bf16.msra.mxu0 %v1179
      %1336 = vmatprep.subr.bf16.mxu0 0
      %1337 = vmatpush1.bf16.msra.mxu0 %v1180
      %1338 = vmatprep.subr.bf16.mxu0 0
      %1339 = vmatpush1.bf16.msra.mxu0 %v1181
      %1340 = vmatprep.subr.bf16.mxu0 0
      %1341 = vmatpush1.bf16.msra.mxu0 %v1182
      %1342 = vmatprep.subr.bf16.mxu0 0
      %1343 = vmatpush1.bf16.msra.mxu0 %v1183
      %1344 = vmatprep.subr.bf16.mxu0 0
      %1345 = vmatpush1.bf16.msra.mxu0 %v1184
      %1346 = vmatprep.subr.bf16.mxu0 0
      %1347 = vmatpush1.bf16.msra.mxu0 %v1185
      %1348 = vmatprep.subr.bf16.mxu0 0
      %1349 = vmatpush1.bf16.msra.mxu0 %v1186
      %1350 = vmatprep.subr.bf16.mxu0 0
      %1351 = vmatpush1.bf16.msra.mxu0 %v1187
      %1352 = vmatprep.subr.bf16.mxu0 0
      %1353 = vmatpush1.bf16.msra.mxu0 %v1188
      %1354 = vmatprep.mubr.bf16.mxu0 %v766
      %1355 = vmatmul.mubr.bf16.gmra.mrb[0].mxu0 %v765
      %v1356 = vpop.f32.mrb[0].mxu0
      %v1357 = vadd.f32 %v411, %v1356
      %v1358 = vpop.f32.mrb[0].mxu0
      %v1359 = vpop.f32.mrb[0].mxu0
      %v1360 = vadd.f32 %v411, %v1359
      %v1361 = vpop.f32.mrb[0].mxu0
      %1362 = vmatprep.mubr.bf16.mxu0 %v773
      %1363 = vmatmul.mubr.bf16.gmra.mrb[0].mxu0 %v772
      %v1364 = vpop.f32.mrb[0].mxu0
      %v1365 = vadd.f32 %v411, %v1364
      %v1366 = vpop.f32.mrb[0].mxu0
      %v1367 = vpop.f32.mrb[0].mxu0
      %v1368 = vadd.f32 %v411, %v1367
      %v1369 = vpop.f32.mrb[0].mxu0
      %1370 = vmatprep.mubr.bf16.mxu0 %v780
      %1371 = vmatmul.mubr.bf16.gmra.mrb[0].mxu0 %v779
      %v1372 = vpop.f32.mrb[0].mxu0
      %v1373 = vadd.f32 %v411, %v1372
      %v1374 = vpop.f32.mrb[0].mxu0
      %v1375 = vpop.f32.mrb[0].mxu0
      %v1376 = vadd.f32 %v411, %v1375
      %v1377 = vpop.f32.mrb[0].mxu0
      %1378 = vmatprep.mubr.bf16.mxu0 %v787
      %1379 = vmatmul.mubr.bf16.gmra.mrb[0].mxu0 %v786
      %v1380 = vpop.f32.mrb[0].mxu0
      %v1381 = vadd.f32 %v411, %v1380
      %v1382 = vpop.f32.mrb[0].mxu0
      %v1383 = vpop.f32.mrb[0].mxu0
      %v1384 = vadd.f32 %v411, %v1383
      %v1385 = vpop.f32.mrb[0].mxu0
      %1386 = vmatprep.mubr.bf16.mxu0 %v794
      %1387 = vmatmul.mubr.bf16.gmra.mrb[0].mxu0 %v793
      %v1388 = vpop.f32.mrb[0].mxu0
      %v1389 = vadd.f32 %v411, %v1388
      %v1390 = vpop.f32.mrb[0].mxu0
      %v1391 = vpop.f32.mrb[0].mxu0
      %v1392 = vadd.f32 %v411, %v1391
      %v1393 = vpop.f32.mrb[0].mxu0
      %1394 = vmatprep.mubr.bf16.mxu0 %v801
      %1395 = vmatmul.mubr.bf16.gmra.mrb[0].mxu0 %v800
      %v1396 = vpop.f32.mrb[0].mxu0
      %v1397 = vadd.f32 %v411, %v1396
      %v1398 = vpop.f32.mrb[0].mxu0
      %v1399 = vpop.f32.mrb[0].mxu0
      %v1400 = vadd.f32 %v411, %v1399
      %v1401 = vpop.f32.mrb[0].mxu0
      %1402 = vmatprep.mubr.bf16.mxu0 %v808
      %1403 = vmatmul.mubr.bf16.gmra.mrb[0].mxu0 %v807
      %v1404 = vpop.f32.mrb[0].mxu0
      %v1405 = vadd.f32 %v411, %v1404
      %v1406 = vpop.f32.mrb[0].mxu0
      %v1407 = vpop.f32.mrb[0].mxu0
      %v1408 = vadd.f32 %v411, %v1407
      %v1409 = vpop.f32.mrb[0].mxu0
      %1410 = vmatprep.mubr.bf16.mxu0 %v815
      %1411 = vmatmul.mubr.bf16.gmra.mrb[0].mxu0 %v814
      %v1412 = vpop.f32.mrb[0].mxu0
      %v1413 = vadd.f32 %v411, %v1412
      %v1414 = vpop.f32.mrb[0].mxu0
      %v1415 = vpop.f32.mrb[0].mxu0
      %v1416 = vadd.f32 %v411, %v1415
      %v1417 = vpop.f32.mrb[0].mxu0
      %1418 = vmatprep.mubr.bf16.mxu0 %v822
      %1419 = vmatmul.mubr.bf16.gmra.mrb[0].mxu0 %v821
      %v1420 = vpop.f32.mrb[0].mxu0
      %v1421 = vadd.f32 %v411, %v1420
      %v1422 = vpop.f32.mrb[0].mxu0
      %v1423 = vpop.f32.mrb[0].mxu0
      %v1424 = vadd.f32 %v411, %v1423
      %v1425 = vpop.f32.mrb[0].mxu0
      %1426 = vmatprep.mubr.bf16.mxu0 %v829
      %1427 = vmatmul.mubr.bf16.gmra.mrb[0].mxu0 %v828
      %v1428 = vpop.f32.mrb[0].mxu0
      %v1429 = vadd.f32 %v411, %v1428
      %v1430 = vpop.f32.mrb[0].mxu0
      %v1431 = vpop.f32.mrb[0].mxu0
      %v1432 = vadd.f32 %v411, %v1431
      %v1433 = vpop.f32.mrb[0].mxu0
      %1434 = vmatprep.mubr.bf16.mxu0 %v836
      %1435 = vmatmul.mubr.bf16.gmra.mrb[0].mxu0 %v835
      %v1436 = vpop.f32.mrb[0].mxu0
      %v1437 = vadd.f32 %v411, %v1436
      %v1438 = vpop.f32.mrb[0].mxu0
      %v1439 = vpop.f32.mrb[0].mxu0
      %v1440 = vadd.f32 %v411, %v1439
      %v1441 = vpop.f32.mrb[0].mxu0
      %1442 = vmatprep.mubr.bf16.mxu0 %v843
      %1443 = vmatmul.mubr.bf16.gmra.mrb[0].mxu0 %v842
      %v1444 = vpop.f32.mrb[0].mxu0
      %v1445 = vadd.f32 %v411, %v1444
      %v1446 = vpop.f32.mrb[0].mxu0
      %v1447 = vpop.f32.mrb[0].mxu0
      %v1448 = vadd.f32 %v411, %v1447
      %v1449 = vpop.f32.mrb[0].mxu0
      %1450 = vmatprep.mubr.bf16.mxu0 %v850
      %1451 = vmatmul.mubr.bf16.gmra.mrb[0].mxu0 %v849
      %v1452 = vpop.f32.mrb[0].mxu0
      %v1453 = vadd.f32 %v411, %v1452
      %v1454 = vpop.f32.mrb[0].mxu0
      %v1455 = vpop.f32.mrb[0].mxu0
      %v1456 = vadd.f32 %v411, %v1455
      %v1457 = vpop.f32.mrb[0].mxu0
      %1458 = vmatprep.mubr.bf16.mxu0 %v857
      %1459 = vmatmul.mubr.bf16.gmra.mrb[0].mxu0 %v856
      %v1460 = vpop.f32.mrb[0].mxu0
      %v1461 = vadd.f32 %v411, %v1460
      %v1462 = vpop.f32.mrb[0].mxu0
      %v1463 = vpop.f32.mrb[0].mxu0
      %v1464 = vadd.f32 %v411, %v1463
      %v1465 = vpop.f32.mrb[0].mxu0
      %1466 = vmatprep.mubr.bf16.mxu0 %v864
      %1467 = vmatmul.mubr.bf16.gmra.mrb[0].mxu0 %v863
      %v1468 = vpop.f32.mrb[0].mxu0
      %v1469 = vadd.f32 %v411, %v1468
      %v1470 = vpop.f32.mrb[0].mxu0
      %v1471 = vpop.f32.mrb[0].mxu0
      %v1472 = vadd.f32 %v411, %v1471
      %v1473 = vpop.f32.mrb[0].mxu0
      %1474 = vmatprep.mubr.bf16.mxu0 %v871
      %1475 = vmatmul.mubr.bf16.gmra.mrb[0].mxu0 %v870
      %v1476 = vpop.f32.mrb[0].mxu0
      %v1477 = vadd.f32 %v411, %v1476
      %v1478 = vpop.f32.mrb[0].mxu0
      %v1479 = vpop.f32.mrb[0].mxu0
      %v1480 = vadd.f32 %v411, %v1479
      %v1481 = vpop.f32.mrb[0].mxu0
      %1482 = vdwg.mxu0
      %1483 = vmatprep.subr.bf16.mxu0 0
      %1484 = vmatpush1.bf16.msra.mxu0 %v1189
      %1485 = vmatprep.subr.bf16.mxu0 0
      %1486 = vmatpush1.bf16.msra.mxu0 %v1190
      %1487 = vmatprep.subr.bf16.mxu0 0
      %1488 = vmatpush1.bf16.msra.mxu0 %v1191
      %1489 = vmatprep.subr.bf16.mxu0 0
      %1490 = vmatpush1.bf16.msra.mxu0 %v1192
      %1491 = vmatprep.subr.bf16.mxu0 0
      %1492 = vmatpush1.bf16.msra.mxu0 %v1193
      %1493 = vmatprep.subr.bf16.mxu0 0
      %1494 = vmatpush1.bf16.msra.mxu0 %v1194
      %1495 = vmatprep.subr.bf16.mxu0 0
      %1496 = vmatpush1.bf16.msra.mxu0 %v1195
      %1497 = vmatprep.subr.bf16.mxu0 0
      %1498 = vmatpush1.bf16.msra.mxu0 %v1196
      %1499 = vmatprep.subr.bf16.mxu0 0
      %1500 = vmatpush1.bf16.msra.mxu0 %v1197
      %1501 = vmatprep.subr.bf16.mxu0 0
      %1502 = vmatpush1.bf16.msra.mxu0 %v1198
      %1503 = vmatprep.subr.bf16.mxu0 0
      %1504 = vmatpush1.bf16.msra.mxu0 %v1199
      %1505 = vmatprep.subr.bf16.mxu0 0
      %1506 = vmatpush1.bf16.msra.mxu0 %v1200
      %1507 = vmatprep.subr.bf16.mxu0 0
      %1508 = vmatpush1.bf16.msra.mxu0 %v1201
      %1509 = vmatprep.subr.bf16.mxu0 0
      %1510 = vmatpush1.bf16.msra.mxu0 %v1202
      %1511 = vmatprep.subr.bf16.mxu0 0
      %1512 = vmatpush1.bf16.msra.mxu0 %v1203
      %1513 = vmatprep.subr.bf16.mxu0 0
      %1514 = vmatpush1.bf16.msra.mxu0 %v1204
      %1515 = vmatprep.mubr.bf16.mxu0 %v768
      %1516 = vmatmul.mubr.bf16.gmra.mrb[0].mxu0 %v767
      %v1517 = vpop.f32.mrb[0].mxu0
      %v1518 = vadd.f32 %v1357, %v1517
      %v1519 = vpop.f32.mrb[0].mxu0
      %v1520 = vpop.f32.mrb[0].mxu0
      %v1521 = vadd.f32 %v1360, %v1520
      %v1522 = vpop.f32.mrb[0].mxu0
      %1523 = vmatprep.mubr.bf16.mxu0 %v775
      %1524 = vmatmul.mubr.bf16.gmra.mrb[0].mxu0 %v774
      %v1525 = vpop.f32.mrb[0].mxu0
      %v1526 = vadd.f32 %v1365, %v1525
      %v1527 = vpop.f32.mrb[0].mxu0
      %v1528 = vpop.f32.mrb[0].mxu0
      %v1529 = vadd.f32 %v1368, %v1528
      %v1530 = vpop.f32.mrb[0].mxu0
      %1531 = vmatprep.mubr.bf16.mxu0 %v782
      %1532 = vmatmul.mubr.bf16.gmra.mrb[0].mxu0 %v781
      %v1533 = vpop.f32.mrb[0].mxu0
      %v1534 = vadd.f32 %v1373, %v1533
      %v1535 = vpop.f32.mrb[0].mxu0
      %v1536 = vpop.f32.mrb[0].mxu0
      %v1537 = vadd.f32 %v1376, %v1536
      %v1538 = vpop.f32.mrb[0].mxu0
      %1539 = vmatprep.mubr.bf16.mxu0 %v789
      %1540 = vmatmul.mubr.bf16.gmra.mrb[0].mxu0 %v788
      %v1541 = vpop.f32.mrb[0].mxu0
      %v1542 = vadd.f32 %v1381, %v1541
      %v1543 = vpop.f32.mrb[0].mxu0
      %v1544 = vpop.f32.mrb[0].mxu0
      %v1545 = vadd.f32 %v1384, %v1544
      %v1546 = vpop.f32.mrb[0].mxu0
      %1547 = vmatprep.mubr.bf16.mxu0 %v796
      %1548 = vmatmul.mubr.bf16.gmra.mrb[0].mxu0 %v795
      %v1549 = vpop.f32.mrb[0].mxu0
      %v1550 = vadd.f32 %v1389, %v1549
      %v1551 = vpop.f32.mrb[0].mxu0
      %v1552 = vpop.f32.mrb[0].mxu0
      %v1553 = vadd.f32 %v1392, %v1552
      %v1554 = vpop.f32.mrb[0].mxu0
      %1555 = vmatprep.mubr.bf16.mxu0 %v803
      %1556 = vmatmul.mubr.bf16.gmra.mrb[0].mxu0 %v802
      %v1557 = vpop.f32.mrb[0].mxu0
      %v1558 = vadd.f32 %v1397, %v1557
      %v1559 = vpop.f32.mrb[0].mxu0
      %v1560 = vpop.f32.mrb[0].mxu0
      %v1561 = vadd.f32 %v1400, %v1560
      %v1562 = vpop.f32.mrb[0].mxu0
      %1563 = vmatprep.mubr.bf16.mxu0 %v810
      %1564 = vmatmul.mubr.bf16.gmra.mrb[0].mxu0 %v809
      %v1565 = vpop.f32.mrb[0].mxu0
      %v1566 = vadd.f32 %v1405, %v1565
      %v1567 = vpop.f32.mrb[0].mxu0
      %v1568 = vpop.f32.mrb[0].mxu0
      %v1569 = vadd.f32 %v1408, %v1568
      %v1570 = vpop.f32.mrb[0].mxu0
      %1571 = vmatprep.mubr.bf16.mxu0 %v817
      %1572 = vmatmul.mubr.bf16.gmra.mrb[0].mxu0 %v816
      %v1573 = vpop.f32.mrb[0].mxu0
      %v1574 = vadd.f32 %v1413, %v1573
      %v1575 = vpop.f32.mrb[0].mxu0
      %v1576 = vpop.f32.mrb[0].mxu0
      %v1577 = vadd.f32 %v1416, %v1576
      %v1578 = vpop.f32.mrb[0].mxu0
      %1579 = vmatprep.mubr.bf16.mxu0 %v824
      %1580 = vmatmul.mubr.bf16.gmra.mrb[0].mxu0 %v823
      %v1581 = vpop.f32.mrb[0].mxu0
      %v1582 = vadd.f32 %v1421, %v1581
      %v1583 = vpop.f32.mrb[0].mxu0
      %v1584 = vpop.f32.mrb[0].mxu0
      %v1585 = vadd.f32 %v1424, %v1584
      %v1586 = vpop.f32.mrb[0].mxu0
      %1587 = vmatprep.mubr.bf16.mxu0 %v831
      %1588 = vmatmul.mubr.bf16.gmra.mrb[0].mxu0 %v830
      %v1589 = vpop.f32.mrb[0].mxu0
      %v1590 = vadd.f32 %v1429, %v1589
      %v1591 = vpop.f32.mrb[0].mxu0
      %v1592 = vpop.f32.mrb[0].mxu0
      %v1593 = vadd.f32 %v1432, %v1592
      %v1594 = vpop.f32.mrb[0].mxu0
      %1595 = vmatprep.mubr.bf16.mxu0 %v838
      %1596 = vmatmul.mubr.bf16.gmra.mrb[0].mxu0 %v837
      %v1597 = vpop.f32.mrb[0].mxu0
      %v1598 = vadd.f32 %v1437, %v1597
      %v1599 = vpop.f32.mrb[0].mxu0
      %v1600 = vpop.f32.mrb[0].mxu0
      %v1601 = vadd.f32 %v1440, %v1600
      %v1602 = vpop.f32.mrb[0].mxu0
      %1603 = vmatprep.mubr.bf16.mxu0 %v845
      %1604 = vmatmul.mubr.bf16.gmra.mrb[0].mxu0 %v844
      %v1605 = vpop.f32.mrb[0].mxu0
      %v1606 = vadd.f32 %v1445, %v1605
      %v1607 = vpop.f32.mrb[0].mxu0
      %v1608 = vpop.f32.mrb[0].mxu0
      %v1609 = vadd.f32 %v1448, %v1608
      %v1610 = vpop.f32.mrb[0].mxu0
      %1611 = vmatprep.mubr.bf16.mxu0 %v852
      %1612 = vmatmul.mubr.bf16.gmra.mrb[0].mxu0 %v851
      %v1613 = vpop.f32.mrb[0].mxu0
      %v1614 = vadd.f32 %v1453, %v1613
      %v1615 = vpop.f32.mrb[0].mxu0
      %v1616 = vpop.f32.mrb[0].mxu0
      %v1617 = vadd.f32 %v1456, %v1616
      %v1618 = vpop.f32.mrb[0].mxu0
      %1619 = vmatprep.mubr.bf16.mxu0 %v859
      %1620 = vmatmul.mubr.bf16.gmra.mrb[0].mxu0 %v858
      %v1621 = vpop.f32.mrb[0].mxu0
      %v1622 = vadd.f32 %v1461, %v1621
      %v1623 = vpop.f32.mrb[0].mxu0
      %v1624 = vpop.f32.mrb[0].mxu0
      %v1625 = vadd.f32 %v1464, %v1624
      %v1626 = vpop.f32.mrb[0].mxu0
      %1627 = vmatprep.mubr.bf16.mxu0 %v866
      %1628 = vmatmul.mubr.bf16.gmra.mrb[0].mxu0 %v865
      %v1629 = vpop.f32.mrb[0].mxu0
      %v1630 = vadd.f32 %v1469, %v1629
      %v1631 = vpop.f32.mrb[0].mxu0
      %v1632 = vpop.f32.mrb[0].mxu0
      %v1633 = vadd.f32 %v1472, %v1632
      %v1634 = vpop.f32.mrb[0].mxu0
      %1635 = vmatprep.mubr.bf16.mxu0 %v873
      %1636 = vmatmul.mubr.bf16.gmra.mrb[0].mxu0 %v872
      %v1637 = vpop.f32.mrb[0].mxu0
      %v1638 = vadd.f32 %v1477, %v1637
      %v1639 = vpop.f32.mrb[0].mxu0
      %v1640 = vpop.f32.mrb[0].mxu0
      %v1641 = vadd.f32 %v1480, %v1640
      %v1642 = vpop.f32.mrb[0].mxu0
      %1643 = vdwg.mxu0
      %1644 = vmatprep.subr.bf16.mxu0 0
      %1645 = vmatpush1.bf16.msra.mxu0 %v1205
      %1646 = vmatprep.subr.bf16.mxu0 0
      %1647 = vmatpush1.bf16.msra.mxu0 %v1206
      %1648 = vmatprep.subr.bf16.mxu0 0
      %1649 = vmatpush1.bf16.msra.mxu0 %v1207
      %1650 = vmatprep.subr.bf16.mxu0 0
      %1651 = vmatpush1.bf16.msra.mxu0 %v1208
      %1652 = vmatprep.subr.bf16.mxu0 0
      %1653 = vmatpush1.bf16.msra.mxu0 %v1209
      %1654 = vmatprep.subr.bf16.mxu0 0
      %1655 = vmatpush1.bf16.msra.mxu0 %v1210
      %1656 = vmatprep.subr.bf16.mxu0 0
      %1657 = vmatpush1.bf16.msra.mxu0 %v1211
      %1658 = vmatprep.subr.bf16.mxu0 0
      %1659 = vmatpush1.bf16.msra.mxu0 %v1212
      %1660 = vmatprep.subr.bf16.mxu0 0
      %1661 = vmatpush1.bf16.msra.mxu0 %v1213
      %1662 = vmatprep.subr.bf16.mxu0 0
      %1663 = vmatpush1.bf16.msra.mxu0 %v1214
      %1664 = vmatprep.subr.bf16.mxu0 0
      %1665 = vmatpush1.bf16.msra.mxu0 %v1215
      %1666 = vmatprep.subr.bf16.mxu0 0
      %1667 = vmatpush1.bf16.msra.mxu0 %v1216
      %1668 = vmatprep.subr.bf16.mxu0 0
      %1669 = vmatpush1.bf16.msra.mxu0 %v1217
      %1670 = vmatprep.subr.bf16.mxu0 0
      %1671 = vmatpush1.bf16.msra.mxu0 %v1218
      %1672 = vmatprep.subr.bf16.mxu0 0
      %1673 = vmatpush1.bf16.msra.mxu0 %v1219
      %1674 = vmatprep.subr.bf16.mxu0 0
      %1675 = vmatpush1.bf16.msra.mxu0 %v1220
      %1676 = vmatprep.mubr.bf16.mxu0 %v770
      %1677 = vmatmul.mubr.bf16.gmra.mrb[0].mxu0 %v769
      %v1678 = vpop.f32.mrb[0].mxu0
      %v1679 = vadd.f32 %v1518, %v1678
      %v1680 = vpop.f32.mrb[0].mxu0
      %v1681 = vpop.f32.mrb[0].mxu0
      %v1682 = vadd.f32 %v1521, %v1681
      %v1683 = vpop.f32.mrb[0].mxu0
      %1684 = vmatprep.mubr.bf16.mxu0 %v777
      %1685 = vmatmul.mubr.bf16.gmra.mrb[0].mxu0 %v776
      %v1686 = vpop.f32.mrb[0].mxu0
      %v1687 = vadd.f32 %v1526, %v1686
      %v1688 = vpop.f32.mrb[0].mxu0
      %v1689 = vpop.f32.mrb[0].mxu0
      %v1690 = vadd.f32 %v1529, %v1689
      %v1691 = vpop.f32.mrb[0].mxu0
      %1692 = vmatprep.mubr.bf16.mxu0 %v784
      %1693 = vmatmul.mubr.bf16.gmra.mrb[0].mxu0 %v783
      %v1694 = vpop.f32.mrb[0].mxu0
      %v1695 = vadd.f32 %v1534, %v1694
      %v1696 = vpop.f32.mrb[0].mxu0
      %v1697 = vpop.f32.mrb[0].mxu0
      %v1698 = vadd.f32 %v1537, %v1697
      %v1699 = vpop.f32.mrb[0].mxu0
      %1700 = vmatprep.mubr.bf16.mxu0 %v791
      %1701 = vmatmul.mubr.bf16.gmra.mrb[0].mxu0 %v790
      %v1702 = vpop.f32.mrb[0].mxu0
      %v1703 = vadd.f32 %v1542, %v1702
      %v1704 = vpop.f32.mrb[0].mxu0
      %v1705 = vpop.f32.mrb[0].mxu0
      %v1706 = vadd.f32 %v1545, %v1705
      %v1707 = vpop.f32.mrb[0].mxu0
      %1708 = vmatprep.mubr.bf16.mxu0 %v798
      %1709 = vmatmul.mubr.bf16.gmra.mrb[0].mxu0 %v797
      %v1710 = vpop.f32.mrb[0].mxu0
      %v1711 = vadd.f32 %v1550, %v1710
      %v1712 = vpop.f32.mrb[0].mxu0
      %v1713 = vpop.f32.mrb[0].mxu0
      %v1714 = vadd.f32 %v1553, %v1713
      %v1715 = vpop.f32.mrb[0].mxu0
      %1716 = vmatprep.mubr.bf16.mxu0 %v805
      %1717 = vmatmul.mubr.bf16.gmra.mrb[0].mxu0 %v804
      %v1718 = vpop.f32.mrb[0].mxu0
      %v1719 = vadd.f32 %v1558, %v1718
      %v1720 = vpop.f32.mrb[0].mxu0
      %v1721 = vpop.f32.mrb[0].mxu0
      %v1722 = vadd.f32 %v1561, %v1721
      %v1723 = vpop.f32.mrb[0].mxu0
      %1724 = vmatprep.mubr.bf16.mxu0 %v812
      %1725 = vmatmul.mubr.bf16.gmra.mrb[0].mxu0 %v811
      %v1726 = vpop.f32.mrb[0].mxu0
      %v1727 = vadd.f32 %v1566, %v1726
      %v1728 = vpop.f32.mrb[0].mxu0
      %v1729 = vpop.f32.mrb[0].mxu0
      %v1730 = vadd.f32 %v1569, %v1729
      %v1731 = vpop.f32.mrb[0].mxu0
      %1732 = vmatprep.mubr.bf16.mxu0 %v819
      %1733 = vmatmul.mubr.bf16.gmra.mrb[0].mxu0 %v818
      %v1734 = vpop.f32.mrb[0].mxu0
      %v1735 = vadd.f32 %v1574, %v1734
      %v1736 = vpop.f32.mrb[0].mxu0
      %v1737 = vpop.f32.mrb[0].mxu0
      %v1738 = vadd.f32 %v1577, %v1737
      %v1739 = vpop.f32.mrb[0].mxu0
      %1740 = vmatprep.mubr.bf16.mxu0 %v826
      %1741 = vmatmul.mubr.bf16.gmra.mrb[0].mxu0 %v825
      %v1742 = vpop.f32.mrb[0].mxu0
      %v1743 = vadd.f32 %v1582, %v1742
      %v1744 = vpop.f32.mrb[0].mxu0
      %v1745 = vpop.f32.mrb[0].mxu0
      %v1746 = vadd.f32 %v1585, %v1745
      %v1747 = vpop.f32.mrb[0].mxu0
      %1748 = vmatprep.mubr.bf16.mxu0 %v833
      %1749 = vmatmul.mubr.bf16.gmra.mrb[0].mxu0 %v832
      %v1750 = vpop.f32.mrb[0].mxu0
      %v1751 = vadd.f32 %v1590, %v1750
      %v1752 = vpop.f32.mrb[0].mxu0
      %v1753 = vpop.f32.mrb[0].mxu0
      %v1754 = vadd.f32 %v1593, %v1753
      %v1755 = vpop.f32.mrb[0].mxu0
      %1756 = vmatprep.mubr.bf16.mxu0 %v840
      %1757 = vmatmul.mubr.bf16.gmra.mrb[0].mxu0 %v839
      %v1758 = vpop.f32.mrb[0].mxu0
      %v1759 = vadd.f32 %v1598, %v1758
      %v1760 = vpop.f32.mrb[0].mxu0
      %v1761 = vpop.f32.mrb[0].mxu0
      %v1762 = vadd.f32 %v1601, %v1761
      %v1763 = vpop.f32.mrb[0].mxu0
      %1764 = vmatprep.mubr.bf16.mxu0 %v847
      %1765 = vmatmul.mubr.bf16.gmra.mrb[0].mxu0 %v846
      %v1766 = vpop.f32.mrb[0].mxu0
      %v1767 = vadd.f32 %v1606, %v1766
      %v1768 = vpop.f32.mrb[0].mxu0
      %v1769 = vpop.f32.mrb[0].mxu0
      %v1770 = vadd.f32 %v1609, %v1769
      %v1771 = vpop.f32.mrb[0].mxu0
      %1772 = vmatprep.mubr.bf16.mxu0 %v854
      %1773 = vmatmul.mubr.bf16.gmra.mrb[0].mxu0 %v853
      %v1774 = vpop.f32.mrb[0].mxu0
      %v1775 = vadd.f32 %v1614, %v1774
      %v1776 = vpop.f32.mrb[0].mxu0
      %v1777 = vpop.f32.mrb[0].mxu0
      %v1778 = vadd.f32 %v1617, %v1777
      %v1779 = vpop.f32.mrb[0].mxu0
      %1780 = vmatprep.mubr.bf16.mxu0 %v861
      %1781 = vmatmul.mubr.bf16.gmra.mrb[0].mxu0 %v860
      %v1782 = vpop.f32.mrb[0].mxu0
      %v1783 = vadd.f32 %v1622, %v1782
      %v1784 = vpop.f32.mrb[0].mxu0
      %v1785 = vpop.f32.mrb[0].mxu0
      %v1786 = vadd.f32 %v1625, %v1785
      %v1787 = vpop.f32.mrb[0].mxu0
      %1788 = vmatprep.mubr.bf16.mxu0 %v868
      %1789 = vmatmul.mubr.bf16.gmra.mrb[0].mxu0 %v867
      %v1790 = vpop.f32.mrb[0].mxu0
      %v1791 = vadd.f32 %v1630, %v1790
      %v1792 = vpop.f32.mrb[0].mxu0
      %v1793 = vpop.f32.mrb[0].mxu0
      %v1794 = vadd.f32 %v1633, %v1793
      %v1795 = vpop.f32.mrb[0].mxu0
      %1796 = vmatprep.mubr.bf16.mxu0 %v875
      %1797 = vmatmul.mubr.bf16.gmra.mrb[0].mxu0 %v874
      %v1798 = vpop.f32.mrb[0].mxu0
      %v1799 = vadd.f32 %v1638, %v1798
      %v1800 = vpop.f32.mrb[0].mxu0
      %v1801 = vpop.f32.mrb[0].mxu0
      %v1802 = vadd.f32 %v1641, %v1801
      %v1803 = vpop.f32.mrb[0].mxu0
      %1804 = vdwg.mxu0
      %1805 = vmatprep.subr.bf16.mxu0 0
      %1806 = vmatpush1.bf16.msra.mxu0 %v1221
      %1807 = vmatprep.subr.bf16.mxu0 0
      %1808 = vmatpush1.bf16.msra.mxu0 %v1222
      %1809 = vmatprep.subr.bf16.mxu0 0
      %1810 = vmatpush1.bf16.msra.mxu0 0
      %1811 = vmatprep.subr.bf16.mxu0 0
      %1812 = vmatpush1.bf16.msra.mxu0 0
      %1813 = vmatprep.subr.bf16.mxu0 0
      %1814 = vmatpush1.bf16.msra.mxu0 0
      %1815 = vmatprep.subr.bf16.mxu0 0
      %1816 = vmatpush1.bf16.msra.mxu0 0
      %1817 = vmatprep.subr.bf16.mxu0 0
      %1818 = vmatpush1.bf16.msra.mxu0 0
      %1819 = vmatprep.subr.bf16.mxu0 0
      %1820 = vmatpush1.bf16.msra.mxu0 0
      %1821 = vmatprep.subr.bf16.mxu0 0
      %1822 = vmatpush1.bf16.msra.mxu0 0
      %1823 = vmatprep.subr.bf16.mxu0 0
      %1824 = vmatpush1.bf16.msra.mxu0 0
      %1825 = vmatprep.subr.bf16.mxu0 0
      %1826 = vmatpush1.bf16.msra.mxu0 0
      %1827 = vmatprep.subr.bf16.mxu0 0
      %1828 = vmatpush1.bf16.msra.mxu0 0
      %1829 = vmatprep.subr.bf16.mxu0 0
      %1830 = vmatpush1.bf16.msra.mxu0 0
      %1831 = vmatprep.subr.bf16.mxu0 0
      %1832 = vmatpush1.bf16.msra.mxu0 0
      %1833 = vmatprep.subr.bf16.mxu0 0
      %1834 = vmatpush1.bf16.msra.mxu0 0
      %1835 = vmatprep.subr.bf16.mxu0 0
      %1836 = vmatpush1.bf16.msra.mxu0 0
      %1837 = vmatprep.mubr.bf16.mxu0 0
      %1838 = vmatmul.mubr.bf16.gmra.mrb[0].mxu0 %v1275
      %v1839 = vpop.f32.mrb[0].mxu0
      %v1840 = vadd.f32 %v1679, %v1839
      %v1841 = vpop.f32.mrb[0].mxu0
      %v1842 = vpop.f32.mrb[0].mxu0
      %v1843 = vadd.f32 %v1682, %v1842
      %v1844 = vpop.f32.mrb[0].mxu0
      %1845 = vmatprep.mubr.bf16.mxu0 0
      %1846 = vmatmul.mubr.bf16.gmra.mrb[0].mxu0 %v1278
      %v1847 = vpop.f32.mrb[0].mxu0
      %v1848 = vadd.f32 %v1687, %v1847
      %v1849 = vpop.f32.mrb[0].mxu0
      %v1850 = vpop.f32.mrb[0].mxu0
      %v1851 = vadd.f32 %v1690, %v1850
      %v1852 = vpop.f32.mrb[0].mxu0
      %1853 = vmatprep.mubr.bf16.mxu0 0
      %1854 = vmatmul.mubr.bf16.gmra.mrb[0].mxu0 %v1281
      %v1855 = vpop.f32.mrb[0].mxu0
      %v1856 = vadd.f32 %v1695, %v1855
      %v1857 = vpop.f32.mrb[0].mxu0
      %v1858 = vpop.f32.mrb[0].mxu0
      %v1859 = vadd.f32 %v1698, %v1858
      %v1860 = vpop.f32.mrb[0].mxu0
      %1861 = vmatprep.mubr.bf16.mxu0 0
      %1862 = vmatmul.mubr.bf16.gmra.mrb[0].mxu0 %v1284
      %v1863 = vpop.f32.mrb[0].mxu0
      %v1864 = vadd.f32 %v1703, %v1863
      %v1865 = vpop.f32.mrb[0].mxu0
      %v1866 = vpop.f32.mrb[0].mxu0
      %v1867 = vadd.f32 %v1706, %v1866
      %v1868 = vpop.f32.mrb[0].mxu0
      %1869 = vmatprep.mubr.bf16.mxu0 0
      %1870 = vmatmul.mubr.bf16.gmra.mrb[0].mxu0 %v1287
      %v1871 = vpop.f32.mrb[0].mxu0
      %v1872 = vadd.f32 %v1711, %v1871
      %v1873 = vpop.f32.mrb[0].mxu0
      %v1874 = vpop.f32.mrb[0].mxu0
      %v1875 = vadd.f32 %v1714, %v1874
      %v1876 = vpop.f32.mrb[0].mxu0
      %1877 = vmatprep.mubr.bf16.mxu0 0
      %1878 = vmatmul.mubr.bf16.gmra.mrb[0].mxu0 %v1290
      %v1879 = vpop.f32.mrb[0].mxu0
      %v1880 = vadd.f32 %v1719, %v1879
      %v1881 = vpop.f32.mrb[0].mxu0
      %v1882 = vpop.f32.mrb[0].mxu0
      %v1883 = vadd.f32 %v1722, %v1882
      %v1884 = vpop.f32.mrb[0].mxu0
      %1885 = vmatprep.mubr.bf16.mxu0 0
      %1886 = vmatmul.mubr.bf16.gmra.mrb[0].mxu0 %v1293
      %v1887 = vpop.f32.mrb[0].mxu0
      %v1888 = vadd.f32 %v1727, %v1887
      %v1889 = vpop.f32.mrb[0].mxu0
      %v1890 = vpop.f32.mrb[0].mxu0
      %v1891 = vadd.f32 %v1730, %v1890
      %v1892 = vpop.f32.mrb[0].mxu0
      %1893 = vmatprep.mubr.bf16.mxu0 0
      %1894 = vmatmul.mubr.bf16.gmra.mrb[0].mxu0 %v1296
      %v1895 = vpop.f32.mrb[0].mxu0
      %v1896 = vadd.f32 %v1735, %v1895
      %v1897 = vpop.f32.mrb[0].mxu0
      %v1898 = vpop.f32.mrb[0].mxu0
      %v1899 = vadd.f32 %v1738, %v1898
      %v1900 = vpop.f32.mrb[0].mxu0
      %1901 = vmatprep.mubr.bf16.mxu0 0
      %1902 = vmatmul.mubr.bf16.gmra.mrb[0].mxu0 %v1299
      %v1903 = vpop.f32.mrb[0].mxu0
      %v1904 = vadd.f32 %v1743, %v1903
      %v1905 = vpop.f32.mrb[0].mxu0
      %v1906 = vpop.f32.mrb[0].mxu0
      %v1907 = vadd.f32 %v1746, %v1906
      %v1908 = vpop.f32.mrb[0].mxu0
      %1909 = vmatprep.mubr.bf16.mxu0 0
      %1910 = vmatmul.mubr.bf16.gmra.mrb[0].mxu0 %v1302
      %v1911 = vpop.f32.mrb[0].mxu0
      %v1912 = vadd.f32 %v1751, %v1911
      %v1913 = vpop.f32.mrb[0].mxu0
      %v1914 = vpop.f32.mrb[0].mxu0
      %v1915 = vadd.f32 %v1754, %v1914
      %v1916 = vpop.f32.mrb[0].mxu0
      %1917 = vmatprep.mubr.bf16.mxu0 0
      %1918 = vmatmul.mubr.bf16.gmra.mrb[0].mxu0 %v1305
      %v1919 = vpop.f32.mrb[0].mxu0
      %v1920 = vadd.f32 %v1759, %v1919
      %v1921 = vpop.f32.mrb[0].mxu0
      %v1922 = vpop.f32.mrb[0].mxu0
      %v1923 = vadd.f32 %v1762, %v1922
      %v1924 = vpop.f32.mrb[0].mxu0
      %1925 = vmatprep.mubr.bf16.mxu0 0
      %1926 = vmatmul.mubr.bf16.gmra.mrb[0].mxu0 %v1308
      %v1927 = vpop.f32.mrb[0].mxu0
      %v1928 = vadd.f32 %v1767, %v1927
      %v1929 = vpop.f32.mrb[0].mxu0
      %v1930 = vpop.f32.mrb[0].mxu0
      %v1931 = vadd.f32 %v1770, %v1930
      %v1932 = vpop.f32.mrb[0].mxu0
      %1933 = vmatprep.mubr.bf16.mxu0 0
      %1934 = vmatmul.mubr.bf16.gmra.mrb[0].mxu0 %v1311
      %v1935 = vpop.f32.mrb[0].mxu0
      %v1936 = vadd.f32 %v1775, %v1935
      %v1937 = vpop.f32.mrb[0].mxu0
      %v1938 = vpop.f32.mrb[0].mxu0
      %v1939 = vadd.f32 %v1778, %v1938
      %v1940 = vpop.f32.mrb[0].mxu0
      %1941 = vmatprep.mubr.bf16.mxu0 0
      %1942 = vmatmul.mubr.bf16.gmra.mrb[0].mxu0 %v1314
      %v1943 = vpop.f32.mrb[0].mxu0
      %v1944 = vadd.f32 %v1783, %v1943
      %v1945 = vpop.f32.mrb[0].mxu0
      %v1946 = vpop.f32.mrb[0].mxu0
      %v1947 = vadd.f32 %v1786, %v1946
      %v1948 = vpop.f32.mrb[0].mxu0
      %1949 = vmatprep.mubr.bf16.mxu0 0
      %1950 = vmatmul.mubr.bf16.gmra.mrb[0].mxu0 %v1317
      %v1951 = vpop.f32.mrb[0].mxu0
      %v1952 = vadd.f32 %v1791, %v1951
      %v1953 = vpop.f32.mrb[0].mxu0
      %v1954 = vpop.f32.mrb[0].mxu0
      %v1955 = vadd.f32 %v1794, %v1954
      %v1956 = vpop.f32.mrb[0].mxu0
      %1957 = vmatprep.mubr.bf16.mxu0 0
      %1958 = vmatmul.mubr.bf16.gmra.mrb[0].mxu0 %v1320
      %v1959 = vpop.f32.mrb[0].mxu0
      %v1960 = vadd.f32 %v1799, %v1959
      %v1961 = vpop.f32.mrb[0].mxu0
      %v1962 = vpop.f32.mrb[0].mxu0
      %v1963 = vadd.f32 %v1802, %v1962
      %v1964 = vpop.f32.mrb[0].mxu0
      %1965 = vdwg.mxu0
      %1966 = vst [vmem:[#allocation2] sm:$0xff] %v1840
      %1967 = vst [vmem:[#allocation2 + $0x8] sm:$0xff] %v1843
      %1968 = vst [vmem:[#allocation2 + $0x10] sm:$0xff] %v1848
      %1969 = vst [vmem:[#allocation2 + $0x18] sm:$0xff] %v1851
      %1970 = vst [vmem:[#allocation2 + $0x20] sm:$0xff] %v1856
      %1971 = vst [vmem:[#allocation2 + $0x28] sm:$0xff] %v1859
      %1972 = vst [vmem:[#allocation2 + $0x30] sm:$0xff] %v1864
      %1973 = vst [vmem:[#allocation2 + $0x38] sm:$0xff] %v1867
      %1974 = vst [vmem:[#allocation2 + $0x40] sm:$0xff] %v1872
      %1975 = vst [vmem:[#allocation2 + $0x48] sm:$0xff] %v1875
      %1976 = vst [vmem:[#allocation2 + $0x50] sm:$0xff] %v1880
      %1977 = vst [vmem:[#allocation2 + $0x58] sm:$0xff] %v1883
      %1978 = vst [vmem:[#allocation2 + $0x60] sm:$0xff] %v1888
      %1979 = vst [vmem:[#allocation2 + $0x68] sm:$0xff] %v1891
      %1980 = vst [vmem:[#allocation2 + $0x70] sm:$0xff] %v1896
      %1981 = vst [vmem:[#allocation2 + $0x78] sm:$0xff] %v1899
      %1982 = vst [vmem:[#allocation2 + $0x80] sm:$0xff] %v1904
      %1983 = vst [vmem:[#allocation2 + $0x88] sm:$0xff] %v1907
      %1984 = vst [vmem:[#allocation2 + $0x90] sm:$0xff] %v1912
      %1985 = vst [vmem:[#allocation2 + $0x98] sm:$0xff] %v1915
      %1986 = vst [vmem:[#allocation2 + $0xa0] sm:$0xff] %v1920
      %1987 = vst [vmem:[#allocation2 + $0xa8] sm:$0xff] %v1923
      %1988 = vst [vmem:[#allocation2 + $0xb0] sm:$0xff] %v1928
      %1989 = vst [vmem:[#allocation2 + $0xb8] sm:$0xff] %v1931
      %1990 = vst [vmem:[#allocation2 + $0xc0] sm:$0xff] %v1936
      %1991 = vst [vmem:[#allocation2 + $0xc8] sm:$0xff] %v1939
      %1992 = vst [vmem:[#allocation2 + $0xd0] sm:$0xff] %v1944
      %1993 = vst [vmem:[#allocation2 + $0xd8] sm:$0xff] %v1947
      %1994 = vst [vmem:[#allocation2 + $0xe0] sm:$0xff] %v1952
      %1995 = vst [vmem:[#allocation2 + $0xe8] sm:$0xff] %v1955
      %1996 = vst [vmem:[#allocation2 + $0xf0] sm:$0xff] %v1960
      %1997 = vst [vmem:[#allocation2 + $0xf8] sm:$0xff] %v1963
      %v1998 = vld [vmem:[#allocation2] ss:$2 sm:$0xff]
      %s1999 = scalar_lea.vmem [#allocation2], 16
      %v2000 = vld [vmem:[%s1999] ss:$2 sm:$0xff]
      %s2001 = scalar_lea.vmem [#allocation2], 32
      %v2002 = vld [vmem:[%s2001] ss:$2 sm:$0xff]
      %s2003 = scalar_lea.vmem [#allocation2], 48
      %v2004 = vld [vmem:[%s2003] ss:$2 sm:$0xff]
      %s2005 = scalar_lea.vmem [#allocation2], 64
      %v2006 = vld [vmem:[%s2005] ss:$2 sm:$0xff]
      %s2007 = scalar_lea.vmem [#allocation2], 80
      %v2008 = vld [vmem:[%s2007] ss:$2 sm:$0xff]
      %s2009 = scalar_lea.vmem [#allocation2], 96
      %v2010 = vld [vmem:[%s2009] ss:$2 sm:$0xff]
      %s2011 = scalar_lea.vmem [#allocation2], 112
      %v2012 = vld [vmem:[%s2011] ss:$2 sm:$0xff]
      %s2013 = scalar_lea.vmem [#allocation2], 128
      %v2014 = vld [vmem:[%s2013] ss:$2 sm:$0xff]
      %s2015 = scalar_lea.vmem [#allocation2], 144
      %v2016 = vld [vmem:[%s2015] ss:$2 sm:$0xff]
      %s2017 = scalar_lea.vmem [#allocation2], 160
      %v2018 = vld [vmem:[%s2017] ss:$2 sm:$0xff]
      %s2019 = scalar_lea.vmem [#allocation2], 176
      %v2020 = vld [vmem:[%s2019] ss:$2 sm:$0xff]
      %s2021 = scalar_lea.vmem [#allocation2], 192
      %v2022 = vld [vmem:[%s2021] ss:$2 sm:$0xff]
      %s2023 = scalar_lea.vmem [#allocation2], 208
      %v2024 = vld [vmem:[%s2023] ss:$2 sm:$0xff]
      %s2025 = scalar_lea.vmem [#allocation2], 224
      %v2026 = vld [vmem:[%s2025] ss:$2 sm:$0xff]
      %s2027 = scalar_lea.vmem [#allocation2], 240
      %v2028 = vld [vmem:[%s2027] ss:$2 sm:$0xff]
      %s2029 = scalar_lea.vmem [#allocation2], 1
      %v2030 = vld [vmem:[%s2029] ss:$2 sm:$0xff]
      %s2031 = scalar_lea.vmem [#allocation2], 17
      %v2032 = vld [vmem:[%s2031] ss:$2 sm:$0xff]
      %s2033 = scalar_lea.vmem [#allocation2], 33
      %v2034 = vld [vmem:[%s2033] ss:$2 sm:$0xff]
      %s2035 = scalar_lea.vmem [#allocation2], 49
      %v2036 = vld [vmem:[%s2035] ss:$2 sm:$0xff]
      %s2037 = scalar_lea.vmem [#allocation2], 65
      %v2038 = vld [vmem:[%s2037] ss:$2 sm:$0xff]
      %s2039 = scalar_lea.vmem [#allocation2], 81
      %v2040 = vld [vmem:[%s2039] ss:$2 sm:$0xff]
      %s2041 = scalar_lea.vmem [#allocation2], 97
      %v2042 = vld [vmem:[%s2041] ss:$2 sm:$0xff]
      %s2043 = scalar_lea.vmem [#allocation2], 113
      %v2044 = vld [vmem:[%s2043] ss:$2 sm:$0xff]
      %s2045 = scalar_lea.vmem [#allocation2], 129
      %v2046 = vld [vmem:[%s2045] ss:$2 sm:$0xff]
      %s2047 = scalar_lea.vmem [#allocation2], 145
      %v2048 = vld [vmem:[%s2047] ss:$2 sm:$0xff]
      %s2049 = scalar_lea.vmem [#allocation2], 161
      %v2050 = vld [vmem:[%s2049] ss:$2 sm:$0xff]
      %s2051 = scalar_lea.vmem [#allocation2], 177
      %v2052 = vld [vmem:[%s2051] ss:$2 sm:$0xff]
      %s2053 = scalar_lea.vmem [#allocation2], 193
      %v2054 = vld [vmem:[%s2053] ss:$2 sm:$0xff]
      %s2055 = scalar_lea.vmem [#allocation2], 209
      %v2056 = vld [vmem:[%s2055] ss:$2 sm:$0xff]
      %s2057 = scalar_lea.vmem [#allocation2], 225
      %v2058 = vld [vmem:[%s2057] ss:$2 sm:$0xff]
      %s2059 = scalar_lea.vmem [#allocation2], 241
      %v2060 = vld [vmem:[%s2059] ss:$2 sm:$0xff]
      %v2061 = vmax.f32 %v1998, %v2030
      %v2062 = vmax.f32 %v2000, %v2032
      %v2063 = vmax.f32 %v2002, %v2034
      %v2064 = vmax.f32 %v2004, %v2036
      %v2065 = vmax.f32 %v2006, %v2038
      %v2066 = vmax.f32 %v2008, %v2040
      %v2067 = vmax.f32 %v2010, %v2042
      %v2068 = vmax.f32 %v2012, %v2044
      %v2069 = vmax.f32 %v2014, %v2046
      %v2070 = vmax.f32 %v2016, %v2048
      %v2071 = vmax.f32 %v2018, %v2050
      %v2072 = vmax.f32 %v2020, %v2052
      %v2073 = vmax.f32 %v2022, %v2054
      %v2074 = vmax.f32 %v2024, %v2056
      %v2075 = vmax.f32 %v2026, %v2058
      %v2076 = vmax.f32 %v2028, %v2060
      %2077 = vst [vmem:[#allocation3] sm:$0xff] %v2061
      %2078 = vst [vmem:[#allocation3 + $0x8] sm:$0xff] %v2062
      %2079 = vst [vmem:[#allocation3 + $0x10] sm:$0xff] %v2063
      %2080 = vst [vmem:[#allocation3 + $0x18] sm:$0xff] %v2064
      %2081 = vst [vmem:[#allocation3 + $0x20] sm:$0xff] %v2065
      %2082 = vst [vmem:[#allocation3 + $0x28] sm:$0xff] %v2066
      %2083 = vst [vmem:[#allocation3 + $0x30] sm:$0xff] %v2067
      %2084 = vst [vmem:[#allocation3 + $0x38] sm:$0xff] %v2068
      %2085 = vst [vmem:[#allocation3 + $0x40] sm:$0xff] %v2069
      %2086 = vst [vmem:[#allocation3 + $0x48] sm:$0xff] %v2070
      %2087 = vst [vmem:[#allocation3 + $0x50] sm:$0xff] %v2071
      %2088 = vst [vmem:[#allocation3 + $0x58] sm:$0xff] %v2072
      %2089 = vst [vmem:[#allocation3 + $0x60] sm:$0xff] %v2073
      %2090 = vst [vmem:[#allocation3 + $0x68] sm:$0xff] %v2074
      %2091 = vst [vmem:[#allocation3 + $0x70] sm:$0xff] %v2075
      %2092 = vst [vmem:[#allocation3 + $0x78] sm:$0xff] %v2076
      %v2093 = vld [vmem:[#allocation3] sm:$0xff]
      %v2094 = vld [vmem:[#allocation3 + $0x10] sm:$0xff]
      %v2095 = vld [vmem:[#allocation3 + $0x20] sm:$0xff]
      %v2096 = vld [vmem:[#allocation3 + $0x30] sm:$0xff]
      %v2097 = vld [vmem:[#allocation3 + $0x40] sm:$0xff]
      %v2098 = vld [vmem:[#allocation3 + $0x50] sm:$0xff]
      %v2099 = vld [vmem:[#allocation3 + $0x60] sm:$0xff]
      %v2100 = vld [vmem:[#allocation3 + $0x70] sm:$0xff]
      %s2101 = scalar_lea.vmem [#allocation3], 8
      %v2102 = vld [vmem:[%s2101] sm:$0xff]
      %v2103 = vld [vmem:[%s2101 + $0x10] sm:$0xff]
      %v2104 = vld [vmem:[%s2101 + $0x20] sm:$0xff]
      %v2105 = vld [vmem:[%s2101 + $0x30] sm:$0xff]
      %v2106 = vld [vmem:[%s2101 + $0x40] sm:$0xff]
      %v2107 = vld [vmem:[%s2101 + $0x50] sm:$0xff]
      %v2108 = vld [vmem:[%s2101 + $0x60] sm:$0xff]
      %v2109 = vld [vmem:[%s2101 + $0x70] sm:$0xff]
      %v2110 = vmax.f32 %v2093, %v2102
      %v2111 = vmax.f32 %v2094, %v2103
      %v2112 = vmax.f32 %v2095, %v2104
      %v2113 = vmax.f32 %v2096, %v2105
      %v2114 = vmax.f32 %v2097, %v2106
      %v2115 = vmax.f32 %v2098, %v2107
      %v2116 = vmax.f32 %v2099, %v2108
      %v2117 = vmax.f32 %v2100, %v2109
      %v2118 = vpack.c.bf16 %v2110, %v2110
      %v2119 = vpack.c.bf16 %v2111, %v2111
      %v2120 = vpack.c.bf16 %v2112, %v2112
      %v2121 = vpack.c.bf16 %v2113, %v2113
      %v2122 = vpack.c.bf16 %v2114, %v2114
      %v2123 = vpack.c.bf16 %v2115, %v2115
      %v2124 = vpack.c.bf16 %v2116, %v2116
      %v2125 = vpack.c.bf16 %v2117, %v2117
      %2126 = vst [vmem:[%s175] sm:$0xf] %v2118
      %2127 = vst [vmem:[%s175 + $0x4] sm:$0xf] %v2119
      %2128 = vst [vmem:[%s175 + $0x8] sm:$0xf] %v2120
      %2129 = vst [vmem:[%s175 + $0xc] sm:$0xf] %v2121
      %2130 = vst [vmem:[%s175 + $0x10] sm:$0xf] %v2122
      %2131 = vst [vmem:[%s175 + $0x14] sm:$0xf] %v2123
      %2132 = vst [vmem:[%s175 + $0x18] sm:$0xf] %v2124
      %2133 = vst [vmem:[%s175 + $0x1c] sm:$0xf] %v2125
      %s2134 = smul.u32 8, %s14
      %p2135 = scmp.lt.s32.totalorder %s2134, 15
      %s2136 = scalar_select %p2135, %s2134, 15
      %s2137 = smul.addr %s2136, 4
      %s2138 = scalar_lea.vmem %s3, %s2137
      // Predicated region
      $region33: #{howjul_forward.5} parent=31 // pred_check
        %p2139 = pneg %p100
      $region34: #{howjul_forward.5} parent=31 // pred_check_branch
        %2141 = sbr.rel (%p2139) target = $region36
      $region35: #{howjul_forward.5} parent=31 // pred_region
        %s2142 = smul.u32 8, %s14
      $region36: #{howjul_forward.5} parent=31 // pred_fallthru
        _
    $region32: #{howjul_forward.5} parent=5 // pred_fallthru
      _
    %p2143 = scmp.le.s32.totalorder 2, %s9
    // Predicated region
    $region37: #{howjul_forward.5} parent=5 // pred_check
      %p2144 = pneg %p2143
    $region38: #{howjul_forward.5} parent=5 // pred_check_branch
      %2146 = sbr.rel (%p2144) target = $region40
    $region39: #{howjul_forward.5} parent=5 // pred_region
      %s2147 = ssub.s32 %s9, 2
      // Predicated region
      $region41: #{howjul_forward.5} parent=39 // pred_check
        %p2148 = pneg %p106
      $region42: #{howjul_forward.5} parent=39 // pred_check_branch
        %2150 = sbr.rel (%p2148) target = $region44
      $region43: #{howjul_forward.5} parent=39 // pred_region
        %s2151 = smul.u32 8, %s15
        %p2152 = scmp.lt.s32.totalorder %s2151, 15
        %s2153 = scalar_select %p2152, %s2151, 15
        %s2154 = smul.addr %s2153, 4
        %s2155 = scalar_lea.vmem %s3, %s2154
      $region44: #{howjul_forward.5} parent=39 // pred_fallthru
        _
    $region40: #{howjul_forward.5} parent=5 // pred_fallthru
      _
  $region6: #{howjul_forward.5} parent=0 // loop_footer
    %s13 = sadd.s32 1, %s9
  $region7: #{howjul_forward.5} parent=0 // loop_footer_branch
    %8 = sbr.rel target = $region3
  $region8: #{howjul_forward.5} parent=0 // loop_exit
    _

// kernel: howjul_forward.6
$region0: #{howjul_forward.6}
  #allocation0 [shape = 'u32[]', space=smem, size = 0x4, offset = 0x4, fixed_abs, tag = 'smem constant byte address 0x4 - core index']
  #allocation1 [shape = 'u32[144,128]{1,0:T(1,128)}', space=vmem, size = 0x12000, scoped, tag = 'internal scratch']
  #allocation2 [shape = 'f32[8,8,128]{2,1,0:T(8,128)}', space=vmem, size = 0x8000, scoped, tag = 'scratch operand']
  #allocation3 [shape = 'f32[8,4,128]{2,1,0:T(4,128)}', space=vmem, size = 0x4000, scoped, tag = 'scratch operand']
  %s0 = inlined_call_operand.vmem [shape: bf16[128,800], index: 0, kind: input, shape index: {}]
  %s1 = inlined_call_operand.vmem [shape: bf16[800,128], index: 1, kind: input, shape index: {}]
  %s2 = inlined_call_operand.vmem [shape: f32[1,128], index: 2, kind: input, shape index: {}]
  %s3 = inlined_call_operand.vmem [shape: bf16[8,4,128], index: 3, kind: output, shape index: {}]
  %s4 = sld [smem:[#allocation0]]
  $region45: #{howjul_forward.6} parent=0
    _
  %s6 = ssub.s32 1, %s4
  %s7 = scalar_select 0, %s6, %s4
  loop: start=0, step=1, limit=4
  $region2: #{howjul_forward.6} parent=0 // loop_pre_header
    _
  $region3: #{howjul_forward.6} parent=0 // loop_header
    %s9 = sphi 0, %s13
    %p10 = scmp.ge.s32.totalorder %s9, 4
    %s19 = sphi 0, %s21
    %s22 = sphi 0, %s19
    %s23 = sphi 0, %s22
    %s39 = sphi 0, %s23
    %s43 = sphi 0, %s43
    %s45 = sphi 0, %s43
    %s46 = sphi 0, %s45
    %s60 = sphi 0, %s46
    %s64 = sphi 0, %s64
    %s66 = sphi 0, %s64
    %s67 = sphi 0, %s66
    %s81 = sphi 0, %s67
    %s87 = sphi 0, %s89
    %s90 = sphi 0, %s87
    %s91 = sphi 0, %s90
    %s107 = sphi 0, %s91
  $region4: #{howjul_forward.6} parent=0 // loop_header_branch
    %12 = sbr.rel (%p10) target = $region8
  $region5: #{howjul_forward.6} parent=0 // loop_body
    %s14 = ssub.s32 %s9, 1
    %s15 = ssub.s32 %s9, 2
    %s16 = sadd.s32 %s9, 1
    %s17 = ssub.s32 %s9, %s16
    %p18 = scmp.eq.s32.totalorder %s17, 0
    %s20 = sadd.s32 %s19, 1
    %s21 = scalar_select %p18, %s19, %s20
    %p24 = pneg %p18
    %p25 = scmp.eq.s32.totalorder %s9, 1
    %p26 = por %p24, %p25
    %p27 = scmp.ne.s32.totalorder %s19, %s22
    %p28 = scmp.eq.s32.totalorder %s9, 0
    %p29 = por %p27, %p28
    %p30 = scmp.ne.s32.totalorder %s19, %s22
    %p31 = scmp.eq.s32.totalorder %s14, 1
    %p32 = por %p30, %p31
    %p33 = scmp.ne.s32.totalorder %s22, %s23
    %p34 = scmp.eq.s32.totalorder %s14, 0
    %p35 = por %p33, %p34
    %p36 = scmp.ne.s32.totalorder %s22, %s23
    %p37 = scmp.eq.s32.totalorder %s15, 1
    %p38 = por %p36, %p37
    %p40 = scmp.ne.s32.totalorder %s23, %s39
    %p41 = scmp.eq.s32.totalorder %s15, 0
    %p42 = por %p40, %p41
    %s44 = sadd.s32 %s43, 1
    %p47 = scmp.eq.s32.totalorder %s9, 1
    %p48 = scmp.ne.s32.totalorder %s43, %s45
    %p49 = scmp.eq.s32.totalorder %s9, 0
    %p50 = por %p48, %p49
    %p51 = scmp.ne.s32.totalorder %s43, %s45
    %p52 = scmp.eq.s32.totalorder %s14, 1
    %p53 = por %p51, %p52
    %p54 = scmp.ne.s32.totalorder %s45, %s46
    %p55 = scmp.eq.s32.totalorder %s14, 0
    %p56 = por %p54, %p55
    %p57 = scmp.ne.s32.totalorder %s45, %s46
    %p58 = scmp.eq.s32.totalorder %s15, 1
    %p59 = por %p57, %p58
    %p61 = scmp.ne.s32.totalorder %s46, %s60
    %p62 = scmp.eq.s32.totalorder %s15, 0
    %p63 = por %p61, %p62
    %s65 = sadd.s32 %s64, 1
    %p68 = scmp.eq.s32.totalorder %s9, 1
    %p69 = scmp.ne.s32.totalorder %s64, %s66
    %p70 = scmp.eq.s32.totalorder %s9, 0
    %p71 = por %p69, %p70
    %p72 = scmp.ne.s32.totalorder %s64, %s66
    %p73 = scmp.eq.s32.totalorder %s14, 1
    %p74 = por %p72, %p73
    %p75 = scmp.ne.s32.totalorder %s66, %s67
    %p76 = scmp.eq.s32.totalorder %s14, 0
    %p77 = por %p75, %p76
    %p78 = scmp.ne.s32.totalorder %s66, %s67
    %p79 = scmp.eq.s32.totalorder %s15, 1
    %p80 = por %p78, %p79
    %p82 = scmp.ne.s32.totalorder %s67, %s81
    %p83 = scmp.eq.s32.totalorder %s15, 0
    %p84 = por %p82, %p83
    %s85 = ssub.s32 %s9, %s16
    %p86 = scmp.eq.s32.totalorder %s85, 0
    %s88 = sadd.s32 %s87, 1
    %s89 = scalar_select %p86, %s87, %s88
    %p92 = pneg %p86
    %p93 = scmp.eq.s32.totalorder %s9, 1
    %p94 = por %p92, %p93
    %p95 = scmp.ne.s32.totalorder %s87, %s90
    %p96 = scmp.eq.s32.totalorder %s9, 0
    %p97 = por %p95, %p96
    %p98 = scmp.ne.s32.totalorder %s87, %s90
    %p99 = scmp.eq.s32.totalorder %s14, 1
    %p100 = por %p98, %p99
    %p101 = scmp.ne.s32.totalorder %s90, %s91
    %p102 = scmp.eq.s32.totalorder %s14, 0
    %p103 = por %p101, %p102
    %p104 = scmp.ne.s32.totalorder %s90, %s91
    %p105 = scmp.eq.s32.totalorder %s15, 1
    %p106 = por %p104, %p105
    %p108 = scmp.ne.s32.totalorder %s91, %s107
    %p109 = scmp.eq.s32.totalorder %s15, 0
    %p110 = por %p108, %p109
    %p111 = scmp.le.s32.totalorder 1, %s9
    %p112 = scmp.lt.s32.totalorder %s9, 3
    %p113 = pnand %p111, %p112
    %p114 = pneg %p113
    // Predicated region
    $region9: #{howjul_forward.6} parent=5 // pred_check
      _
    $region10: #{howjul_forward.6} parent=5 // pred_check_branch
      %116 = sbr.rel (%p113) target = $region12
    $region11: #{howjul_forward.6} parent=5 // pred_region
      %s117 = ssub.s32 %s9, 1
      // Predicated region
      $region13: #{howjul_forward.6} parent=11 // pred_check
        %p118 = pneg %p56
      $region14: #{howjul_forward.6} parent=11 // pred_check_branch
        %120 = sbr.rel (%p118) target = $region16
      $region15: #{howjul_forward.6} parent=11 // pred_region
        _
      $region16: #{howjul_forward.6} parent=11 // pred_fallthru
        _
      // Predicated region
      $region17: #{howjul_forward.6} parent=11 // pred_check
        %p121 = pneg %p77
      $region18: #{howjul_forward.6} parent=11 // pred_check_branch
        %123 = sbr.rel (%p121) target = $region20
      $region19: #{howjul_forward.6} parent=11 // pred_region
        _
      $region20: #{howjul_forward.6} parent=11 // pred_fallthru
        _
    $region12: #{howjul_forward.6} parent=5 // pred_fallthru
      _
    %p124 = scmp.lt.s32.totalorder %s9, 2
    // Predicated region
    $region21: #{howjul_forward.6} parent=5 // pred_check
      %p125 = pneg %p124
    $region22: #{howjul_forward.6} parent=5 // pred_check_branch
      %127 = sbr.rel (%p125) target = $region24
    $region23: #{howjul_forward.6} parent=5 // pred_region
      // Predicated region
      $region25: #{howjul_forward.6} parent=23 // pred_check
        %p128 = pneg %p29
      $region26: #{howjul_forward.6} parent=23 // pred_check_branch
        %130 = sbr.rel (%p128) target = $region28
      $region27: #{howjul_forward.6} parent=23 // pred_region
        %s131 = smul.u32 8, %s9
        %p132 = scmp.lt.s32.totalorder %s131, 15
        %s133 = scalar_select %p132, %s131, 15
        %s134 = smul.addr %s133, 7
        %s135 = smul.addr %s134, 4
        %s136 = scalar_lea.vmem %s0, %s135
        %s137 = smul.u32 8, %s9
      $region28: #{howjul_forward.6} parent=23 // pred_fallthru
        _
    $region24: #{howjul_forward.6} parent=5 // pred_fallthru
      _
    %p138 = scmp.le.s32.totalorder 1, %s9
    %p139 = scmp.lt.s32.totalorder %s9, 3
    %p140 = pnand %p138, %p139
    %p141 = pneg %p140
    // Predicated region
    $region29: #{howjul_forward.6} parent=5 // pred_check
      _
    $region30: #{howjul_forward.6} parent=5 // pred_check_branch
      %143 = sbr.rel (%p140) target = $region32
    $region31: #{howjul_forward.6} parent=5 // pred_region
      %s144 = ssub.s32 %s9, 1
      %s145 = smul.u32 8, %s14
      %p146 = scmp.lt.s32.totalorder %s145, 15
      %s147 = scalar_select %p146, %s145, 15
      %s148 = smul.addr %s147, 7
      %s149 = smul.addr %s148, 4
      %s150 = scalar_lea.vmem %s0, %s149
      %p151 = pneg %p35
      %p152 = pneg %p32
      %p153 = pneg %p56
      %p154 = pneg %p53
      %p155 = pneg %p77
      %p156 = pneg %p74
      %p157 = pneg %p103
      %p158 = pneg %p100
      %s159 = smul.u32 4, %s14
      %p160 = scmp.lt.s32.totalorder %s159, 7
      %s161 = scalar_select %p160, %s159, 7
      %s162 = smul.addr %s161, 2
      %s163 = scalar_lea.vmem %s3, %s162
      %s164 = smul.u32 8, %s14
      %p165 = scmp.lt.s32.totalorder %s164, 15
      %s166 = scalar_select %p165, %s164, 15
      %s167 = smul.addr %s166, 7
      %s168 = smul.addr %s167, 4
      %s169 = scalar_lea.vmem %s0, %s168
      %s170 = smul.u32 8, %s14
      %s171 = smul.u32 4, %s14
      %p172 = scmp.lt.s32.totalorder %s171, 7
      %s173 = scalar_select %p172, %s171, 7
      %s174 = smul.addr %s173, 2
      %s175 = scalar_lea.vmem %s3, %s174
      %s176 = smul.u32 4, %s14
      %v178 = vld [vmem:[%s169] sm:$0xff]
      %v179 = vld [vmem:[%s169 + $0x8] sm:$0xff]
      %v180 = vld [vmem:[%s169 + $0x10] sm:$0xff]
      %v181 = vld [vmem:[%s169 + $0x18] sm:$0xf]
      %v182 = vld [vmem:[%s169 + $0x1c] sm:$0xff]
      %v183 = vld [vmem:[%s169 + $0x24] sm:$0xff]
      %v184 = vld [vmem:[%s169 + $0x2c] sm:$0xff]
      %v185 = vld [vmem:[%s169 + $0x34] sm:$0xf]
      %v186 = vld [vmem:[%s169 + $0x38] sm:$0xff]
      %v187 = vld [vmem:[%s169 + $0x40] sm:$0xff]
      %v188 = vld [vmem:[%s169 + $0x48] sm:$0xff]
      %v189 = vld [vmem:[%s169 + $0x50] sm:$0xf]
      %v190 = vld [vmem:[%s169 + $0x54] sm:$0xff]
      %v191 = vld [vmem:[%s169 + $0x5c] sm:$0xff]
      %v192 = vld [vmem:[%s169 + $0x64] sm:$0xff]
      %v193 = vld [vmem:[%s169 + $0x6c] sm:$0xf]
      %v194 = vld [vmem:[%s169 + $0x70] sm:$0xff]
      %v195 = vld [vmem:[%s169 + $0x78] sm:$0xff]
      %v196 = vld [vmem:[%s169 + $0x80] sm:$0xff]
      %v197 = vld [vmem:[%s169 + $0x88] sm:$0xf]
      %v198 = vld [vmem:[%s169 + $0x8c] sm:$0xff]
      %v199 = vld [vmem:[%s169 + $0x94] sm:$0xff]
      %v200 = vld [vmem:[%s169 + $0x9c] sm:$0xff]
      %v201 = vld [vmem:[%s169 + $0xa4] sm:$0xf]
      %v202 = vld [vmem:[%s169 + $0xa8] sm:$0xff]
      %v203 = vld [vmem:[%s169 + $0xb0] sm:$0xff]
      %v204 = vld [vmem:[%s169 + $0xb8] sm:$0xff]
      %v205 = vld [vmem:[%s169 + $0xc0] sm:$0xf]
      %v206 = vld [vmem:[%s169 + $0xc4] sm:$0xff]
      %v207 = vld [vmem:[%s169 + $0xcc] sm:$0xff]
      %v208 = vld [vmem:[%s169 + $0xd4] sm:$0xff]
      %v209 = vld [vmem:[%s169 + $0xdc] sm:$0xf]
      %v210 = vld [vmem:[%s1] sm:$0xf]
      %v211 = vld [vmem:[%s1 + $0x4] sm:$0xf]
      %v212 = vld [vmem:[%s1 + $0x8] sm:$0xf]
      %v213 = vld [vmem:[%s1 + $0xc] sm:$0xf]
      %v214 = vld [vmem:[%s1 + $0x10] sm:$0xf]
      %v215 = vld [vmem:[%s1 + $0x14] sm:$0xf]
      %v216 = vld [vmem:[%s1 + $0x18] sm:$0xf]
      %v217 = vld [vmem:[%s1 + $0x1c] sm:$0xf]
      %v218 = vld [vmem:[%s1 + $0x20] sm:$0xf]
      %v219 = vld [vmem:[%s1 + $0x24] sm:$0xf]
      %v220 = vld [vmem:[%s1 + $0x28] sm:$0xf]
      %v221 = vld [vmem:[%s1 + $0x2c] sm:$0xf]
      %v222 = vld [vmem:[%s1 + $0x30] sm:$0xf]
      %v223 = vld [vmem:[%s1 + $0x34] sm:$0xf]
      %v224 = vld [vmem:[%s1 + $0x38] sm:$0xf]
      %v225 = vld [vmem:[%s1 + $0x3c] sm:$0xf]
      %v226 = vld [vmem:[%s1 + $0x40] sm:$0xf]
      %v227 = vld [vmem:[%s1 + $0x44] sm:$0xf]
      %v228 = vld [vmem:[%s1 + $0x48] sm:$0xf]
      %v229 = vld [vmem:[%s1 + $0x4c] sm:$0xf]
      %v230 = vld [vmem:[%s1 + $0x50] sm:$0xf]
      %v231 = vld [vmem:[%s1 + $0x54] sm:$0xf]
      %v232 = vld [vmem:[%s1 + $0x58] sm:$0xf]
      %v233 = vld [vmem:[%s1 + $0x5c] sm:$0xf]
      %v234 = vld [vmem:[%s1 + $0x60] sm:$0xf]
      %v235 = vld [vmem:[%s1 + $0x64] sm:$0xf]
      %v236 = vld [vmem:[%s1 + $0x68] sm:$0xf]
      %v237 = vld [vmem:[%s1 + $0x6c] sm:$0xf]
      %v238 = vld [vmem:[%s1 + $0x70] sm:$0xf]
      %v239 = vld [vmem:[%s1 + $0x74] sm:$0xf]
      %v240 = vld [vmem:[%s1 + $0x78] sm:$0xf]
      %v241 = vld [vmem:[%s1 + $0x7c] sm:$0xf]
      %v242 = vld [vmem:[%s1 + $0x80] sm:$0xf]
      %v243 = vld [vmem:[%s1 + $0x84] sm:$0xf]
      %v244 = vld [vmem:[%s1 + $0x88] sm:$0xf]
      %v245 = vld [vmem:[%s1 + $0x8c] sm:$0xf]
      %v246 = vld [vmem:[%s1 + $0x90] sm:$0xf]
      %v247 = vld [vmem:[%s1 + $0x94] sm:$0xf]
      %v248 = vld [vmem:[%s1 + $0x98] sm:$0xf]
      %v249 = vld [vmem:[%s1 + $0x9c] sm:$0xf]
      %v250 = vld [vmem:[%s1 + $0xa0] sm:$0xf]
      %v251 = vld [vmem:[%s1 + $0xa4] sm:$0xf]
      %v252 = vld [vmem:[%s1 + $0xa8] sm:$0xf]
      %v253 = vld [vmem:[%s1 + $0xac] sm:$0xf]
      %v254 = vld [vmem:[%s1 + $0xb0] sm:$0xf]
      %v255 = vld [vmem:[%s1 + $0xb4] sm:$0xf]
      %v256 = vld [vmem:[%s1 + $0xb8] sm:$0xf]
      %v257 = vld [vmem:[%s1 + $0xbc] sm:$0xf]
      %v258 = vld [vmem:[%s1 + $0xc0] sm:$0xf]
      %v259 = vld [vmem:[%s1 + $0xc4] sm:$0xf]
      %v260 = vld [vmem:[%s1 + $0xc8] sm:$0xf]
      %v261 = vld [vmem:[%s1 + $0xcc] sm:$0xf]
      %v262 = vld [vmem:[%s1 + $0xd0] sm:$0xf]
      %v263 = vld [vmem:[%s1 + $0xd4] sm:$0xf]
      %v264 = vld [vmem:[%s1 + $0xd8] sm:$0xf]
      %v265 = vld [vmem:[%s1 + $0xdc] sm:$0xf]
      %v266 = vld [vmem:[%s1 + $0xe0] sm:$0xf]
      %v267 = vld [vmem:[%s1 + $0xe4] sm:$0xf]
      %v268 = vld [vmem:[%s1 + $0xe8] sm:$0xf]
      %v269 = vld [vmem:[%s1 + $0xec] sm:$0xf]
      %v270 = vld [vmem:[%s1 + $0xf0] sm:$0xf]
      %v271 = vld [vmem:[%s1 + $0xf4] sm:$0xf]
      %v272 = vld [vmem:[%s1 + $0xf8] sm:$0xf]
      %v273 = vld [vmem:[%s1 + $0xfc] sm:$0xf]
      %v274 = vld [vmem:[%s1 + $0x100] sm:$0xf]
      %v275 = vld [vmem:[%s1 + $0x104] sm:$0xf]
      %v276 = vld [vmem:[%s1 + $0x108] sm:$0xf]
      %v277 = vld [vmem:[%s1 + $0x10c] sm:$0xf]
      %v278 = vld [vmem:[%s1 + $0x110] sm:$0xf]
      %v279 = vld [vmem:[%s1 + $0x114] sm:$0xf]
      %v280 = vld [vmem:[%s1 + $0x118] sm:$0xf]
      %v281 = vld [vmem:[%s1 + $0x11c] sm:$0xf]
      %v282 = vld [vmem:[%s1 + $0x120] sm:$0xf]
      %v283 = vld [vmem:[%s1 + $0x124] sm:$0xf]
      %v284 = vld [vmem:[%s1 + $0x128] sm:$0xf]
      %v285 = vld [vmem:[%s1 + $0x12c] sm:$0xf]
      %v286 = vld [vmem:[%s1 + $0x130] sm:$0xf]
      %v287 = vld [vmem:[%s1 + $0x134] sm:$0xf]
      %v288 = vld [vmem:[%s1 + $0x138] sm:$0xf]
      %v289 = vld [vmem:[%s1 + $0x13c] sm:$0xf]
      %v290 = vld [vmem:[%s1 + $0x140] sm:$0xf]
      %v291 = vld [vmem:[%s1 + $0x144] sm:$0xf]
      %v292 = vld [vmem:[%s1 + $0x148] sm:$0xf]
      %v293 = vld [vmem:[%s1 + $0x14c] sm:$0xf]
      %v294 = vld [vmem:[%s1 + $0x150] sm:$0xf]
      %v295 = vld [vmem:[%s1 + $0x154] sm:$0xf]
      %v296 = vld [vmem:[%s1 + $0x158] sm:$0xf]
      %v297 = vld [vmem:[%s1 + $0x15c] sm:$0xf]
      %v298 = vld [vmem:[%s1 + $0x160] sm:$0xf]
      %v299 = vld [vmem:[%s1 + $0x164] sm:$0xf]
      %v300 = vld [vmem:[%s1 + $0x168] sm:$0xf]
      %v301 = vld [vmem:[%s1 + $0x16c] sm:$0xf]
      %v302 = vld [vmem:[%s1 + $0x170] sm:$0xf]
      %v303 = vld [vmem:[%s1 + $0x174] sm:$0xf]
      %v304 = vld [vmem:[%s1 + $0x178] sm:$0xf]
      %v305 = vld [vmem:[%s1 + $0x17c] sm:$0xf]
      %v306 = vld [vmem:[%s1 + $0x180] sm:$0xf]
      %v307 = vld [vmem:[%s1 + $0x184] sm:$0xf]
      %v308 = vld [vmem:[%s1 + $0x188] sm:$0xf]
      %v309 = vld [vmem:[%s1 + $0x18c] sm:$0xf]
      %v310 = vld [vmem:[%s2] sm:$0x1]
      %v312 = vlaneseq
      %v313 = vshrl.u32 %v312, 7
      %v314 = vsub.s32 0, %v313
      %v315 = vrot.slane %v310, %v314
      %v349 = vunpack.c.l.b16 %v178
      %v350 = vunpack.c.h.b16 %v178
      %v351 = vunpack.c.l.b16 %v179
      %v352 = vunpack.c.h.b16 %v179
      %v353 = vunpack.c.l.b16 %v180
      %v354 = vunpack.c.h.b16 %v180
      %v355 = vunpack.c.l.b16 %v181
      %v356 = vunpack.c.l.b16 %v182
      %v357 = vunpack.c.h.b16 %v182
      %v358 = vunpack.c.l.b16 %v183
      %v359 = vunpack.c.h.b16 %v183
      %v360 = vunpack.c.l.b16 %v184
      %v361 = vunpack.c.h.b16 %v184
      %v362 = vunpack.c.l.b16 %v185
      %v363 = vunpack.c.l.b16 %v186
      %v364 = vunpack.c.h.b16 %v186
      %v365 = vunpack.c.l.b16 %v187
      %v366 = vunpack.c.h.b16 %v187
      %v367 = vunpack.c.l.b16 %v188
      %v368 = vunpack.c.h.b16 %v188
      %v369 = vunpack.c.l.b16 %v189
      %v370 = vunpack.c.l.b16 %v190
      %v371 = vunpack.c.h.b16 %v190
      %v372 = vunpack.c.l.b16 %v191
      %v373 = vunpack.c.h.b16 %v191
      %v374 = vunpack.c.l.b16 %v192
      %v375 = vunpack.c.h.b16 %v192
      %v376 = vunpack.c.l.b16 %v193
      %v377 = vunpack.c.l.b16 %v194
      %v378 = vunpack.c.h.b16 %v194
      %v379 = vunpack.c.l.b16 %v195
      %v380 = vunpack.c.h.b16 %v195
      %v381 = vunpack.c.l.b16 %v196
      %v382 = vunpack.c.h.b16 %v196
      %v383 = vunpack.c.l.b16 %v197
      %v384 = vunpack.c.l.b16 %v198
      %v385 = vunpack.c.h.b16 %v198
      %v386 = vunpack.c.l.b16 %v199
      %v387 = vunpack.c.h.b16 %v199
      %v388 = vunpack.c.l.b16 %v200
      %v389 = vunpack.c.h.b16 %v200
      %v390 = vunpack.c.l.b16 %v201
      %v391 = vunpack.c.l.b16 %v202
      %v392 = vunpack.c.h.b16 %v202
      %v393 = vunpack.c.l.b16 %v203
      %v394 = vunpack.c.h.b16 %v203
      %v395 = vunpack.c.l.b16 %v204
      %v396 = vunpack.c.h.b16 %v204
      %v397 = vunpack.c.l.b16 %v205
      %v398 = vunpack.c.l.b16 %v206
      %v399 = vunpack.c.h.b16 %v206
      %v400 = vunpack.c.l.b16 %v207
      %v401 = vunpack.c.h.b16 %v207
      %v402 = vunpack.c.l.b16 %v208
      %v403 = vunpack.c.h.b16 %v208
      %v404 = vunpack.c.l.b16 %v209
      %v405 = vpack.c.b16 %v356, %v349
      %v406 = vpack.c.b16 %v357, %v350
      %v407 = vpack.c.b16 %v358, %v351
      %v408 = vpack.c.b16 %v359, %v352
      %v409 = vpack.c.b16 %v360, %v353
      %v410 = vpack.c.b16 %v361, %v354
      %v411 = vpack.c.b16 %v362, %v355
      %v412 = vpack.c.b16 %v370, %v363
      %v413 = vpack.c.b16 %v371, %v364
      %v414 = vpack.c.b16 %v372, %v365
      %v415 = vpack.c.b16 %v373, %v366
      %v416 = vpack.c.b16 %v374, %v367
      %v417 = vpack.c.b16 %v375, %v368
      %v418 = vpack.c.b16 %v376, %v369
      %v419 = vpack.c.b16 %v384, %v377
      %v420 = vpack.c.b16 %v385, %v378
      %v421 = vpack.c.b16 %v386, %v379
      %v422 = vpack.c.b16 %v387, %v380
      %v423 = vpack.c.b16 %v388, %v381
      %v424 = vpack.c.b16 %v389, %v382
      %v425 = vpack.c.b16 %v390, %v383
      %v426 = vpack.c.b16 %v398, %v391
      %v427 = vpack.c.b16 %v399, %v392
      %v428 = vpack.c.b16 %v400, %v393
      %v429 = vpack.c.b16 %v401, %v394
      %v430 = vpack.c.b16 %v402, %v395
      %v431 = vpack.c.b16 %v403, %v396
      %v432 = vpack.c.b16 %v404, %v397
      %v557 = vunpack.c.l.b16 %v210
      %v558 = vunpack.c.l.b16 %v211
      %v559 = vunpack.c.l.b16 %v212
      %v560 = vunpack.c.l.b16 %v213
      %v561 = vunpack.c.l.b16 %v214
      %v562 = vunpack.c.l.b16 %v215
      %v563 = vunpack.c.l.b16 %v216
      %v564 = vunpack.c.l.b16 %v217
      %v565 = vunpack.c.l.b16 %v218
      %v566 = vunpack.c.l.b16 %v219
      %v567 = vunpack.c.l.b16 %v220
      %v568 = vunpack.c.l.b16 %v221
      %v569 = vunpack.c.l.b16 %v222
      %v570 = vunpack.c.l.b16 %v223
      %v571 = vunpack.c.l.b16 %v224
      %v572 = vunpack.c.l.b16 %v225
      %v573 = vunpack.c.l.b16 %v226
      %v574 = vunpack.c.l.b16 %v227
      %v575 = vunpack.c.l.b16 %v228
      %v576 = vunpack.c.l.b16 %v229
      %v577 = vunpack.c.l.b16 %v230
      %v578 = vunpack.c.l.b16 %v231
      %v579 = vunpack.c.l.b16 %v232
      %v580 = vunpack.c.l.b16 %v233
      %v581 = vunpack.c.l.b16 %v234
      %v582 = vunpack.c.l.b16 %v235
      %v583 = vunpack.c.l.b16 %v236
      %v584 = vunpack.c.l.b16 %v237
      %v585 = vunpack.c.l.b16 %v238
      %v586 = vunpack.c.l.b16 %v239
      %v587 = vunpack.c.l.b16 %v240
      %v588 = vunpack.c.l.b16 %v241
      %v589 = vunpack.c.l.b16 %v242
      %v590 = vunpack.c.l.b16 %v243
      %v591 = vunpack.c.l.b16 %v244
      %v592 = vunpack.c.l.b16 %v245
      %v593 = vunpack.c.l.b16 %v246
      %v594 = vunpack.c.l.b16 %v247
      %v595 = vunpack.c.l.b16 %v248
      %v596 = vunpack.c.l.b16 %v249
      %v597 = vunpack.c.l.b16 %v250
      %v598 = vunpack.c.l.b16 %v251
      %v599 = vunpack.c.l.b16 %v252
      %v600 = vunpack.c.l.b16 %v253
      %v601 = vunpack.c.l.b16 %v254
      %v602 = vunpack.c.l.b16 %v255
      %v603 = vunpack.c.l.b16 %v256
      %v604 = vunpack.c.l.b16 %v257
      %v605 = vunpack.c.l.b16 %v258
      %v606 = vunpack.c.l.b16 %v259
      %v607 = vunpack.c.l.b16 %v260
      %v608 = vunpack.c.l.b16 %v261
      %v609 = vunpack.c.l.b16 %v262
      %v610 = vunpack.c.l.b16 %v263
      %v611 = vunpack.c.l.b16 %v264
      %v612 = vunpack.c.l.b16 %v265
      %v613 = vunpack.c.l.b16 %v266
      %v614 = vunpack.c.l.b16 %v267
      %v615 = vunpack.c.l.b16 %v268
      %v616 = vunpack.c.l.b16 %v269
      %v617 = vunpack.c.l.b16 %v270
      %v618 = vunpack.c.l.b16 %v271
      %v619 = vunpack.c.l.b16 %v272
      %v620 = vunpack.c.l.b16 %v273
      %v621 = vunpack.c.l.b16 %v274
      %v622 = vunpack.c.l.b16 %v275
      %v623 = vunpack.c.l.b16 %v276
      %v624 = vunpack.c.l.b16 %v277
      %v625 = vunpack.c.l.b16 %v278
      %v626 = vunpack.c.l.b16 %v279
      %v627 = vunpack.c.l.b16 %v280
      %v628 = vunpack.c.l.b16 %v281
      %v629 = vunpack.c.l.b16 %v282
      %v630 = vunpack.c.l.b16 %v283
      %v631 = vunpack.c.l.b16 %v284
      %v632 = vunpack.c.l.b16 %v285
      %v633 = vunpack.c.l.b16 %v286
      %v634 = vunpack.c.l.b16 %v287
      %v635 = vunpack.c.l.b16 %v288
      %v636 = vunpack.c.l.b16 %v289
      %v637 = vunpack.c.l.b16 %v290
      %v638 = vunpack.c.l.b16 %v291
      %v639 = vunpack.c.l.b16 %v292
      %v640 = vunpack.c.l.b16 %v293
      %v641 = vunpack.c.l.b16 %v294
      %v642 = vunpack.c.l.b16 %v295
      %v643 = vunpack.c.l.b16 %v296
      %v644 = vunpack.c.l.b16 %v297
      %v645 = vunpack.c.l.b16 %v298
      %v646 = vunpack.c.l.b16 %v299
      %v647 = vunpack.c.l.b16 %v300
      %v648 = vunpack.c.l.b16 %v301
      %v649 = vunpack.c.l.b16 %v302
      %v650 = vunpack.c.l.b16 %v303
      %v651 = vunpack.c.l.b16 %v304
      %v652 = vunpack.c.l.b16 %v305
      %v653 = vunpack.c.l.b16 %v306
      %v654 = vunpack.c.l.b16 %v307
      %v655 = vunpack.c.l.b16 %v308
      %v656 = vunpack.c.l.b16 %v309
      %v657 = vpack.c.b16 %v558, %v557
      %v658 = vpack.c.b16 %v560, %v559
      %v659 = vpack.c.b16 %v562, %v561
      %v660 = vpack.c.b16 %v564, %v563
      %v661 = vpack.c.b16 %v566, %v565
      %v662 = vpack.c.b16 %v568, %v567
      %v663 = vpack.c.b16 %v570, %v569
      %v664 = vpack.c.b16 %v572, %v571
      %v665 = vpack.c.b16 %v574, %v573
      %v666 = vpack.c.b16 %v576, %v575
      %v667 = vpack.c.b16 %v578, %v577
      %v668 = vpack.c.b16 %v580, %v579
      %v669 = vpack.c.b16 %v582, %v581
      %v670 = vpack.c.b16 %v584, %v583
      %v671 = vpack.c.b16 %v586, %v585
      %v672 = vpack.c.b16 %v588, %v587
      %v673 = vpack.c.b16 %v590, %v589
      %v674 = vpack.c.b16 %v592, %v591
      %v675 = vpack.c.b16 %v594, %v593
      %v676 = vpack.c.b16 %v596, %v595
      %v677 = vpack.c.b16 %v598, %v597
      %v678 = vpack.c.b16 %v600, %v599
      %v679 = vpack.c.b16 %v602, %v601
      %v680 = vpack.c.b16 %v604, %v603
      %v681 = vpack.c.b16 %v606, %v605
      %v682 = vpack.c.b16 %v608, %v607
      %v683 = vpack.c.b16 %v610, %v609
      %v684 = vpack.c.b16 %v612, %v611
      %v685 = vpack.c.b16 %v614, %v613
      %v686 = vpack.c.b16 %v616, %v615
      %v687 = vpack.c.b16 %v618, %v617
      %v688 = vpack.c.b16 %v620, %v619
      %v689 = vpack.c.b16 %v622, %v621
      %v690 = vpack.c.b16 %v624, %v623
      %v691 = vpack.c.b16 %v626, %v625
      %v692 = vpack.c.b16 %v628, %v627
      %v693 = vpack.c.b16 %v630, %v629
      %v694 = vpack.c.b16 %v632, %v631
      %v695 = vpack.c.b16 %v634, %v633
      %v696 = vpack.c.b16 %v636, %v635
      %v697 = vpack.c.b16 %v638, %v637
      %v698 = vpack.c.b16 %v640, %v639
      %v699 = vpack.c.b16 %v642, %v641
      %v700 = vpack.c.b16 %v644, %v643
      %v701 = vpack.c.b16 %v646, %v645
      %v702 = vpack.c.b16 %v648, %v647
      %v703 = vpack.c.b16 %v650, %v649
      %v704 = vpack.c.b16 %v652, %v651
      %v705 = vpack.c.b16 %v654, %v653
      %v706 = vpack.c.b16 %v656, %v655
      %vm757 = vcmask 261120
      %v759 = vsel %vm757, %v411, 0
      %v762 = vsel %vm757, %v418, 0
      %v765 = vsel %vm757, %v425, 0
      %v768 = vsel %vm757, %v432, 0
      %770 = vmatprep.subr.bf16.mxu0 0
      %771 = vmatpush1.bf16.msra.mxu0 %v657
      %772 = vmatprep.subr.bf16.mxu0 0
      %773 = vmatpush1.bf16.msra.mxu0 %v658
      %774 = vmatprep.subr.bf16.mxu0 0
      %775 = vmatpush1.bf16.msra.mxu0 %v659
      %776 = vmatprep.subr.bf16.mxu0 0
      %777 = vmatpush1.bf16.msra.mxu0 %v660
      %778 = vmatprep.subr.bf16.mxu0 0
      %779 = vmatpush1.bf16.msra.mxu0 %v661
      %780 = vmatprep.subr.bf16.mxu0 0
      %781 = vmatpush1.bf16.msra.mxu0 %v662
      %782 = vmatprep.subr.bf16.mxu0 0
      %783 = vmatpush1.bf16.msra.mxu0 %v663
      %784 = vmatprep.subr.bf16.mxu0 0
      %785 = vmatpush1.bf16.msra.mxu0 %v664
      %786 = vmatprep.subr.bf16.mxu0 0
      %787 = vmatpush1.bf16.msra.mxu0 %v665
      %788 = vmatprep.subr.bf16.mxu0 0
      %789 = vmatpush1.bf16.msra.mxu0 %v666
      %790 = vmatprep.subr.bf16.mxu0 0
      %791 = vmatpush1.bf16.msra.mxu0 %v667
      %792 = vmatprep.subr.bf16.mxu0 0
      %793 = vmatpush1.bf16.msra.mxu0 %v668
      %794 = vmatprep.subr.bf16.mxu0 0
      %795 = vmatpush1.bf16.msra.mxu0 %v669
      %796 = vmatprep.subr.bf16.mxu0 0
      %797 = vmatpush1.bf16.msra.mxu0 %v670
      %798 = vmatprep.subr.bf16.mxu0 0
      %799 = vmatpush1.bf16.msra.mxu0 %v671
      %800 = vmatprep.subr.bf16.mxu0 0
      %801 = vmatpush1.bf16.msra.mxu0 %v672
      %802 = vmatprep.mubr.bf16.mxu0 %v406
      %803 = vmatmul.mubr.bf16.gmra.mrb[0].mxu0 %v405
      %v804 = vpop.f32.mrb[0].mxu0
      %v805 = vadd.f32 %v315, %v804
      %v806 = vpop.f32.mrb[0].mxu0
      %v807 = vpop.f32.mrb[0].mxu0
      %v808 = vadd.f32 %v315, %v807
      %v809 = vpop.f32.mrb[0].mxu0
      %810 = vmatprep.mubr.bf16.mxu0 %v413
      %811 = vmatmul.mubr.bf16.gmra.mrb[0].mxu0 %v412
      %v812 = vpop.f32.mrb[0].mxu0
      %v813 = vadd.f32 %v315, %v812
      %v814 = vpop.f32.mrb[0].mxu0
      %v815 = vpop.f32.mrb[0].mxu0
      %v816 = vadd.f32 %v315, %v815
      %v817 = vpop.f32.mrb[0].mxu0
      %818 = vmatprep.mubr.bf16.mxu0 %v420
      %819 = vmatmul.mubr.bf16.gmra.mrb[0].mxu0 %v419
      %v820 = vpop.f32.mrb[0].mxu0
      %v821 = vadd.f32 %v315, %v820
      %v822 = vpop.f32.mrb[0].mxu0
      %v823 = vpop.f32.mrb[0].mxu0
      %v824 = vadd.f32 %v315, %v823
      %v825 = vpop.f32.mrb[0].mxu0
      %826 = vmatprep.mubr.bf16.mxu0 %v427
      %827 = vmatmul.mubr.bf16.gmra.mrb[0].mxu0 %v426
      %v828 = vpop.f32.mrb[0].mxu0
      %v829 = vadd.f32 %v315, %v828
      %v830 = vpop.f32.mrb[0].mxu0
      %v831 = vpop.f32.mrb[0].mxu0
      %v832 = vadd.f32 %v315, %v831
      %v833 = vpop.f32.mrb[0].mxu0
      %834 = vdwg.mxu0
      %835 = vmatprep.subr.bf16.mxu0 0
      %836 = vmatpush1.bf16.msra.mxu0 %v673
      %837 = vmatprep.subr.bf16.mxu0 0
      %838 = vmatpush1.bf16.msra.mxu0 %v674
      %839 = vmatprep.subr.bf16.mxu0 0
      %840 = vmatpush1.bf16.msra.mxu0 %v675
      %841 = vmatprep.subr.bf16.mxu0 0
      %842 = vmatpush1.bf16.msra.mxu0 %v676
      %843 = vmatprep.subr.bf16.mxu0 0
      %844 = vmatpush1.bf16.msra.mxu0 %v677
      %845 = vmatprep.subr.bf16.mxu0 0
      %846 = vmatpush1.bf16.msra.mxu0 %v678
      %847 = vmatprep.subr.bf16.mxu0 0
      %848 = vmatpush1.bf16.msra.mxu0 %v679
      %849 = vmatprep.subr.bf16.mxu0 0
      %850 = vmatpush1.bf16.msra.mxu0 %v680
      %851 = vmatprep.subr.bf16.mxu0 0
      %852 = vmatpush1.bf16.msra.mxu0 %v681
      %853 = vmatprep.subr.bf16.mxu0 0
      %854 = vmatpush1.bf16.msra.mxu0 %v682
      %855 = vmatprep.subr.bf16.mxu0 0
      %856 = vmatpush1.bf16.msra.mxu0 %v683
      %857 = vmatprep.subr.bf16.mxu0 0
      %858 = vmatpush1.bf16.msra.mxu0 %v684
      %859 = vmatprep.subr.bf16.mxu0 0
      %860 = vmatpush1.bf16.msra.mxu0 %v685
      %861 = vmatprep.subr.bf16.mxu0 0
      %862 = vmatpush1.bf16.msra.mxu0 %v686
      %863 = vmatprep.subr.bf16.mxu0 0
      %864 = vmatpush1.bf16.msra.mxu0 %v687
      %865 = vmatprep.subr.bf16.mxu0 0
      %866 = vmatpush1.bf16.msra.mxu0 %v688
      %867 = vmatprep.mubr.bf16.mxu0 %v408
      %868 = vmatmul.mubr.bf16.gmra.mrb[0].mxu0 %v407
      %v869 = vpop.f32.mrb[0].mxu0
      %v870 = vadd.f32 %v805, %v869
      %v871 = vpop.f32.mrb[0].mxu0
      %v872 = vpop.f32.mrb[0].mxu0
      %v873 = vadd.f32 %v808, %v872
      %v874 = vpop.f32.mrb[0].mxu0
      %875 = vmatprep.mubr.bf16.mxu0 %v415
      %876 = vmatmul.mubr.bf16.gmra.mrb[0].mxu0 %v414
      %v877 = vpop.f32.mrb[0].mxu0
      %v878 = vadd.f32 %v813, %v877
      %v879 = vpop.f32.mrb[0].mxu0
      %v880 = vpop.f32.mrb[0].mxu0
      %v881 = vadd.f32 %v816, %v880
      %v882 = vpop.f32.mrb[0].mxu0
      %883 = vmatprep.mubr.bf16.mxu0 %v422
      %884 = vmatmul.mubr.bf16.gmra.mrb[0].mxu0 %v421
      %v885 = vpop.f32.mrb[0].mxu0
      %v886 = vadd.f32 %v821, %v885
      %v887 = vpop.f32.mrb[0].mxu0
      %v888 = vpop.f32.mrb[0].mxu0
      %v889 = vadd.f32 %v824, %v888
      %v890 = vpop.f32.mrb[0].mxu0
      %891 = vmatprep.mubr.bf16.mxu0 %v429
      %892 = vmatmul.mubr.bf16.gmra.mrb[0].mxu0 %v428
      %v893 = vpop.f32.mrb[0].mxu0
      %v894 = vadd.f32 %v829, %v893
      %v895 = vpop.f32.mrb[0].mxu0
      %v896 = vpop.f32.mrb[0].mxu0
      %v897 = vadd.f32 %v832, %v896
      %v898 = vpop.f32.mrb[0].mxu0
      %899 = vdwg.mxu0
      %900 = vmatprep.subr.bf16.mxu0 0
      %901 = vmatpush1.bf16.msra.mxu0 %v689
      %902 = vmatprep.subr.bf16.mxu0 0
      %903 = vmatpush1.bf16.msra.mxu0 %v690
      %904 = vmatprep.subr.bf16.mxu0 0
      %905 = vmatpush1.bf16.msra.mxu0 %v691
      %906 = vmatprep.subr.bf16.mxu0 0
      %907 = vmatpush1.bf16.msra.mxu0 %v692
      %908 = vmatprep.subr.bf16.mxu0 0
      %909 = vmatpush1.bf16.msra.mxu0 %v693
      %910 = vmatprep.subr.bf16.mxu0 0
      %911 = vmatpush1.bf16.msra.mxu0 %v694
      %912 = vmatprep.subr.bf16.mxu0 0
      %913 = vmatpush1.bf16.msra.mxu0 %v695
      %914 = vmatprep.subr.bf16.mxu0 0
      %915 = vmatpush1.bf16.msra.mxu0 %v696
      %916 = vmatprep.subr.bf16.mxu0 0
      %917 = vmatpush1.bf16.msra.mxu0 %v697
      %918 = vmatprep.subr.bf16.mxu0 0
      %919 = vmatpush1.bf16.msra.mxu0 %v698
      %920 = vmatprep.subr.bf16.mxu0 0
      %921 = vmatpush1.bf16.msra.mxu0 %v699
      %922 = vmatprep.subr.bf16.mxu0 0
      %923 = vmatpush1.bf16.msra.mxu0 %v700
      %924 = vmatprep.subr.bf16.mxu0 0
      %925 = vmatpush1.bf16.msra.mxu0 %v701
      %926 = vmatprep.subr.bf16.mxu0 0
      %927 = vmatpush1.bf16.msra.mxu0 %v702
      %928 = vmatprep.subr.bf16.mxu0 0
      %929 = vmatpush1.bf16.msra.mxu0 %v703
      %930 = vmatprep.subr.bf16.mxu0 0
      %931 = vmatpush1.bf16.msra.mxu0 %v704
      %932 = vmatprep.mubr.bf16.mxu0 %v410
      %933 = vmatmul.mubr.bf16.gmra.mrb[0].mxu0 %v409
      %v934 = vpop.f32.mrb[0].mxu0
      %v935 = vadd.f32 %v870, %v934
      %v936 = vpop.f32.mrb[0].mxu0
      %v937 = vpop.f32.mrb[0].mxu0
      %v938 = vadd.f32 %v873, %v937
      %v939 = vpop.f32.mrb[0].mxu0
      %940 = vmatprep.mubr.bf16.mxu0 %v417
      %941 = vmatmul.mubr.bf16.gmra.mrb[0].mxu0 %v416
      %v942 = vpop.f32.mrb[0].mxu0
      %v943 = vadd.f32 %v878, %v942
      %v944 = vpop.f32.mrb[0].mxu0
      %v945 = vpop.f32.mrb[0].mxu0
      %v946 = vadd.f32 %v881, %v945
      %v947 = vpop.f32.mrb[0].mxu0
      %948 = vmatprep.mubr.bf16.mxu0 %v424
      %949 = vmatmul.mubr.bf16.gmra.mrb[0].mxu0 %v423
      %v950 = vpop.f32.mrb[0].mxu0
      %v951 = vadd.f32 %v886, %v950
      %v952 = vpop.f32.mrb[0].mxu0
      %v953 = vpop.f32.mrb[0].mxu0
      %v954 = vadd.f32 %v889, %v953
      %v955 = vpop.f32.mrb[0].mxu0
      %956 = vmatprep.mubr.bf16.mxu0 %v431
      %957 = vmatmul.mubr.bf16.gmra.mrb[0].mxu0 %v430
      %v958 = vpop.f32.mrb[0].mxu0
      %v959 = vadd.f32 %v894, %v958
      %v960 = vpop.f32.mrb[0].mxu0
      %v961 = vpop.f32.mrb[0].mxu0
      %v962 = vadd.f32 %v897, %v961
      %v963 = vpop.f32.mrb[0].mxu0
      %964 = vdwg.mxu0
      %965 = vmatprep.subr.bf16.mxu0 0
      %966 = vmatpush1.bf16.msra.mxu0 %v705
      %967 = vmatprep.subr.bf16.mxu0 0
      %968 = vmatpush1.bf16.msra.mxu0 %v706
      %969 = vmatprep.subr.bf16.mxu0 0
      %970 = vmatpush1.bf16.msra.mxu0 0
      %971 = vmatprep.subr.bf16.mxu0 0
      %972 = vmatpush1.bf16.msra.mxu0 0
      %973 = vmatprep.subr.bf16.mxu0 0
      %974 = vmatpush1.bf16.msra.mxu0 0
      %975 = vmatprep.subr.bf16.mxu0 0
      %976 = vmatpush1.bf16.msra.mxu0 0
      %977 = vmatprep.subr.bf16.mxu0 0
      %978 = vmatpush1.bf16.msra.mxu0 0
      %979 = vmatprep.subr.bf16.mxu0 0
      %980 = vmatpush1.bf16.msra.mxu0 0
      %981 = vmatprep.subr.bf16.mxu0 0
      %982 = vmatpush1.bf16.msra.mxu0 0
      %983 = vmatprep.subr.bf16.mxu0 0
      %984 = vmatpush1.bf16.msra.mxu0 0
      %985 = vmatprep.subr.bf16.mxu0 0
      %986 = vmatpush1.bf16.msra.mxu0 0
      %987 = vmatprep.subr.bf16.mxu0 0
      %988 = vmatpush1.bf16.msra.mxu0 0
      %989 = vmatprep.subr.bf16.mxu0 0
      %990 = vmatpush1.bf16.msra.mxu0 0
      %991 = vmatprep.subr.bf16.mxu0 0
      %992 = vmatpush1.bf16.msra.mxu0 0
      %993 = vmatprep.subr.bf16.mxu0 0
      %994 = vmatpush1.bf16.msra.mxu0 0
      %995 = vmatprep.subr.bf16.mxu0 0
      %996 = vmatpush1.bf16.msra.mxu0 0
      %997 = vmatprep.mubr.bf16.mxu0 0
      %998 = vmatmul.mubr.bf16.gmra.mrb[0].mxu0 %v759
      %v999 = vpop.f32.mrb[0].mxu0
      %v1000 = vadd.f32 %v935, %v999
      %v1001 = vpop.f32.mrb[0].mxu0
      %v1002 = vpop.f32.mrb[0].mxu0
      %v1003 = vadd.f32 %v938, %v1002
      %v1004 = vpop.f32.mrb[0].mxu0
      %1005 = vmatprep.mubr.bf16.mxu0 0
      %1006 = vmatmul.mubr.bf16.gmra.mrb[0].mxu0 %v762
      %v1007 = vpop.f32.mrb[0].mxu0
      %v1008 = vadd.f32 %v943, %v1007
      %v1009 = vpop.f32.mrb[0].mxu0
      %v1010 = vpop.f32.mrb[0].mxu0
      %v1011 = vadd.f32 %v946, %v1010
      %v1012 = vpop.f32.mrb[0].mxu0
      %1013 = vmatprep.mubr.bf16.mxu0 0
      %1014 = vmatmul.mubr.bf16.gmra.mrb[0].mxu0 %v765
      %v1015 = vpop.f32.mrb[0].mxu0
      %v1016 = vadd.f32 %v951, %v1015
      %v1017 = vpop.f32.mrb[0].mxu0
      %v1018 = vpop.f32.mrb[0].mxu0
      %v1019 = vadd.f32 %v954, %v1018
      %v1020 = vpop.f32.mrb[0].mxu0
      %1021 = vmatprep.mubr.bf16.mxu0 0
      %1022 = vmatmul.mubr.bf16.gmra.mrb[0].mxu0 %v768
      %v1023 = vpop.f32.mrb[0].mxu0
      %v1024 = vadd.f32 %v959, %v1023
      %v1025 = vpop.f32.mrb[0].mxu0
      %v1026 = vpop.f32.mrb[0].mxu0
      %v1027 = vadd.f32 %v962, %v1026
      %v1028 = vpop.f32.mrb[0].mxu0
      %1029 = vdwg.mxu0
      %1030 = vst [vmem:[#allocation2] sm:$0xff] %v1000
      %1031 = vst [vmem:[#allocation2 + $0x8] sm:$0xff] %v1003
      %1032 = vst [vmem:[#allocation2 + $0x10] sm:$0xff] %v1008
      %1033 = vst [vmem:[#allocation2 + $0x18] sm:$0xff] %v1011
      %1034 = vst [vmem:[#allocation2 + $0x20] sm:$0xff] %v1016
      %1035 = vst [vmem:[#allocation2 + $0x28] sm:$0xff] %v1019
      %1036 = vst [vmem:[#allocation2 + $0x30] sm:$0xff] %v1024
      %1037 = vst [vmem:[#allocation2 + $0x38] sm:$0xff] %v1027
      %v1038 = vld [vmem:[#allocation2] ss:$2 sm:$0xf]
      %s1039 = scalar_lea.vmem [#allocation2], 8
      %v1040 = vld [vmem:[%s1039] ss:$2 sm:$0xf]
      %s1041 = scalar_lea.vmem [#allocation2], 16
      %v1042 = vld [vmem:[%s1041] ss:$2 sm:$0xf]
      %s1043 = scalar_lea.vmem [#allocation2], 24
      %v1044 = vld [vmem:[%s1043] ss:$2 sm:$0xf]
      %s1045 = scalar_lea.vmem [#allocation2], 32
      %v1046 = vld [vmem:[%s1045] ss:$2 sm:$0xf]
      %s1047 = scalar_lea.vmem [#allocation2], 40
      %v1048 = vld [vmem:[%s1047] ss:$2 sm:$0xf]
      %s1049 = scalar_lea.vmem [#allocation2], 48
      %v1050 = vld [vmem:[%s1049] ss:$2 sm:$0xf]
      %s1051 = scalar_lea.vmem [#allocation2], 56
      %v1052 = vld [vmem:[%s1051] ss:$2 sm:$0xf]
      %s1053 = scalar_lea.vmem [#allocation2], 1
      %v1054 = vld [vmem:[%s1053] ss:$2 sm:$0xf]
      %s1055 = scalar_lea.vmem [#allocation2], 9
      %v1056 = vld [vmem:[%s1055] ss:$2 sm:$0xf]
      %s1057 = scalar_lea.vmem [#allocation2], 17
      %v1058 = vld [vmem:[%s1057] ss:$2 sm:$0xf]
      %s1059 = scalar_lea.vmem [#allocation2], 25
      %v1060 = vld [vmem:[%s1059] ss:$2 sm:$0xf]
      %s1061 = scalar_lea.vmem [#allocation2], 33
      %v1062 = vld [vmem:[%s1061] ss:$2 sm:$0xf]
      %s1063 = scalar_lea.vmem [#allocation2], 41
      %v1064 = vld [vmem:[%s1063] ss:$2 sm:$0xf]
      %s1065 = scalar_lea.vmem [#allocation2], 49
      %v1066 = vld [vmem:[%s1065] ss:$2 sm:$0xf]
      %s1067 = scalar_lea.vmem [#allocation2], 57
      %v1068 = vld [vmem:[%s1067] ss:$2 sm:$0xf]
      %v1069 = vmax.f32 %v1038, %v1054
      %v1070 = vmax.f32 %v1040, %v1056
      %v1071 = vmax.f32 %v1042, %v1058
      %v1072 = vmax.f32 %v1044, %v1060
      %v1073 = vmax.f32 %v1046, %v1062
      %v1074 = vmax.f32 %v1048, %v1064
      %v1075 = vmax.f32 %v1050, %v1066
      %v1076 = vmax.f32 %v1052, %v1068
      %1077 = vst [vmem:[#allocation3] sm:$0xf] %v1069
      %1078 = vst [vmem:[#allocation3 + $0x4] sm:$0xf] %v1070
      %1079 = vst [vmem:[#allocation3 + $0x8] sm:$0xf] %v1071
      %1080 = vst [vmem:[#allocation3 + $0xc] sm:$0xf] %v1072
      %1081 = vst [vmem:[#allocation3 + $0x10] sm:$0xf] %v1073
      %1082 = vst [vmem:[#allocation3 + $0x14] sm:$0xf] %v1074
      %1083 = vst [vmem:[#allocation3 + $0x18] sm:$0xf] %v1075
      %1084 = vst [vmem:[#allocation3 + $0x1c] sm:$0xf] %v1076
      %v1085 = vld [vmem:[#allocation3] sm:$0xf]
      %v1086 = vld [vmem:[#allocation3 + $0x8] sm:$0xf]
      %v1087 = vld [vmem:[#allocation3 + $0x10] sm:$0xf]
      %v1088 = vld [vmem:[#allocation3 + $0x18] sm:$0xf]
      %s1089 = scalar_lea.vmem [#allocation3], 4
      %v1090 = vld [vmem:[%s1089] sm:$0xf]
      %v1091 = vld [vmem:[%s1089 + $0x8] sm:$0xf]
      %v1092 = vld [vmem:[%s1089 + $0x10] sm:$0xf]
      %v1093 = vld [vmem:[%s1089 + $0x18] sm:$0xf]
      %v1094 = vmax.f32 %v1085, %v1090
      %v1095 = vmax.f32 %v1086, %v1091
      %v1096 = vmax.f32 %v1087, %v1092
      %v1097 = vmax.f32 %v1088, %v1093
      %v1098 = vpack.c.bf16 %v1094, %v1094
      %v1099 = vpack.c.bf16 %v1095, %v1095
      %v1100 = vpack.c.bf16 %v1096, %v1096
      %v1101 = vpack.c.bf16 %v1097, %v1097
      %1102 = vst [vmem:[%s175] sm:$0x3] %v1098
      %1103 = vst [vmem:[%s175 + $0x2] sm:$0x3] %v1099
      %1104 = vst [vmem:[%s175 + $0x4] sm:$0x3] %v1100
      %1105 = vst [vmem:[%s175 + $0x6] sm:$0x3] %v1101
      %s1106 = smul.u32 4, %s14
      %p1107 = scmp.lt.s32.totalorder %s1106, 7
      %s1108 = scalar_select %p1107, %s1106, 7
      %s1109 = smul.addr %s1108, 2
      %s1110 = scalar_lea.vmem %s3, %s1109
      // Predicated region
      $region33: #{howjul_forward.6} parent=31 // pred_check
        %p1111 = pneg %p100
      $region34: #{howjul_forward.6} parent=31 // pred_check_branch
        %1113 = sbr.rel (%p1111) target = $region36
      $region35: #{howjul_forward.6} parent=31 // pred_region
        %s1114 = smul.u32 4, %s14
      $region36: #{howjul_forward.6} parent=31 // pred_fallthru
        _
    $region32: #{howjul_forward.6} parent=5 // pred_fallthru
      _
    %p1115 = scmp.le.s32.totalorder 2, %s9
    // Predicated region
    $region37: #{howjul_forward.6} parent=5 // pred_check
      %p1116 = pneg %p1115
    $region38: #{howjul_forward.6} parent=5 // pred_check_branch
      %1118 = sbr.rel (%p1116) target = $region40
    $region39: #{howjul_forward.6} parent=5 // pred_region
      %s1119 = ssub.s32 %s9, 2
      // Predicated region
      $region41: #{howjul_forward.6} parent=39 // pred_check
        %p1120 = pneg %p106
      $region42: #{howjul_forward.6} parent=39 // pred_check_branch
        %1122 = sbr.rel (%p1120) target = $region44
      $region43: #{howjul_forward.6} parent=39 // pred_region
        %s1123 = smul.u32 4, %s15
        %p1124 = scmp.lt.s32.totalorder %s1123, 7
        %s1125 = scalar_select %p1124, %s1123, 7
        %s1126 = smul.addr %s1125, 2
        %s1127 = scalar_lea.vmem %s3, %s1126
      $region44: #{howjul_forward.6} parent=39 // pred_fallthru
        _
    $region40: #{howjul_forward.6} parent=5 // pred_fallthru
      _
  $region6: #{howjul_forward.6} parent=0 // loop_footer
    %s13 = sadd.s32 1, %s9
  $region7: #{howjul_forward.6} parent=0 // loop_footer_branch
    %8 = sbr.rel target = $region3
  $region8: #{howjul_forward.6} parent=0 // loop_exit
    _

// kernel: howjul_forward.7
$region0: #{howjul_forward.7}
  #allocation0 [shape = 'u32[]', space=smem, size = 0x4, offset = 0x4, fixed_abs, tag = 'smem constant byte address 0x4 - core index']
  #allocation1 [shape = 'u32[144,128]{1,0:T(1,128)}', space=vmem, size = 0x12000, scoped, tag = 'internal scratch']
  %s0 = inlined_call_operand.vmem [shape: bf16[16,1024], index: 0, kind: input, shape index: {}]
  %s1 = inlined_call_operand.vmem [shape: bf16[1024,128], index: 1, kind: input, shape index: {}]
  %s2 = inlined_call_operand.vmem [shape: f32[1,128], index: 2, kind: input, shape index: {}]
  %s3 = inlined_call_operand.vmem [shape: bf16[128,128], index: 3, kind: input, shape index: {}]
  %s4 = inlined_call_operand.vmem [shape: f32[1,128], index: 4, kind: input, shape index: {}]
  %s5 = inlined_call_operand.vmem [shape: f32[16,128], index: 5, kind: output, shape index: {}]
  %s6 = sld [smem:[#allocation0]]
  $region30: #{howjul_forward.7} parent=0
    _
  %s8 = ssub.s32 1, %s6
  %s9 = scalar_select 0, %s8, %s6
  // Predicated region
  $region2: #{howjul_forward.7} parent=0 // pred_check
    _
  $region3: #{howjul_forward.7} parent=0 // pred_check_branch
    %11 = sbr.rel (0) target = $region5
  $region4: #{howjul_forward.7} parent=0 // pred_region
    _
  $region5: #{howjul_forward.7} parent=0 // pred_fallthru
    _
  // Predicated region
  $region6: #{howjul_forward.7} parent=0 // pred_check
    _
  $region7: #{howjul_forward.7} parent=0 // pred_check_branch
    %13 = sbr.rel (0) target = $region9
  $region8: #{howjul_forward.7} parent=0 // pred_region
    _
  $region9: #{howjul_forward.7} parent=0 // pred_fallthru
    _
  // Predicated region
  $region10: #{howjul_forward.7} parent=0 // pred_check
    _
  $region11: #{howjul_forward.7} parent=0 // pred_check_branch
    %15 = sbr.rel (0) target = $region13
  $region12: #{howjul_forward.7} parent=0 // pred_region
    _
  $region13: #{howjul_forward.7} parent=0 // pred_fallthru
    _
  // Predicated region
  $region14: #{howjul_forward.7} parent=0 // pred_check
    _
  $region15: #{howjul_forward.7} parent=0 // pred_check_branch
    %17 = sbr.rel (0) target = $region17
  $region16: #{howjul_forward.7} parent=0 // pred_region
    _
  $region17: #{howjul_forward.7} parent=0 // pred_fallthru
    _
  // Predicated region
  $region18: #{howjul_forward.7} parent=0 // pred_check
    _
  $region19: #{howjul_forward.7} parent=0 // pred_check_branch
    %19 = sbr.rel (0) target = $region21
  $region20: #{howjul_forward.7} parent=0 // pred_region
    _
  $region21: #{howjul_forward.7} parent=0 // pred_fallthru
    _
  %v21 = vld [vmem:[%s0] sm:$0xff]
  %v22 = vld [vmem:[%s0 + $0x8] sm:$0xff]
  %v23 = vld [vmem:[%s0 + $0x10] sm:$0xff]
  %v24 = vld [vmem:[%s0 + $0x18] sm:$0xff]
  %v25 = vld [vmem:[%s0 + $0x20] sm:$0xff]
  %v26 = vld [vmem:[%s0 + $0x28] sm:$0xff]
  %v27 = vld [vmem:[%s0 + $0x30] sm:$0xff]
  %v28 = vld [vmem:[%s0 + $0x38] sm:$0xff]
  %v29 = vld [vmem:[%s1] sm:$0xf]
  %v30 = vld [vmem:[%s1 + $0x4] sm:$0xf]
  %v31 = vld [vmem:[%s1 + $0x8] sm:$0xf]
  %v32 = vld [vmem:[%s1 + $0xc] sm:$0xf]
  %v33 = vld [vmem:[%s1 + $0x10] sm:$0xf]
  %v34 = vld [vmem:[%s1 + $0x14] sm:$0xf]
  %v35 = vld [vmem:[%s1 + $0x18] sm:$0xf]
  %v36 = vld [vmem:[%s1 + $0x1c] sm:$0xf]
  %v37 = vld [vmem:[%s1 + $0x20] sm:$0xf]
  %v38 = vld [vmem:[%s1 + $0x24] sm:$0xf]
  %v39 = vld [vmem:[%s1 + $0x28] sm:$0xf]
  %v40 = vld [vmem:[%s1 + $0x2c] sm:$0xf]
  %v41 = vld [vmem:[%s1 + $0x30] sm:$0xf]
  %v42 = vld [vmem:[%s1 + $0x34] sm:$0xf]
  %v43 = vld [vmem:[%s1 + $0x38] sm:$0xf]
  %v44 = vld [vmem:[%s1 + $0x3c] sm:$0xf]
  %v45 = vld [vmem:[%s1 + $0x40] sm:$0xf]
  %v46 = vld [vmem:[%s1 + $0x44] sm:$0xf]
  %v47 = vld [vmem:[%s1 + $0x48] sm:$0xf]
  %v48 = vld [vmem:[%s1 + $0x4c] sm:$0xf]
  %v49 = vld [vmem:[%s1 + $0x50] sm:$0xf]
  %v50 = vld [vmem:[%s1 + $0x54] sm:$0xf]
  %v51 = vld [vmem:[%s1 + $0x58] sm:$0xf]
  %v52 = vld [vmem:[%s1 + $0x5c] sm:$0xf]
  %v53 = vld [vmem:[%s1 + $0x60] sm:$0xf]
  %v54 = vld [vmem:[%s1 + $0x64] sm:$0xf]
  %v55 = vld [vmem:[%s1 + $0x68] sm:$0xf]
  %v56 = vld [vmem:[%s1 + $0x6c] sm:$0xf]
  %v57 = vld [vmem:[%s1 + $0x70] sm:$0xf]
  %v58 = vld [vmem:[%s1 + $0x74] sm:$0xf]
  %v59 = vld [vmem:[%s1 + $0x78] sm:$0xf]
  %v60 = vld [vmem:[%s1 + $0x7c] sm:$0xf]
  %v61 = vld [vmem:[%s1 + $0x80] sm:$0xf]
  %v62 = vld [vmem:[%s1 + $0x84] sm:$0xf]
  %v63 = vld [vmem:[%s1 + $0x88] sm:$0xf]
  %v64 = vld [vmem:[%s1 + $0x8c] sm:$0xf]
  %v65 = vld [vmem:[%s1 + $0x90] sm:$0xf]
  %v66 = vld [vmem:[%s1 + $0x94] sm:$0xf]
  %v67 = vld [vmem:[%s1 + $0x98] sm:$0xf]
  %v68 = vld [vmem:[%s1 + $0x9c] sm:$0xf]
  %v69 = vld [vmem:[%s1 + $0xa0] sm:$0xf]
  %v70 = vld [vmem:[%s1 + $0xa4] sm:$0xf]
  %v71 = vld [vmem:[%s1 + $0xa8] sm:$0xf]
  %v72 = vld [vmem:[%s1 + $0xac] sm:$0xf]
  %v73 = vld [vmem:[%s1 + $0xb0] sm:$0xf]
  %v74 = vld [vmem:[%s1 + $0xb4] sm:$0xf]
  %v75 = vld [vmem:[%s1 + $0xb8] sm:$0xf]
  %v76 = vld [vmem:[%s1 + $0xbc] sm:$0xf]
  %v77 = vld [vmem:[%s1 + $0xc0] sm:$0xf]
  %v78 = vld [vmem:[%s1 + $0xc4] sm:$0xf]
  %v79 = vld [vmem:[%s1 + $0xc8] sm:$0xf]
  %v80 = vld [vmem:[%s1 + $0xcc] sm:$0xf]
  %v81 = vld [vmem:[%s1 + $0xd0] sm:$0xf]
  %v82 = vld [vmem:[%s1 + $0xd4] sm:$0xf]
  %v83 = vld [vmem:[%s1 + $0xd8] sm:$0xf]
  %v84 = vld [vmem:[%s1 + $0xdc] sm:$0xf]
  %v85 = vld [vmem:[%s1 + $0xe0] sm:$0xf]
  %v86 = vld [vmem:[%s1 + $0xe4] sm:$0xf]
  %v87 = vld [vmem:[%s1 + $0xe8] sm:$0xf]
  %v88 = vld [vmem:[%s1 + $0xec] sm:$0xf]
  %v89 = vld [vmem:[%s1 + $0xf0] sm:$0xf]
  %v90 = vld [vmem:[%s1 + $0xf4] sm:$0xf]
  %v91 = vld [vmem:[%s1 + $0xf8] sm:$0xf]
  %v92 = vld [vmem:[%s1 + $0xfc] sm:$0xf]
  %v93 = vld [vmem:[%s1 + $0x100] sm:$0xf]
  %v94 = vld [vmem:[%s1 + $0x104] sm:$0xf]
  %v95 = vld [vmem:[%s1 + $0x108] sm:$0xf]
  %v96 = vld [vmem:[%s1 + $0x10c] sm:$0xf]
  %v97 = vld [vmem:[%s1 + $0x110] sm:$0xf]
  %v98 = vld [vmem:[%s1 + $0x114] sm:$0xf]
  %v99 = vld [vmem:[%s1 + $0x118] sm:$0xf]
  %v100 = vld [vmem:[%s1 + $0x11c] sm:$0xf]
  %v101 = vld [vmem:[%s1 + $0x120] sm:$0xf]
  %v102 = vld [vmem:[%s1 + $0x124] sm:$0xf]
  %v103 = vld [vmem:[%s1 + $0x128] sm:$0xf]
  %v104 = vld [vmem:[%s1 + $0x12c] sm:$0xf]
  %v105 = vld [vmem:[%s1 + $0x130] sm:$0xf]
  %v106 = vld [vmem:[%s1 + $0x134] sm:$0xf]
  %v107 = vld [vmem:[%s1 + $0x138] sm:$0xf]
  %v108 = vld [vmem:[%s1 + $0x13c] sm:$0xf]
  %v109 = vld [vmem:[%s1 + $0x140] sm:$0xf]
  %v110 = vld [vmem:[%s1 + $0x144] sm:$0xf]
  %v111 = vld [vmem:[%s1 + $0x148] sm:$0xf]
  %v112 = vld [vmem:[%s1 + $0x14c] sm:$0xf]
  %v113 = vld [vmem:[%s1 + $0x150] sm:$0xf]
  %v114 = vld [vmem:[%s1 + $0x154] sm:$0xf]
  %v115 = vld [vmem:[%s1 + $0x158] sm:$0xf]
  %v116 = vld [vmem:[%s1 + $0x15c] sm:$0xf]
  %v117 = vld [vmem:[%s1 + $0x160] sm:$0xf]
  %v118 = vld [vmem:[%s1 + $0x164] sm:$0xf]
  %v119 = vld [vmem:[%s1 + $0x168] sm:$0xf]
  %v120 = vld [vmem:[%s1 + $0x16c] sm:$0xf]
  %v121 = vld [vmem:[%s1 + $0x170] sm:$0xf]
  %v122 = vld [vmem:[%s1 + $0x174] sm:$0xf]
  %v123 = vld [vmem:[%s1 + $0x178] sm:$0xf]
  %v124 = vld [vmem:[%s1 + $0x17c] sm:$0xf]
  %v125 = vld [vmem:[%s1 + $0x180] sm:$0xf]
  %v126 = vld [vmem:[%s1 + $0x184] sm:$0xf]
  %v127 = vld [vmem:[%s1 + $0x188] sm:$0xf]
  %v128 = vld [vmem:[%s1 + $0x18c] sm:$0xf]
  %v129 = vld [vmem:[%s1 + $0x190] sm:$0xf]
  %v130 = vld [vmem:[%s1 + $0x194] sm:$0xf]
  %v131 = vld [vmem:[%s1 + $0x198] sm:$0xf]
  %v132 = vld [vmem:[%s1 + $0x19c] sm:$0xf]
  %v133 = vld [vmem:[%s1 + $0x1a0] sm:$0xf]
  %v134 = vld [vmem:[%s1 + $0x1a4] sm:$0xf]
  %v135 = vld [vmem:[%s1 + $0x1a8] sm:$0xf]
  %v136 = vld [vmem:[%s1 + $0x1ac] sm:$0xf]
  %v137 = vld [vmem:[%s1 + $0x1b0] sm:$0xf]
  %v138 = vld [vmem:[%s1 + $0x1b4] sm:$0xf]
  %v139 = vld [vmem:[%s1 + $0x1b8] sm:$0xf]
  %v140 = vld [vmem:[%s1 + $0x1bc] sm:$0xf]
  %v141 = vld [vmem:[%s1 + $0x1c0] sm:$0xf]
  %v142 = vld [vmem:[%s1 + $0x1c4] sm:$0xf]
  %v143 = vld [vmem:[%s1 + $0x1c8] sm:$0xf]
  %v144 = vld [vmem:[%s1 + $0x1cc] sm:$0xf]
  %v145 = vld [vmem:[%s1 + $0x1d0] sm:$0xf]
  %v146 = vld [vmem:[%s1 + $0x1d4] sm:$0xf]
  %v147 = vld [vmem:[%s1 + $0x1d8] sm:$0xf]
  %v148 = vld [vmem:[%s1 + $0x1dc] sm:$0xf]
  %v149 = vld [vmem:[%s1 + $0x1e0] sm:$0xf]
  %v150 = vld [vmem:[%s1 + $0x1e4] sm:$0xf]
  %v151 = vld [vmem:[%s1 + $0x1e8] sm:$0xf]
  %v152 = vld [vmem:[%s1 + $0x1ec] sm:$0xf]
  %v153 = vld [vmem:[%s1 + $0x1f0] sm:$0xf]
  %v154 = vld [vmem:[%s1 + $0x1f4] sm:$0xf]
  %v155 = vld [vmem:[%s1 + $0x1f8] sm:$0xf]
  %v156 = vld [vmem:[%s1 + $0x1fc] sm:$0xf]
  %v157 = vld [vmem:[%s2] sm:$0x1]
  %v159 = vlaneseq
  %v160 = vshrl.u32 %v159, 7
  %v161 = vsub.s32 0, %v160
  %v162 = vrot.slane %v157, %v161
  %v172 = vunpack.c.l.b16 %v21
  %v173 = vunpack.c.h.b16 %v21
  %v174 = vunpack.c.l.b16 %v22
  %v175 = vunpack.c.h.b16 %v22
  %v176 = vunpack.c.l.b16 %v23
  %v177 = vunpack.c.h.b16 %v23
  %v178 = vunpack.c.l.b16 %v24
  %v179 = vunpack.c.h.b16 %v24
  %v180 = vunpack.c.l.b16 %v25
  %v181 = vunpack.c.h.b16 %v25
  %v182 = vunpack.c.l.b16 %v26
  %v183 = vunpack.c.h.b16 %v26
  %v184 = vunpack.c.l.b16 %v27
  %v185 = vunpack.c.h.b16 %v27
  %v186 = vunpack.c.l.b16 %v28
  %v187 = vunpack.c.h.b16 %v28
  %v188 = vpack.c.b16 %v180, %v172
  %v189 = vpack.c.b16 %v181, %v173
  %v190 = vpack.c.b16 %v182, %v174
  %v191 = vpack.c.b16 %v183, %v175
  %v192 = vpack.c.b16 %v184, %v176
  %v193 = vpack.c.b16 %v185, %v177
  %v194 = vpack.c.b16 %v186, %v178
  %v195 = vpack.c.b16 %v187, %v179
  %v332 = vunpack.c.l.b16 %v29
  %v333 = vunpack.c.l.b16 %v30
  %v334 = vunpack.c.l.b16 %v31
  %v335 = vunpack.c.l.b16 %v32
  %v336 = vunpack.c.l.b16 %v33
  %v337 = vunpack.c.l.b16 %v34
  %v338 = vunpack.c.l.b16 %v35
  %v339 = vunpack.c.l.b16 %v36
  %v340 = vunpack.c.l.b16 %v37
  %v341 = vunpack.c.l.b16 %v38
  %v342 = vunpack.c.l.b16 %v39
  %v343 = vunpack.c.l.b16 %v40
  %v344 = vunpack.c.l.b16 %v41
  %v345 = vunpack.c.l.b16 %v42
  %v346 = vunpack.c.l.b16 %v43
  %v347 = vunpack.c.l.b16 %v44
  %v348 = vunpack.c.l.b16 %v45
  %v349 = vunpack.c.l.b16 %v46
  %v350 = vunpack.c.l.b16 %v47
  %v351 = vunpack.c.l.b16 %v48
  %v352 = vunpack.c.l.b16 %v49
  %v353 = vunpack.c.l.b16 %v50
  %v354 = vunpack.c.l.b16 %v51
  %v355 = vunpack.c.l.b16 %v52
  %v356 = vunpack.c.l.b16 %v53
  %v357 = vunpack.c.l.b16 %v54
  %v358 = vunpack.c.l.b16 %v55
  %v359 = vunpack.c.l.b16 %v56
  %v360 = vunpack.c.l.b16 %v57
  %v361 = vunpack.c.l.b16 %v58
  %v362 = vunpack.c.l.b16 %v59
  %v363 = vunpack.c.l.b16 %v60
  %v364 = vunpack.c.l.b16 %v61
  %v365 = vunpack.c.l.b16 %v62
  %v366 = vunpack.c.l.b16 %v63
  %v367 = vunpack.c.l.b16 %v64
  %v368 = vunpack.c.l.b16 %v65
  %v369 = vunpack.c.l.b16 %v66
  %v370 = vunpack.c.l.b16 %v67
  %v371 = vunpack.c.l.b16 %v68
  %v372 = vunpack.c.l.b16 %v69
  %v373 = vunpack.c.l.b16 %v70
  %v374 = vunpack.c.l.b16 %v71
  %v375 = vunpack.c.l.b16 %v72
  %v376 = vunpack.c.l.b16 %v73
  %v377 = vunpack.c.l.b16 %v74
  %v378 = vunpack.c.l.b16 %v75
  %v379 = vunpack.c.l.b16 %v76
  %v380 = vunpack.c.l.b16 %v77
  %v381 = vunpack.c.l.b16 %v78
  %v382 = vunpack.c.l.b16 %v79
  %v383 = vunpack.c.l.b16 %v80
  %v384 = vunpack.c.l.b16 %v81
  %v385 = vunpack.c.l.b16 %v82
  %v386 = vunpack.c.l.b16 %v83
  %v387 = vunpack.c.l.b16 %v84
  %v388 = vunpack.c.l.b16 %v85
  %v389 = vunpack.c.l.b16 %v86
  %v390 = vunpack.c.l.b16 %v87
  %v391 = vunpack.c.l.b16 %v88
  %v392 = vunpack.c.l.b16 %v89
  %v393 = vunpack.c.l.b16 %v90
  %v394 = vunpack.c.l.b16 %v91
  %v395 = vunpack.c.l.b16 %v92
  %v396 = vunpack.c.l.b16 %v93
  %v397 = vunpack.c.l.b16 %v94
  %v398 = vunpack.c.l.b16 %v95
  %v399 = vunpack.c.l.b16 %v96
  %v400 = vunpack.c.l.b16 %v97
  %v401 = vunpack.c.l.b16 %v98
  %v402 = vunpack.c.l.b16 %v99
  %v403 = vunpack.c.l.b16 %v100
  %v404 = vunpack.c.l.b16 %v101
  %v405 = vunpack.c.l.b16 %v102
  %v406 = vunpack.c.l.b16 %v103
  %v407 = vunpack.c.l.b16 %v104
  %v408 = vunpack.c.l.b16 %v105
  %v409 = vunpack.c.l.b16 %v106
  %v410 = vunpack.c.l.b16 %v107
  %v411 = vunpack.c.l.b16 %v108
  %v412 = vunpack.c.l.b16 %v109
  %v413 = vunpack.c.l.b16 %v110
  %v414 = vunpack.c.l.b16 %v111
  %v415 = vunpack.c.l.b16 %v112
  %v416 = vunpack.c.l.b16 %v113
  %v417 = vunpack.c.l.b16 %v114
  %v418 = vunpack.c.l.b16 %v115
  %v419 = vunpack.c.l.b16 %v116
  %v420 = vunpack.c.l.b16 %v117
  %v421 = vunpack.c.l.b16 %v118
  %v422 = vunpack.c.l.b16 %v119
  %v423 = vunpack.c.l.b16 %v120
  %v424 = vunpack.c.l.b16 %v121
  %v425 = vunpack.c.l.b16 %v122
  %v426 = vunpack.c.l.b16 %v123
  %v427 = vunpack.c.l.b16 %v124
  %v428 = vunpack.c.l.b16 %v125
  %v429 = vunpack.c.l.b16 %v126
  %v430 = vunpack.c.l.b16 %v127
  %v431 = vunpack.c.l.b16 %v128
  %v432 = vunpack.c.l.b16 %v129
  %v433 = vunpack.c.l.b16 %v130
  %v434 = vunpack.c.l.b16 %v131
  %v435 = vunpack.c.l.b16 %v132
  %v436 = vunpack.c.l.b16 %v133
  %v437 = vunpack.c.l.b16 %v134
  %v438 = vunpack.c.l.b16 %v135
  %v439 = vunpack.c.l.b16 %v136
  %v440 = vunpack.c.l.b16 %v137
  %v441 = vunpack.c.l.b16 %v138
  %v442 = vunpack.c.l.b16 %v139
  %v443 = vunpack.c.l.b16 %v140
  %v444 = vunpack.c.l.b16 %v141
  %v445 = vunpack.c.l.b16 %v142
  %v446 = vunpack.c.l.b16 %v143
  %v447 = vunpack.c.l.b16 %v144
  %v448 = vunpack.c.l.b16 %v145
  %v449 = vunpack.c.l.b16 %v146
  %v450 = vunpack.c.l.b16 %v147
  %v451 = vunpack.c.l.b16 %v148
  %v452 = vunpack.c.l.b16 %v149
  %v453 = vunpack.c.l.b16 %v150
  %v454 = vunpack.c.l.b16 %v151
  %v455 = vunpack.c.l.b16 %v152
  %v456 = vunpack.c.l.b16 %v153
  %v457 = vunpack.c.l.b16 %v154
  %v458 = vunpack.c.l.b16 %v155
  %v459 = vunpack.c.l.b16 %v156
  %v460 = vpack.c.b16 %v333, %v332
  %v461 = vpack.c.b16 %v335, %v334
  %v462 = vpack.c.b16 %v337, %v336
  %v463 = vpack.c.b16 %v339, %v338
  %v464 = vpack.c.b16 %v341, %v340
  %v465 = vpack.c.b16 %v343, %v342
  %v466 = vpack.c.b16 %v345, %v344
  %v467 = vpack.c.b16 %v347, %v346
  %v468 = vpack.c.b16 %v349, %v348
  %v469 = vpack.c.b16 %v351, %v350
  %v470 = vpack.c.b16 %v353, %v352
  %v471 = vpack.c.b16 %v355, %v354
  %v472 = vpack.c.b16 %v357, %v356
  %v473 = vpack.c.b16 %v359, %v358
  %v474 = vpack.c.b16 %v361, %v360
  %v475 = vpack.c.b16 %v363, %v362
  %v476 = vpack.c.b16 %v365, %v364
  %v477 = vpack.c.b16 %v367, %v366
  %v478 = vpack.c.b16 %v369, %v368
  %v479 = vpack.c.b16 %v371, %v370
  %v480 = vpack.c.b16 %v373, %v372
  %v481 = vpack.c.b16 %v375, %v374
  %v482 = vpack.c.b16 %v377, %v376
  %v483 = vpack.c.b16 %v379, %v378
  %v484 = vpack.c.b16 %v381, %v380
  %v485 = vpack.c.b16 %v383, %v382
  %v486 = vpack.c.b16 %v385, %v384
  %v487 = vpack.c.b16 %v387, %v386
  %v488 = vpack.c.b16 %v389, %v388
  %v489 = vpack.c.b16 %v391, %v390
  %v490 = vpack.c.b16 %v393, %v392
  %v491 = vpack.c.b16 %v395, %v394
  %v492 = vpack.c.b16 %v397, %v396
  %v493 = vpack.c.b16 %v399, %v398
  %v494 = vpack.c.b16 %v401, %v400
  %v495 = vpack.c.b16 %v403, %v402
  %v496 = vpack.c.b16 %v405, %v404
  %v497 = vpack.c.b16 %v407, %v406
  %v498 = vpack.c.b16 %v409, %v408
  %v499 = vpack.c.b16 %v411, %v410
  %v500 = vpack.c.b16 %v413, %v412
  %v501 = vpack.c.b16 %v415, %v414
  %v502 = vpack.c.b16 %v417, %v416
  %v503 = vpack.c.b16 %v419, %v418
  %v504 = vpack.c.b16 %v421, %v420
  %v505 = vpack.c.b16 %v423, %v422
  %v506 = vpack.c.b16 %v425, %v424
  %v507 = vpack.c.b16 %v427, %v426
  %v508 = vpack.c.b16 %v429, %v428
  %v509 = vpack.c.b16 %v431, %v430
  %v510 = vpack.c.b16 %v433, %v432
  %v511 = vpack.c.b16 %v435, %v434
  %v512 = vpack.c.b16 %v437, %v436
  %v513 = vpack.c.b16 %v439, %v438
  %v514 = vpack.c.b16 %v441, %v440
  %v515 = vpack.c.b16 %v443, %v442
  %v516 = vpack.c.b16 %v445, %v444
  %v517 = vpack.c.b16 %v447, %v446
  %v518 = vpack.c.b16 %v449, %v448
  %v519 = vpack.c.b16 %v451, %v450
  %v520 = vpack.c.b16 %v453, %v452
  %v521 = vpack.c.b16 %v455, %v454
  %v522 = vpack.c.b16 %v457, %v456
  %v523 = vpack.c.b16 %v459, %v458
  %588 = vmatprep.subr.bf16.mxu0 0
  %589 = vmatpush1.bf16.msra.mxu0 %v460
  %590 = vmatprep.subr.bf16.mxu0 0
  %591 = vmatpush1.bf16.msra.mxu0 %v461
  %592 = vmatprep.subr.bf16.mxu0 0
  %593 = vmatpush1.bf16.msra.mxu0 %v462
  %594 = vmatprep.subr.bf16.mxu0 0
  %595 = vmatpush1.bf16.msra.mxu0 %v463
  %596 = vmatprep.subr.bf16.mxu0 0
  %597 = vmatpush1.bf16.msra.mxu0 %v464
  %598 = vmatprep.subr.bf16.mxu0 0
  %599 = vmatpush1.bf16.msra.mxu0 %v465
  %600 = vmatprep.subr.bf16.mxu0 0
  %601 = vmatpush1.bf16.msra.mxu0 %v466
  %602 = vmatprep.subr.bf16.mxu0 0
  %603 = vmatpush1.bf16.msra.mxu0 %v467
  %604 = vmatprep.subr.bf16.mxu0 0
  %605 = vmatpush1.bf16.msra.mxu0 %v468
  %606 = vmatprep.subr.bf16.mxu0 0
  %607 = vmatpush1.bf16.msra.mxu0 %v469
  %608 = vmatprep.subr.bf16.mxu0 0
  %609 = vmatpush1.bf16.msra.mxu0 %v470
  %610 = vmatprep.subr.bf16.mxu0 0
  %611 = vmatpush1.bf16.msra.mxu0 %v471
  %612 = vmatprep.subr.bf16.mxu0 0
  %613 = vmatpush1.bf16.msra.mxu0 %v472
  %614 = vmatprep.subr.bf16.mxu0 0
  %615 = vmatpush1.bf16.msra.mxu0 %v473
  %616 = vmatprep.subr.bf16.mxu0 0
  %617 = vmatpush1.bf16.msra.mxu0 %v474
  %618 = vmatprep.subr.bf16.mxu0 0
  %619 = vmatpush1.bf16.msra.mxu0 %v475
  %620 = vmatprep.mubr.bf16.mxu0 %v189
  %621 = vmatmul.mubr.bf16.gmra.mrb[0].mxu0 %v188
  %v622 = vpop.f32.mrb[0].mxu0
  %v623 = vadd.f32 %v162, %v622
  %v624 = vpop.f32.mrb[0].mxu0
  %v625 = vpop.f32.mrb[0].mxu0
  %v626 = vadd.f32 %v162, %v625
  %v627 = vpop.f32.mrb[0].mxu0
  %628 = vdwg.mxu0
  %629 = vmatprep.subr.bf16.mxu0 0
  %630 = vmatpush1.bf16.msra.mxu0 %v476
  %631 = vmatprep.subr.bf16.mxu0 0
  %632 = vmatpush1.bf16.msra.mxu0 %v477
  %633 = vmatprep.subr.bf16.mxu0 0
  %634 = vmatpush1.bf16.msra.mxu0 %v478
  %635 = vmatprep.subr.bf16.mxu0 0
  %636 = vmatpush1.bf16.msra.mxu0 %v479
  %637 = vmatprep.subr.bf16.mxu0 0
  %638 = vmatpush1.bf16.msra.mxu0 %v480
  %639 = vmatprep.subr.bf16.mxu0 0
  %640 = vmatpush1.bf16.msra.mxu0 %v481
  %641 = vmatprep.subr.bf16.mxu0 0
  %642 = vmatpush1.bf16.msra.mxu0 %v482
  %643 = vmatprep.subr.bf16.mxu0 0
  %644 = vmatpush1.bf16.msra.mxu0 %v483
  %645 = vmatprep.subr.bf16.mxu0 0
  %646 = vmatpush1.bf16.msra.mxu0 %v484
  %647 = vmatprep.subr.bf16.mxu0 0
  %648 = vmatpush1.bf16.msra.mxu0 %v485
  %649 = vmatprep.subr.bf16.mxu0 0
  %650 = vmatpush1.bf16.msra.mxu0 %v486
  %651 = vmatprep.subr.bf16.mxu0 0
  %652 = vmatpush1.bf16.msra.mxu0 %v487
  %653 = vmatprep.subr.bf16.mxu0 0
  %654 = vmatpush1.bf16.msra.mxu0 %v488
  %655 = vmatprep.subr.bf16.mxu0 0
  %656 = vmatpush1.bf16.msra.mxu0 %v489
  %657 = vmatprep.subr.bf16.mxu0 0
  %658 = vmatpush1.bf16.msra.mxu0 %v490
  %659 = vmatprep.subr.bf16.mxu0 0
  %660 = vmatpush1.bf16.msra.mxu0 %v491
  %661 = vmatprep.mubr.bf16.mxu0 %v191
  %662 = vmatmul.mubr.bf16.gmra.mrb[0].mxu0 %v190
  %v663 = vpop.f32.mrb[0].mxu0
  %v664 = vadd.f32 %v623, %v663
  %v665 = vpop.f32.mrb[0].mxu0
  %v666 = vpop.f32.mrb[0].mxu0
  %v667 = vadd.f32 %v626, %v666
  %v668 = vpop.f32.mrb[0].mxu0
  %669 = vdwg.mxu0
  %670 = vmatprep.subr.bf16.mxu0 0
  %671 = vmatpush1.bf16.msra.mxu0 %v492
  %672 = vmatprep.subr.bf16.mxu0 0
  %673 = vmatpush1.bf16.msra.mxu0 %v493
  %674 = vmatprep.subr.bf16.mxu0 0
  %675 = vmatpush1.bf16.msra.mxu0 %v494
  %676 = vmatprep.subr.bf16.mxu0 0
  %677 = vmatpush1.bf16.msra.mxu0 %v495
  %678 = vmatprep.subr.bf16.mxu0 0
  %679 = vmatpush1.bf16.msra.mxu0 %v496
  %680 = vmatprep.subr.bf16.mxu0 0
  %681 = vmatpush1.bf16.msra.mxu0 %v497
  %682 = vmatprep.subr.bf16.mxu0 0
  %683 = vmatpush1.bf16.msra.mxu0 %v498
  %684 = vmatprep.subr.bf16.mxu0 0
  %685 = vmatpush1.bf16.msra.mxu0 %v499
  %686 = vmatprep.subr.bf16.mxu0 0
  %687 = vmatpush1.bf16.msra.mxu0 %v500
  %688 = vmatprep.subr.bf16.mxu0 0
  %689 = vmatpush1.bf16.msra.mxu0 %v501
  %690 = vmatprep.subr.bf16.mxu0 0
  %691 = vmatpush1.bf16.msra.mxu0 %v502
  %692 = vmatprep.subr.bf16.mxu0 0
  %693 = vmatpush1.bf16.msra.mxu0 %v503
  %694 = vmatprep.subr.bf16.mxu0 0
  %695 = vmatpush1.bf16.msra.mxu0 %v504
  %696 = vmatprep.subr.bf16.mxu0 0
  %697 = vmatpush1.bf16.msra.mxu0 %v505
  %698 = vmatprep.subr.bf16.mxu0 0
  %699 = vmatpush1.bf16.msra.mxu0 %v506
  %700 = vmatprep.subr.bf16.mxu0 0
  %701 = vmatpush1.bf16.msra.mxu0 %v507
  %702 = vmatprep.mubr.bf16.mxu0 %v193
  %703 = vmatmul.mubr.bf16.gmra.mrb[0].mxu0 %v192
  %v704 = vpop.f32.mrb[0].mxu0
  %v705 = vadd.f32 %v664, %v704
  %v706 = vpop.f32.mrb[0].mxu0
  %v707 = vpop.f32.mrb[0].mxu0
  %v708 = vadd.f32 %v667, %v707
  %v709 = vpop.f32.mrb[0].mxu0
  %710 = vdwg.mxu0
  %711 = vmatprep.subr.bf16.mxu0 0
  %712 = vmatpush1.bf16.msra.mxu0 %v508
  %713 = vmatprep.subr.bf16.mxu0 0
  %714 = vmatpush1.bf16.msra.mxu0 %v509
  %715 = vmatprep.subr.bf16.mxu0 0
  %716 = vmatpush1.bf16.msra.mxu0 %v510
  %717 = vmatprep.subr.bf16.mxu0 0
  %718 = vmatpush1.bf16.msra.mxu0 %v511
  %719 = vmatprep.subr.bf16.mxu0 0
  %720 = vmatpush1.bf16.msra.mxu0 %v512
  %721 = vmatprep.subr.bf16.mxu0 0
  %722 = vmatpush1.bf16.msra.mxu0 %v513
  %723 = vmatprep.subr.bf16.mxu0 0
  %724 = vmatpush1.bf16.msra.mxu0 %v514
  %725 = vmatprep.subr.bf16.mxu0 0
  %726 = vmatpush1.bf16.msra.mxu0 %v515
  %727 = vmatprep.subr.bf16.mxu0 0
  %728 = vmatpush1.bf16.msra.mxu0 %v516
  %729 = vmatprep.subr.bf16.mxu0 0
  %730 = vmatpush1.bf16.msra.mxu0 %v517
  %731 = vmatprep.subr.bf16.mxu0 0
  %732 = vmatpush1.bf16.msra.mxu0 %v518
  %733 = vmatprep.subr.bf16.mxu0 0
  %734 = vmatpush1.bf16.msra.mxu0 %v519
  %735 = vmatprep.subr.bf16.mxu0 0
  %736 = vmatpush1.bf16.msra.mxu0 %v520
  %737 = vmatprep.subr.bf16.mxu0 0
  %738 = vmatpush1.bf16.msra.mxu0 %v521
  %739 = vmatprep.subr.bf16.mxu0 0
  %740 = vmatpush1.bf16.msra.mxu0 %v522
  %741 = vmatprep.subr.bf16.mxu0 0
  %742 = vmatpush1.bf16.msra.mxu0 %v523
  %743 = vmatprep.mubr.bf16.mxu0 %v195
  %744 = vmatmul.mubr.bf16.gmra.mrb[0].mxu0 %v194
  %v745 = vpop.f32.mrb[0].mxu0
  %v746 = vadd.f32 %v705, %v745
  %v747 = vpop.f32.mrb[0].mxu0
  %v748 = vpop.f32.mrb[0].mxu0
  %v749 = vadd.f32 %v708, %v748
  %v750 = vpop.f32.mrb[0].mxu0
  %751 = vdwg.mxu0
  %v752 = vpack.c.bf16 %v749, %v746
  %v753 = vld [vmem:[%s3] sm:$0xf]
  %v754 = vld [vmem:[%s3 + $0x4] sm:$0xf]
  %v755 = vld [vmem:[%s3 + $0x8] sm:$0xf]
  %v756 = vld [vmem:[%s3 + $0xc] sm:$0xf]
  %v757 = vld [vmem:[%s3 + $0x10] sm:$0xf]
  %v758 = vld [vmem:[%s3 + $0x14] sm:$0xf]
  %v759 = vld [vmem:[%s3 + $0x18] sm:$0xf]
  %v760 = vld [vmem:[%s3 + $0x1c] sm:$0xf]
  %v761 = vld [vmem:[%s3 + $0x20] sm:$0xf]
  %v762 = vld [vmem:[%s3 + $0x24] sm:$0xf]
  %v763 = vld [vmem:[%s3 + $0x28] sm:$0xf]
  %v764 = vld [vmem:[%s3 + $0x2c] sm:$0xf]
  %v765 = vld [vmem:[%s3 + $0x30] sm:$0xf]
  %v766 = vld [vmem:[%s3 + $0x34] sm:$0xf]
  %v767 = vld [vmem:[%s3 + $0x38] sm:$0xf]
  %v768 = vld [vmem:[%s3 + $0x3c] sm:$0xf]
  %v769 = vld [vmem:[%s4] sm:$0x1]
  %v771 = vlaneseq
  %v772 = vshrl.u32 %v771, 7
  %v773 = vsub.s32 0, %v772
  %v774 = vrot.slane %v769, %v773
  %v792 = vunpack.c.l.b16 %v753
  %v793 = vunpack.c.l.b16 %v754
  %v794 = vunpack.c.l.b16 %v755
  %v795 = vunpack.c.l.b16 %v756
  %v796 = vunpack.c.l.b16 %v757
  %v797 = vunpack.c.l.b16 %v758
  %v798 = vunpack.c.l.b16 %v759
  %v799 = vunpack.c.l.b16 %v760
  %v800 = vunpack.c.l.b16 %v761
  %v801 = vunpack.c.l.b16 %v762
  %v802 = vunpack.c.l.b16 %v763
  %v803 = vunpack.c.l.b16 %v764
  %v804 = vunpack.c.l.b16 %v765
  %v805 = vunpack.c.l.b16 %v766
  %v806 = vunpack.c.l.b16 %v767
  %v807 = vunpack.c.l.b16 %v768
  %v808 = vpack.c.b16 %v793, %v792
  %v809 = vpack.c.b16 %v795, %v794
  %v810 = vpack.c.b16 %v797, %v796
  %v811 = vpack.c.b16 %v799, %v798
  %v812 = vpack.c.b16 %v801, %v800
  %v813 = vpack.c.b16 %v803, %v802
  %v814 = vpack.c.b16 %v805, %v804
  %v815 = vpack.c.b16 %v807, %v806
  %824 = vmatprep.subr.bf16.mxu0 0
  %825 = vmatpush1.bf16.msra.mxu0 %v808
  %826 = vmatprep.subr.bf16.mxu0 0
  %827 = vmatpush1.bf16.msra.mxu0 %v809
  %828 = vmatprep.subr.bf16.mxu0 0
  %829 = vmatpush1.bf16.msra.mxu0 %v810
  %830 = vmatprep.subr.bf16.mxu0 0
  %831 = vmatpush1.bf16.msra.mxu0 %v811
  %832 = vmatprep.subr.bf16.mxu0 0
  %833 = vmatpush1.bf16.msra.mxu0 %v812
  %834 = vmatprep.subr.bf16.mxu0 0
  %835 = vmatpush1.bf16.msra.mxu0 %v813
  %836 = vmatprep.subr.bf16.mxu0 0
  %837 = vmatpush1.bf16.msra.mxu0 %v814
  %838 = vmatprep.subr.bf16.mxu0 0
  %839 = vmatpush1.bf16.msra.mxu0 %v815
  %840 = vmatprep.subr.bf16.mxu0 0
  %841 = vmatpush1.bf16.msra.mxu0 0
  %842 = vmatprep.subr.bf16.mxu0 0
  %843 = vmatpush1.bf16.msra.mxu0 0
  %844 = vmatprep.subr.bf16.mxu0 0
  %845 = vmatpush1.bf16.msra.mxu0 0
  %846 = vmatprep.subr.bf16.mxu0 0
  %847 = vmatpush1.bf16.msra.mxu0 0
  %848 = vmatprep.subr.bf16.mxu0 0
  %849 = vmatpush1.bf16.msra.mxu0 0
  %850 = vmatprep.subr.bf16.mxu0 0
  %851 = vmatpush1.bf16.msra.mxu0 0
  %852 = vmatprep.subr.bf16.mxu0 0
  %853 = vmatpush1.bf16.msra.mxu0 0
  %854 = vmatprep.subr.bf16.mxu0 0
  %855 = vmatpush1.bf16.msra.mxu0 0
  %856 = vmatprep.mubr.bf16.mxu0 0
  %857 = vmatmul.mubr.bf16.gmra.mrb[0].mxu0 %v752
  %v858 = vpop.f32.mrb[0].mxu0
  %v859 = vadd.f32 %v774, %v858
  %v860 = vpop.f32.mrb[0].mxu0
  %v861 = vpop.f32.mrb[0].mxu0
  %v862 = vadd.f32 %v774, %v861
  %v863 = vpop.f32.mrb[0].mxu0
  %864 = vdwg.mxu0
  %865 = vst [vmem:[%s5] sm:$0xff] %v859
  %866 = vst [vmem:[%s5 + $0x8] sm:$0xff] %v862
  // Predicated region
  $region22: #{howjul_forward.7} parent=0 // pred_check
    _
  $region23: #{howjul_forward.7} parent=0 // pred_check_branch
    %868 = sbr.rel (0) target = $region25
  $region24: #{howjul_forward.7} parent=0 // pred_region
    _
  $region25: #{howjul_forward.7} parent=0 // pred_fallthru
    _
  // Predicated region
  $region26: #{howjul_forward.7} parent=0 // pred_check
    _
  $region27: #{howjul_forward.7} parent=0 // pred_check_branch
    %870 = sbr.rel (0) target = $region29
  $region28: #{howjul_forward.7} parent=0 // pred_region
    _
  $region29: #{howjul_forward.7} parent=0 // pred_fallthru
    _

</llo_original>
